<compile_context>
chip_gen: v7x
topology: tpu7x:2x2x1
jax: 0.10.0
libtpu: 0.0.40
codegen_flags: <defaults>
</compile_context>

<pallas_src>
import functools
import math

import jax
import jax.numpy as jnp
from jax.experimental import pallas as pl
from jax.experimental.pallas import tpu as pltpu


def _round_up(x, m):
    return (x + m - 1) // m * m


def _vmem_limit(est_bytes):
    # Explicit scoped-VMEM budget: at least the usual 32 MiB default, capped
    # well under v7x's 64 MiB physical VMEM per TensorCore.
    return int(min(48 * 1024 * 1024, max(32 * 1024 * 1024, 4 * est_bytes)))


# ---------------------------------------------------------------------------
# Kernel A: input pointwise Conv1d (dim -> F), written straight into the
# halo-padded feature layout:
#   out[n, :, p] = (W @ x[n, :, p - Hh] + b) * valid[p]
# where valid is 1 only for the original frames [Hh, Hh+T); the halo and the
# alignment tail stay exactly zero (== PyTorch's zero conv padding).
# ---------------------------------------------------------------------------
def _conv_in_kernel(mm_dtype, x_ref, v_ref, w_ref, b_ref, o_ref):
    # x_ref: (1, Cin, t_in)  v_ref: (1, 1, t_in)  w_ref: (F, Cin)  b_ref: (F, 1)
    y = jnp.dot(w_ref[...], x_ref[0].astype(mm_dtype),
                preferred_element_type=jnp.float32) + b_ref[...]
    o_ref[0] = (y * v_ref[0]).astype(o_ref.dtype)


def _conv_in(x_p, valid, w_mm, b, *, t_in, Hh, mm_dtype):
    """x_p: (N, Cin, T_pad); valid: (1, 1, Tot); returns (N, F, Tot) float32
    with Tot = T_pad + 2*Hh and zeros outside [Hh, Hh+T)."""
    N, Cin, T_pad = x_p.shape
    F = w_mm.shape[0]
    Tot = T_pad + 2 * Hh
    hb = Hh // t_in                 # halo tiles on each side
    nb_in = T_pad // t_in           # valid input tiles

    def x_map(n, t):
        # Halo output tiles read a clamped (but unused: valid==0) input tile.
        tv = jnp.minimum(jnp.maximum(t - hb, 0), nb_in - 1)
        return (n, 0, tv)

    est = (2 * Cin * t_in * 4 + Cin * F * w_mm.dtype.itemsize
           + 2 * F * t_in * 4 + 2 * t_in * 4)
    return pl.pallas_call(
        functools.partial(_conv_in_kernel, mm_dtype),
        out_shape=jax.ShapeDtypeStruct((N, F, Tot), jnp.float32),
        grid=(N, Tot // t_in),
        in_specs=[
            pl.BlockSpec((1, Cin, t_in), x_map),
            pl.BlockSpec((1, 1, t_in), lambda n, t: (0, 0, t)),
            pl.BlockSpec((F, Cin), lambda n, t: (0, 0)),
            pl.BlockSpec((F, 1), lambda n, t: (0, 0)),
        ],
        out_specs=pl.BlockSpec((1, F, t_in), lambda n, t: (n, 0, t)),
        compiler_params=pltpu.CompilerParams(
            dimension_semantics=("parallel", "parallel"),
            vmem_limit_bytes=_vmem_limit(est)),
    )(x_p, valid, w_mm, b)


# ---------------------------------------------------------------------------
# Kernel B: fused stack of L DilatedResidualLayers + output 1x1 conv.
# One (batch, time-chunk) per grid step; the feature lives in VMEM scratch for
# the whole layer loop.
# ---------------------------------------------------------------------------
def _fused_stack_kernel(L, F, chunk, Hh, W, mm_dtype,
                        feat_hbm, mask_hbm,
                        wdil_ref, bdil_ref, wpw_ref, bpw_ref,
                        wout_ref, bout_ref,
                        out_ref,
                        feat_scr, mask_scr, sem):
    n = pl.program_id(0)
    t = pl.program_id(1)
    start = pl.multiple_of(t * chunk, 128)

    # Window-edge margins.  Only the (discarded) halo of the window can ever
    # depend on them; keep them zero so everything stays finite.
    feat_scr[:, :Hh] = jnp.zeros((F, Hh), jnp.float32)
    feat_scr[:, Hh + W:] = jnp.zeros((F, Hh), jnp.float32)

    # Manual DMA of the overlapping halo'd feature / mask windows.  The per-chunk
    # compute (L * 4 matmuls) dwarfs these copies, so no double-buffering needed.
    cp_f = pltpu.make_async_copy(feat_hbm.at[n, :, pl.ds(start, W)],
                                 feat_scr.at[:, pl.ds(Hh, W)], sem.at[0])
    cp_m = pltpu.make_async_copy(mask_hbm.at[n, :, pl.ds(start, W)],
                                 mask_scr, sem.at[1])
    cp_f.start()
    cp_m.start()
    cp_f.wait()
    cp_m.wait()

    m_win = mask_scr[...]                                    # (1, W)

    # L dilated residual layers, feature resident in VMEM for the whole stack.
    for i in range(L):
        d = 1 << i
        x1 = feat_scr[:, Hh:Hh + W]                          # x[t]   (residual tap)
        x0 = feat_scr[:, Hh - d:Hh - d + W]                  # x[t-d]
        x2 = feat_scr[:, Hh + d:Hh + d + W]                  # x[t+d]
        h = (jnp.dot(wdil_ref[i, 0], x0.astype(mm_dtype),
                     preferred_element_type=jnp.float32)
             + jnp.dot(wdil_ref[i, 1], x1.astype(mm_dtype),
                       preferred_element_type=jnp.float32)
             + jnp.dot(wdil_ref[i, 2], x2.astype(mm_dtype),
                       preferred_element_type=jnp.float32)
             + bdil_ref[i])
        h = jnp.maximum(h, 0.0)                              # ReLU (f32)
        o = jnp.dot(wpw_ref[i], h.astype(mm_dtype),
                    preferred_element_type=jnp.float32) + bpw_ref[i]
        # TODO(synk): nn.Dropout() is identity in eval mode; training-mode
        # dropout (random masking + 1/(1-p) scaling) is not implemented here.
        feat_scr[:, Hh:Hh + W] = (x1 + o) * m_win            # residual + mask (f32)

    # Output 1x1 conv + mask on the clean central `chunk` frames of the window.
    xc = feat_scr[:, 2 * Hh:2 * Hh + chunk]
    mc = mask_scr[:, Hh:Hh + chunk]
    y = jnp.dot(wout_ref[...], xc.astype(mm_dtype),
                preferred_element_type=jnp.float32) + bout_ref[...]
    out_ref[0] = (y * mc).astype(out_ref.dtype)


def _fused_stack(feat, mask_p, layer_params, conv_out_params, *,
                 chunk, Hh, T_pad, mm_dtype):
    """feat: (N, F, Tot) halo-padded feature; mask_p: (N, 1, Tot)."""
    N, F, _ = feat.shape
    L = len(layer_params)
    n_cls = conv_out_params[0].shape[0]
    n_chunks = T_pad // chunk
    W = chunk + 2 * Hh

    # PyTorch Conv1d weights are (Cout, Cin, K); tap k reads x[t + (k-1)*d].
    wdil = jnp.stack([jnp.transpose(w, (2, 0, 1)) for (w, _, _, _) in layer_params]
                     ).astype(mm_dtype)                                    # (L, 3, F, F)
    bdil = jnp.stack([b.reshape(F, 1) for (_, b, _, _) in layer_params]
                     ).astype(jnp.float32)                                 # (L, F, 1)
    wpw = jnp.stack([w[:, :, 0] for (_, _, w, _) in layer_params]
                    ).astype(mm_dtype)                                     # (L, F, F)
    bpw = jnp.stack([b.reshape(F, 1) for (_, _, _, b) in layer_params]
                    ).astype(jnp.float32)                                  # (L, F, 1)
    w_out, b_out = conv_out_params
    wout = w_out[:, :, 0].astype(mm_dtype)                                 # (n_cls, F)
    bout = b_out.reshape(n_cls, 1).astype(jnp.float32)

    kernel = functools.partial(_fused_stack_kernel, L, F, chunk, Hh, W, mm_dtype)

    # Rough per-step working-set estimate (scratch + a few (F, W) temporaries
    # + resident weights + double-buffered output block).
    est = (F * (chunk + 4 * Hh) * 4 + 6 * F * W * 4 + 8 * W * 4
           + 2 * n_cls * chunk * 4
           + (wdil.size + wpw.size + wout.size) * wdil.dtype.itemsize
           + (bdil.size + bpw.size + bout.size) * 4)

    return pl.pallas_call(
        kernel,
        out_shape=jax.ShapeDtypeStruct((N, n_cls, T_pad), jnp.float32),
        grid=(N, n_chunks),
        in_specs=[
            pl.BlockSpec(memory_space=pl.ANY),                    # feature, stays in HBM
            pl.BlockSpec(memory_space=pl.ANY),                    # mask,    stays in HBM
            pl.BlockSpec((L, 3, F, F), lambda n, t: (0, 0, 0, 0)),
            pl.BlockSpec((L, F, 1), lambda n, t: (0, 0, 0)),
            pl.BlockSpec((L, F, F), lambda n, t: (0, 0, 0)),
            pl.BlockSpec((L, F, 1), lambda n, t: (0, 0, 0)),
            pl.BlockSpec((n_cls, F), lambda n, t: (0, 0)),
            pl.BlockSpec((n_cls, 1), lambda n, t: (0, 0)),
        ],
        out_specs=pl.BlockSpec((1, n_cls, chunk), lambda n, t: (n, 0, t)),
        scratch_shapes=[
            pltpu.VMEM((F, chunk + 4 * Hh), jnp.float32),         # window + margins
            pltpu.VMEM((1, W), jnp.float32),                      # mask window
            pltpu.SemaphoreType.DMA((2,)),
        ],
        compiler_params=pltpu.CompilerParams(
            dimension_semantics=("parallel", "parallel"),
            vmem_limit_bytes=_vmem_limit(est)),
    )(feat, mask_p, wdil, bdil, wpw, bpw, wout, bout)


# ---------------------------------------------------------------------------
# SingleStageModel forward (eval mode).
# ---------------------------------------------------------------------------
def single_stage_model(x, mask, params, *, out_feature=False, chunk=None,
                       mm_dtype=jnp.float32):
    """x: (N, dim, T) f32 (NCT, as PyTorch), mask: (N, Cm, T) f32.

    params = {'conv_in': (w (F,dim,1), b (F,)),
              'layers' : [(w_dil (F,F,3), b_dil (F,), w_1x1 (F,F,1), b_1x1 (F,)), ...],
              'conv_out': (w (num_classes,F,1), b (num_classes,))}
    Returns (N, num_classes, T), or (feature_embedding*mask, out) if out_feature.
    mm_dtype: dtype of MXU operands (f32 for exactness, bf16 for v6e/v7x speed);
    accumulation and elementwise math stay f32.
    """
    N, dim, T = x.shape
    L = len(params['layers'])
    F = params['conv_in'][0].shape[0]

    # --- tiling -------------------------------------------------------------
    H = (1 << L) - 1                        # exact halo needed by the layer stack
    Hh = _round_up(max(H, 1), 128)          # halo actually loaded (lane aligned)
    if chunk is None:
        chunk = min(4096, _round_up(T, 128))
        chunk = max(chunk, min(4096, 2 * Hh))   # dilation-aware: bound halo duplication
    chunk = max(128, _round_up(chunk, 128))
    T_pad = _round_up(T, chunk)
    # v7x has 2 TensorCores: keep >= 2 parallel programs when possible.
    if N * (T_pad // chunk) < 2 and chunk > 128:
        half = max(128, _round_up(chunk // 2, 128))
        if _round_up(T, half) // half >= 2:
            chunk = half
            T_pad = _round_up(T, chunk)
    t_in = min(512, math.gcd(Hh, chunk))    # conv_in tile (Cin = dim may be large)
    Tot = T_pad + 2 * Hh

    # --- layout glue (cheap: only the input needs alignment padding; the
    # feature is written halo-padded directly by kernel A) --------------------
    x_p = jnp.pad(x.astype(jnp.float32), ((0, 0), (0, 0), (0, T_pad - T)))
    pos = jnp.arange(Tot)
    valid = ((pos >= Hh) & (pos < Hh + T)).astype(jnp.float32).reshape(1, 1, Tot)
    mask_p = jnp.pad(mask[:, 0:1, :].astype(jnp.float32),
                     ((0, 0), (0, 0), (Hh, Hh + T_pad - T)))

    w_in, b_in = params['conv_in']
    feat = _conv_in(x_p, valid,
                    w_in[:, :, 0].astype(mm_dtype),
                    b_in.reshape(F, 1).astype(jnp.float32),
                    t_in=t_in, Hh=Hh, mm_dtype=mm_dtype)

    out = _fused_stack(feat, mask_p, params['layers'], params['conv_out'],
                       chunk=chunk, Hh=Hh, T_pad=T_pad, mm_dtype=mm_dtype)
    out = out[:, :, :T]

    if out_feature:
        fe = feat[:, :, Hh:Hh + T] * mask[:, 0:1, :]
        return fe, out
    return out


# ---------------------------------------------------------------------------
# Pure-JAX reference of the same math for the correctness check.
# ---------------------------------------------------------------------------
def _conv1d_ref(x, w, b, dilation=1, padding=0):
    N, Cin, T = x.shape
    Cout, _, K = w.shape
    xp = jnp.pad(x, ((0, 0), (0, 0), (padding, padding)))
    T_out = T + 2 * padding - dilation * (K - 1)
    out = sum(jnp.einsum('oi,nit->not', w[:, :, k],
                         xp[:, :, k * dilation:k * dilation + T_out],
                         precision=jax.lax.Precision.HIGHEST)
              for k in range(K))
    return out + b[None, :, None]


def _single_stage_ref(x, mask, params, out_feature=False):
    w_in, b_in = params['conv_in']
    fe = _conv1d_ref(x, w_in, b_in)
    feat = fe
    m = mask[:, 0:1, :]
    for i, (w_dil, b_dil, w_1x1, b_1x1) in enumerate(params['layers']):
        d = 2 ** i
        h = jnp.maximum(_conv1d_ref(feat, w_dil, b_dil, dilation=d, padding=d), 0.0)
        h = _conv1d_ref(h, w_1x1, b_1x1)
        feat = (feat + h) * m
    w_out, b_out = params['conv_out']
    out = _conv1d_ref(feat, w_out, b_out) * m
    if out_feature:
        return fe * m, out
    return out


if __name__ == "__main__":
    # Small shapes consistent with the module; T > chunk so the multi-chunk
    # halo-DMA path of the fused kernel is exercised.
    N, dim, num_f_maps, num_classes, num_layers, T = 2, 20, 16, 10, 3, 200

    key = jax.random.PRNGKey(0)
    keys = iter(jax.random.split(key, 32))

    def nrm(shape, scale=0.1):
        return scale * jax.random.normal(next(keys), shape, dtype=jnp.float32)

    x = jax.random.normal(next(keys), (N, dim, T), dtype=jnp.float32)
    # MS-TCN style mask: ones for valid frames, zeros for trailing padding frames.
    lengths = jnp.array([T, T - 57], dtype=jnp.int32)
    mask = (jnp.arange(T)[None, None, :] < lengths[:, None, None]).astype(jnp.float32)
    mask = jnp.broadcast_to(mask, (N, num_classes, T))

    params = {
        'conv_in': (nrm((num_f_maps, dim, 1)), nrm((num_f_maps,))),
        'layers': [(nrm((num_f_maps, num_f_maps, 3)), nrm((num_f_maps,)),
                    nrm((num_f_maps, num_f_maps, 1)), nrm((num_f_maps,)))
                   for _ in range(num_layers)],
        'conv_out': (nrm((num_classes, num_f_maps, 1)), nrm((num_classes,))),
    }

    # 1) Strict check: f32 MXU operands, small chunk to exercise multiple
    #    (batch, chunk) grid steps and the halo windows; also the out_feature path.
    fwd_f32 = jax.jit(lambda xx, mm, pp: single_stage_model(
        xx, mm, pp, out_feature=True, chunk=128, mm_dtype=jnp.float32))
    fe, y = jax.block_until_ready(fwd_f32(x, mask, params))

    fe_ref, y_ref = _single_stage_ref(x, mask, params, out_feature=True)
    assert y.shape == (N, num_classes, T) and fe.shape == (N, num_f_maps, T)
    fe_err = jnp.max(jnp.abs(fe - fe_ref))
    y_err = jnp.max(jnp.abs(y - y_ref))
    assert jnp.allclose(fe, fe_ref, atol=1e-3, rtol=1e-3), f"feature mismatch: {fe_err}"
    assert jnp.allclose(y, y_ref, atol=1e-3, rtol=1e-3), f"output mismatch: {y_err}"

    # 2) bf16 MXU-operand fast path (v6e/v7x feedback), default dilation-aware
    #    chunk.  Looser tolerance: bf16 operands with f32 accumulation.
    fwd_bf16 = jax.jit(lambda xx, mm, pp: single_stage_model(
        xx, mm, pp, mm_dtype=jnp.bfloat16))
    y_bf16 = jax.block_until_ready(fwd_bf16(x, mask, params))
    assert y_bf16.shape == (N, num_classes, T)
    bf_err = jnp.max(jnp.abs(y_bf16 - y_ref))
    assert jnp.allclose(y_bf16, y_ref, atol=5e-2, rtol=5e-2), f"bf16 mismatch: {bf_err}"

    print("KERNEL_OK")
</pallas_src>

<mosaic_0001>
module attributes {stable_mosaic.version = 11 : i64} {
  func.func @_conv_in_kernel(%arg0: i32, %arg1: i32, %arg2: memref<1x20x128xf32, #tpu.memory_space<vmem>>, %arg3: memref<1x1x128xf32, #tpu.memory_space<vmem>>, %arg4: memref<16x20xf32, #tpu.memory_space<vmem>>, %arg5: memref<16x1xf32, #tpu.memory_space<vmem>>, %arg6: memref<1x16x128xf32, #tpu.memory_space<vmem>>) attributes {dimension_semantics = [#tpu.dimension_semantics<parallel>, #tpu.dimension_semantics<parallel>], iteration_bounds = array<i64: 2, 4>, scalar_prefetch = 0 : i64, scratch_operands = 0 : i64, tpu.core_type = #tpu.core_type<tc>, window_params = [{transform_indices = @transform_0, window_bounds = array<i64: 1, 20, 128>}, {transform_indices = @transform_1, window_bounds = array<i64: 1, 1, 128>}, {pipeline_mode = #tpu.pipeline_mode<synchronous>, transform_indices = @transform_2, window_bounds = array<i64: 16, 20>}, {pipeline_mode = #tpu.pipeline_mode<synchronous>, transform_indices = @transform_3, window_bounds = array<i64: 16, 1>}, {transform_indices = @transform_4, window_bounds = array<i64: 1, 16, 128>}]} {
    %c0 = arith.constant 0 : index
    %c0_0 = arith.constant 0 : index
    %0 = vector.load %arg4[%c0, %c0_0] : memref<16x20xf32, #tpu.memory_space<vmem>>, vector<16x20xf32>
    %c0_1 = arith.constant 0 : index
    %c0_2 = arith.constant 0 : index
    %c0_3 = arith.constant 0 : index
    %1 = vector.load %arg2[%c0_1, %c0_2, %c0_3] : memref<1x20x128xf32, #tpu.memory_space<vmem>>, vector<1x20x128xf32>
    %2 = vector.shape_cast %1 : vector<1x20x128xf32> to vector<20x128xf32>
    %cst = arith.constant dense<0.000000e+00> : vector<16x128xf32>
    %3 = tpu.matmul %0, %2, %cst {dimension_numbers = #tpu.dot_dimension_numbers<[1], [0], [0], [1], [0, 0, 1, 1], [], []>} : vector<16x20xf32>, vector<20x128xf32>, vector<16x128xf32> -> vector<16x128xf32>
    %c0_4 = arith.constant 0 : index
    %c0_5 = arith.constant 0 : index
    %4 = vector.load %arg5[%c0_4, %c0_5] : memref<16x1xf32, #tpu.memory_space<vmem>>, vector<16x1xf32>
    %5 = vector.broadcast %4 : vector<16x1xf32> to vector<16x128xf32>
    %6 = arith.addf %3, %5 : vector<16x128xf32>
    %c0_6 = arith.constant 0 : index
    %c0_7 = arith.constant 0 : index
    %c0_8 = arith.constant 0 : index
    %7 = vector.load %arg3[%c0_6, %c0_7, %c0_8] : memref<1x1x128xf32, #tpu.memory_space<vmem>>, vector<1x1x128xf32>
    %8 = vector.shape_cast %7 : vector<1x1x128xf32> to vector<1x128xf32>
    %9 = vector.broadcast %8 : vector<1x128xf32> to vector<16x128xf32>
    %10 = arith.mulf %6, %9 : vector<16x128xf32>
    %c0_9 = arith.constant 0 : index
    %c0_10 = arith.constant 0 : index
    %c0_11 = arith.constant 0 : index
    %11 = vector.load %arg6[%c0_9, %c0_10, %c0_11] : memref<1x16x128xf32, #tpu.memory_space<vmem>>, vector<1x16x128xf32>
    %12 = vector.shape_cast %11 : vector<1x16x128xf32> to vector<16x128xf32>
    %13 = vector.shape_cast %10 : vector<16x128xf32> to vector<1x16x128xf32>
    tpu.vector_store %arg6[%c0_9, %c0_10, %c0_11], %13 {strides = array<i32>} : memref<1x16x128xf32, #tpu.memory_space<vmem>>, vector<1x16x128xf32>,
    return
  }
  func.func @transform_0(%arg0: i32, %arg1: i32) -> (i32, i32, i32) {
    %c1_i32 = arith.constant 1 : i32
    %0 = arith.subi %arg1, %c1_i32 : i32
    %c0_i32 = arith.constant 0 : i32
    %1 = arith.maxsi %0, %c0_i32 : i32
    %c1_i32_0 = arith.constant 1 : i32
    %2 = arith.minsi %1, %c1_i32_0 : i32
    %c0_i32_1 = arith.constant 0 : i32
    %c0_i32_2 = arith.constant 0 : i32
    return %arg0, %c0_i32_1, %2 : i32, i32, i32
  }
  func.func @transform_1(%arg0: i32, %arg1: i32) -> (i32, i32, i32) {
    %c0_i32 = arith.constant 0 : i32
    %c0_i32_0 = arith.constant 0 : i32
    %c0_i32_1 = arith.constant 0 : i32
    return %c0_i32, %c0_i32_0, %arg1 : i32, i32, i32
  }
  func.func @transform_2(%arg0: i32, %arg1: i32) -> (i32, i32) {
    %c0_i32 = arith.constant 0 : i32
    %c0_i32_0 = arith.constant 0 : i32
    %c0_i32_1 = arith.constant 0 : i32
    return %c0_i32, %c0_i32_0 : i32, i32
  }
  func.func @transform_3(%arg0: i32, %arg1: i32) -> (i32, i32) {
    %c0_i32 = arith.constant 0 : i32
    %c0_i32_0 = arith.constant 0 : i32
    %c0_i32_1 = arith.constant 0 : i32
    return %c0_i32, %c0_i32_0 : i32, i32
  }
  func.func @transform_4(%arg0: i32, %arg1: i32) -> (i32, i32, i32) {
    %c0_i32 = arith.constant 0 : i32
    %c0_i32_0 = arith.constant 0 : i32
    return %arg0, %c0_i32, %arg1 : i32, i32, i32
  }
}

module attributes {stable_mosaic.version = 11 : i64} {
  func.func @_fused_stack_kernel(%arg0: i32, %arg1: i32, %arg2: memref<2x16x512xf32, #tpu.memory_space<any>>, %arg3: memref<2x1x512xf32, #tpu.memory_space<any>>, %arg4: memref<3x3x16x16xf32, #tpu.memory_space<vmem>>, %arg5: memref<3x16x1xf32, #tpu.memory_space<vmem>>, %arg6: memref<3x16x16xf32, #tpu.memory_space<vmem>>, %arg7: memref<3x16x1xf32, #tpu.memory_space<vmem>>, %arg8: memref<10x16xf32, #tpu.memory_space<vmem>>, %arg9: memref<10x1xf32, #tpu.memory_space<vmem>>, %arg10: memref<1x10x128xf32, #tpu.memory_space<vmem>>, %arg11: memref<16x640xf32, #tpu.memory_space<vmem>>, %arg12: memref<1x384xf32, #tpu.memory_space<vmem>>, %arg13: memref<2x!tpu.dma_semaphore, #tpu.memory_space<semaphore_mem>>) attributes {dimension_semantics = [#tpu.dimension_semantics<parallel>, #tpu.dimension_semantics<parallel>], iteration_bounds = array<i64: 2, 2>, scalar_prefetch = 0 : i64, scratch_operands = 3 : i64, tpu.core_type = #tpu.core_type<tc>, window_params = [{}, {}, {pipeline_mode = #tpu.pipeline_mode<synchronous>, transform_indices = @transform_2, window_bounds = array<i64: 3, 3, 16, 16>}, {pipeline_mode = #tpu.pipeline_mode<synchronous>, transform_indices = @transform_3, window_bounds = array<i64: 3, 16, 1>}, {pipeline_mode = #tpu.pipeline_mode<synchronous>, transform_indices = @transform_4, window_bounds = array<i64: 3, 16, 16>}, {pipeline_mode = #tpu.pipeline_mode<synchronous>, transform_indices = @transform_5, window_bounds = array<i64: 3, 16, 1>}, {pipeline_mode = #tpu.pipeline_mode<synchronous>, transform_indices = @transform_6, window_bounds = array<i64: 10, 16>}, {pipeline_mode = #tpu.pipeline_mode<synchronous>, transform_indices = @transform_7, window_bounds = array<i64: 10, 1>}, {transform_indices = @transform_8, window_bounds = array<i64: 1, 10, 128>}]} {
    %c128_i32 = arith.constant 128 : i32
    %0 = arith.muli %arg1, %c128_i32 : i32
    %1 = tpu.assume_multiple %0, 128 : i32
    %cst = arith.constant 0.000000e+00 : f32
    %2 = vector.broadcast %cst : f32 to vector<16x128xf32>
    %c0 = arith.constant 0 : index
    %c0_0 = arith.constant 0 : index
    %3 = vector.load %arg11[%c0, %c0_0] : memref<16x640xf32, #tpu.memory_space<vmem>>, vector<16x128xf32>
    tpu.vector_store %arg11[%c0, %c0_0], %2 {strides = array<i32>} : memref<16x640xf32, #tpu.memory_space<vmem>>, vector<16x128xf32>,
    %cst_1 = arith.constant 0.000000e+00 : f32
    %4 = vector.broadcast %cst_1 : f32 to vector<16x128xf32>
    %c0_2 = arith.constant 0 : index
    %c512 = arith.constant 512 : index
    %5 = vector.load %arg11[%c0_2, %c512] : memref<16x640xf32, #tpu.memory_space<vmem>>, vector<16x128xf32>
    tpu.vector_store %arg11[%c0_2, %c512], %4 {strides = array<i32>} : memref<16x640xf32, #tpu.memory_space<vmem>>, vector<16x128xf32>,
    %c0_i32 = arith.constant 0 : i32
    %c0_i32_3 = arith.constant 0 : i32
    %6 = tpu.memref_slice %arg2[%arg0, %c0_i32_3, %1] : memref<2x16x512xf32, #tpu.memory_space<any>> -> memref<1x16x384xf32, #tpu.memory_space<any>>
    %7 = tpu.memref_squeeze %6 : memref<1x16x384xf32, #tpu.memory_space<any>> -> memref<16x384xf32, #tpu.memory_space<any>>
    %c0_i32_4 = arith.constant 0 : i32
    %c128_i32_5 = arith.constant 128 : i32
    %8 = tpu.memref_slice %arg11[%c0_i32_4, %c128_i32_5] : memref<16x640xf32, #tpu.memory_space<vmem>> -> memref<16x384xf32, #tpu.memory_space<vmem>>
    %9 = tpu.memref_slice %arg13[%c0_i32] : memref<2x!tpu.dma_semaphore, #tpu.memory_space<semaphore_mem>> -> memref<1x!tpu.dma_semaphore, #tpu.memory_space<semaphore_mem>>
    %10 = tpu.memref_squeeze %9 : memref<1x!tpu.dma_semaphore, #tpu.memory_space<semaphore_mem>> -> memref<!tpu.dma_semaphore, #tpu.memory_space<semaphore_mem>>
    tpu.enqueue_dma source(%7 : memref<16x384xf32, #tpu.memory_space<any>>) target(%8 : memref<16x384xf32, #tpu.memory_space<vmem>>) target_semaphore(%10 : memref<!tpu.dma_semaphore, #tpu.memory_space<semaphore_mem>>)
    %c1_i32 = arith.constant 1 : i32
    %c0_i32_6 = arith.constant 0 : i32
    %11 = tpu.memref_slice %arg3[%arg0, %c0_i32_6, %1] : memref<2x1x512xf32, #tpu.memory_space<any>> -> memref<1x1x384xf32, #tpu.memory_space<any>>
    %12 = tpu.memref_squeeze %11 : memref<1x1x384xf32, #tpu.memory_space<any>> -> memref<1x384xf32, #tpu.memory_space<any>>
    %13 = tpu.memref_slice %arg13[%c1_i32] : memref<2x!tpu.dma_semaphore, #tpu.memory_space<semaphore_mem>> -> memref<1x!tpu.dma_semaphore, #tpu.memory_space<semaphore_mem>>
    %14 = tpu.memref_squeeze %13 : memref<1x!tpu.dma_semaphore, #tpu.memory_space<semaphore_mem>> -> memref<!tpu.dma_semaphore, #tpu.memory_space<semaphore_mem>>
    tpu.enqueue_dma source(%12 : memref<1x384xf32, #tpu.memory_space<any>>) target(%arg12 : memref<1x384xf32, #tpu.memory_space<vmem>>) target_semaphore(%14 : memref<!tpu.dma_semaphore, #tpu.memory_space<semaphore_mem>>)
    %c0_i32_7 = arith.constant 0 : i32
    %c0_i32_8 = arith.constant 0 : i32
    %15 = tpu.memref_slice %arg2[%arg0, %c0_i32_8, %1] : memref<2x16x512xf32, #tpu.memory_space<any>> -> memref<1x16x384xf32, #tpu.memory_space<any>>
    %16 = tpu.memref_squeeze %15 : memref<1x16x384xf32, #tpu.memory_space<any>> -> memref<16x384xf32, #tpu.memory_space<any>>
    %c0_i32_9 = arith.constant 0 : i32
    %c128_i32_10 = arith.constant 128 : i32
    %17 = tpu.memref_slice %arg11[%c0_i32_9, %c128_i32_10] : memref<16x640xf32, #tpu.memory_space<vmem>> -> memref<16x384xf32, #tpu.memory_space<vmem>>
    %18 = tpu.memref_slice %arg13[%c0_i32_7] : memref<2x!tpu.dma_semaphore, #tpu.memory_space<semaphore_mem>> -> memref<1x!tpu.dma_semaphore, #tpu.memory_space<semaphore_mem>>
    %19 = tpu.memref_squeeze %18 : memref<1x!tpu.dma_semaphore, #tpu.memory_space<semaphore_mem>> -> memref<!tpu.dma_semaphore, #tpu.memory_space<semaphore_mem>>
    tpu.wait_dma2 semaphore(%19 : memref<!tpu.dma_semaphore, #tpu.memory_space<semaphore_mem>>) src(%16 : memref<16x384xf32, #tpu.memory_space<any>>) dst(%17 : memref<16x384xf32, #tpu.memory_space<vmem>>)
    %c1_i32_11 = arith.constant 1 : i32
    %c0_i32_12 = arith.constant 0 : i32
    %20 = tpu.memref_slice %arg3[%arg0, %c0_i32_12, %1] : memref<2x1x512xf32, #tpu.memory_space<any>> -> memref<1x1x384xf32, #tpu.memory_space<any>>
    %21 = tpu.memref_squeeze %20 : memref<1x1x384xf32, #tpu.memory_space<any>> -> memref<1x384xf32, #tpu.memory_space<any>>
    %22 = tpu.memref_slice %arg13[%c1_i32_11] : memref<2x!tpu.dma_semaphore, #tpu.memory_space<semaphore_mem>> -> memref<1x!tpu.dma_semaphore, #tpu.memory_space<semaphore_mem>>
    %23 = tpu.memref_squeeze %22 : memref<1x!tpu.dma_semaphore, #tpu.memory_space<semaphore_mem>> -> memref<!tpu.dma_semaphore, #tpu.memory_space<semaphore_mem>>
    tpu.wait_dma2 semaphore(%23 : memref<!tpu.dma_semaphore, #tpu.memory_space<semaphore_mem>>) src(%21 : memref<1x384xf32, #tpu.memory_space<any>>) dst(%arg12 : memref<1x384xf32, #tpu.memory_space<vmem>>)
    %c0_13 = arith.constant 0 : index
    %c0_14 = arith.constant 0 : index
    %24 = vector.load %arg12[%c0_13, %c0_14] : memref<1x384xf32, #tpu.memory_space<vmem>>, vector<1x384xf32>
    %c0_15 = arith.constant 0 : index
    %c128 = arith.constant 128 : index
    %25 = vector.load %arg11[%c0_15, %c128] : memref<16x640xf32, #tpu.memory_space<vmem>>, vector<16x384xf32>
    %c0_16 = arith.constant 0 : index
    %c127 = arith.constant 127 : index
    %26 = vector.load %arg11[%c0_16, %c127] : memref<16x640xf32, #tpu.memory_space<vmem>>, vector<16x384xf32>
    %c0_17 = arith.constant 0 : index
    %c129 = arith.constant 129 : index
    %27 = vector.load %arg11[%c0_17, %c129] : memref<16x640xf32, #tpu.memory_space<vmem>>, vector<16x384xf32>
    %c0_18 = arith.constant 0 : index
    %c0_19 = arith.constant 0 : index
    %c0_20 = arith.constant 0 : index
    %c0_21 = arith.constant 0 : index
    %28 = vector.load %arg4[%c0_18, %c0_19, %c0_20, %c0_21] : memref<3x3x16x16xf32, #tpu.memory_space<vmem>>, vector<1x1x16x16xf32>
    %29 = vector.shape_cast %28 : vector<1x1x16x16xf32> to vector<16x16xf32>
    %cst_22 = arith.constant dense<0.000000e+00> : vector<16x384xf32>
    %30 = tpu.matmul %29, %26, %cst_22 {dimension_numbers = #tpu.dot_dimension_numbers<[1], [0], [0], [1], [0, 0, 1, 1], [], []>} : vector<16x16xf32>, vector<16x384xf32>, vector<16x384xf32> -> vector<16x384xf32>
    %c0_23 = arith.constant 0 : index
    %c1 = arith.constant 1 : index
    %c0_24 = arith.constant 0 : index
    %c0_25 = arith.constant 0 : index
    %31 = vector.load %arg4[%c0_23, %c1, %c0_24, %c0_25] : memref<3x3x16x16xf32, #tpu.memory_space<vmem>>, vector<1x1x16x16xf32>
    %32 = vector.shape_cast %31 : vector<1x1x16x16xf32> to vector<16x16xf32>
    %cst_26 = arith.constant dense<0.000000e+00> : vector<16x384xf32>
    %33 = tpu.matmul %32, %25, %cst_26 {dimension_numbers = #tpu.dot_dimension_numbers<[1], [0], [0], [1], [0, 0, 1, 1], [], []>} : vector<16x16xf32>, vector<16x384xf32>, vector<16x384xf32> -> vector<16x384xf32>
    %34 = arith.addf %30, %33 : vector<16x384xf32>
    %c0_27 = arith.constant 0 : index
    %c2 = arith.constant 2 : index
    %c0_28 = arith.constant 0 : index
    %c0_29 = arith.constant 0 : index
    %35 = vector.load %arg4[%c0_27, %c2, %c0_28, %c0_29] : memref<3x3x16x16xf32, #tpu.memory_space<vmem>>, vector<1x1x16x16xf32>
    %36 = vector.shape_cast %35 : vector<1x1x16x16xf32> to vector<16x16xf32>
    %cst_30 = arith.constant dense<0.000000e+00> : vector<16x384xf32>
    %37 = tpu.matmul %36, %27, %cst_30 {dimension_numbers = #tpu.dot_dimension_numbers<[1], [0], [0], [1], [0, 0, 1, 1], [], []>} : vector<16x16xf32>, vector<16x384xf32>, vector<16x384xf32> -> vector<16x384xf32>
    %38 = arith.addf %34, %37 : vector<16x384xf32>
    %c0_31 = arith.constant 0 : index
    %c0_32 = arith.constant 0 : index
    %c0_33 = arith.constant 0 : index
    %39 = vector.load %arg5[%c0_31, %c0_32, %c0_33] : memref<3x16x1xf32, #tpu.memory_space<vmem>>, vector<1x16x1xf32>
    %40 = vector.shape_cast %39 : vector<1x16x1xf32> to vector<16x1xf32>
    %41 = vector.broadcast %40 : vector<16x1xf32> to vector<16x384xf32>
    %42 = arith.addf %38, %41 : vector<16x384xf32>
    %cst_34 = arith.constant 0.000000e+00 : f32
    %43 = vector.broadcast %cst_34 : f32 to vector<16x384xf32>
    %44 = arith.maximumf %42, %43 : vector<16x384xf32>
    %c0_35 = arith.constant 0 : index
    %c0_36 = arith.constant 0 : index
    %c0_37 = arith.constant 0 : index
    %45 = vector.load %arg6[%c0_35, %c0_36, %c0_37] : memref<3x16x16xf32, #tpu.memory_space<vmem>>, vector<1x16x16xf32>
    %46 = vector.shape_cast %45 : vector<1x16x16xf32> to vector<16x16xf32>
    %cst_38 = arith.constant dense<0.000000e+00> : vector<16x384xf32>
    %47 = tpu.matmul %46, %44, %cst_38 {dimension_numbers = #tpu.dot_dimension_numbers<[1], [0], [0], [1], [0, 0, 1, 1], [], []>} : vector<16x16xf32>, vector<16x384xf32>, vector<16x384xf32> -> vector<16x384xf32>
    %c0_39 = arith.constant 0 : index
    %c0_40 = arith.constant 0 : index
    %c0_41 = arith.constant 0 : index
    %48 = vector.load %arg7[%c0_39, %c0_40, %c0_41] : memref<3x16x1xf32, #tpu.memory_space<vmem>>, vector<1x16x1xf32>
    %49 = vector.shape_cast %48 : vector<1x16x1xf32> to vector<16x1xf32>
    %50 = vector.broadcast %49 : vector<16x1xf32> to vector<16x384xf32>
    %51 = arith.addf %47, %50 : vector<16x384xf32>
    %52 = arith.addf %25, %51 : vector<16x384xf32>
    %53 = vector.broadcast %24 : vector<1x384xf32> to vector<16x384xf32>
    %54 = arith.mulf %52, %53 : vector<16x384xf32>
    %c0_42 = arith.constant 0 : index
    %c128_43 = arith.constant 128 : index
    %55 = vector.load %arg11[%c0_42, %c128_43] : memref<16x640xf32, #tpu.memory_space<vmem>>, vector<16x384xf32>
    tpu.vector_store %arg11[%c0_42, %c128_43], %54 {strides = array<i32>} : memref<16x640xf32, #tpu.memory_space<vmem>>, vector<16x384xf32>,
    %c0_44 = arith.constant 0 : index
    %c128_45 = arith.constant 128 : index
    %56 = vector.load %arg11[%c0_44, %c128_45] : memref<16x640xf32, #tpu.memory_space<vmem>>, vector<16x384xf32>
    %c0_46 = arith.constant 0 : index
    %c126 = arith.constant 126 : index
    %57 = vector.load %arg11[%c0_46, %c126] : memref<16x640xf32, #tpu.memory_space<vmem>>, vector<16x384xf32>
    %c0_47 = arith.constant 0 : index
    %c130 = arith.constant 130 : index
    %58 = vector.load %arg11[%c0_47, %c130] : memref<16x640xf32, #tpu.memory_space<vmem>>, vector<16x384xf32>
    %c1_48 = arith.constant 1 : index
    %c0_49 = arith.constant 0 : index
    %c0_50 = arith.constant 0 : index
    %c0_51 = arith.constant 0 : index
    %59 = vector.load %arg4[%c1_48, %c0_49, %c0_50, %c0_51] : memref<3x3x16x16xf32, #tpu.memory_space<vmem>>, vector<1x1x16x16xf32>
    %60 = vector.shape_cast %59 : vector<1x1x16x16xf32> to vector<16x16xf32>
    %cst_52 = arith.constant dense<0.000000e+00> : vector<16x384xf32>
    %61 = tpu.matmul %60, %57, %cst_52 {dimension_numbers = #tpu.dot_dimension_numbers<[1], [0], [0], [1], [0, 0, 1, 1], [], []>} : vector<16x16xf32>, vector<16x384xf32>, vector<16x384xf32> -> vector<16x384xf32>
    %c1_53 = arith.constant 1 : index
    %c1_54 = arith.constant 1 : index
    %c0_55 = arith.constant 0 : index
    %c0_56 = arith.constant 0 : index
    %62 = vector.load %arg4[%c1_53, %c1_54, %c0_55, %c0_56] : memref<3x3x16x16xf32, #tpu.memory_space<vmem>>, vector<1x1x16x16xf32>
    %63 = vector.shape_cast %62 : vector<1x1x16x16xf32> to vector<16x16xf32>
    %cst_57 = arith.constant dense<0.000000e+00> : vector<16x384xf32>
    %64 = tpu.matmul %63, %56, %cst_57 {dimension_numbers = #tpu.dot_dimension_numbers<[1], [0], [0], [1], [0, 0, 1, 1], [], []>} : vector<16x16xf32>, vector<16x384xf32>, vector<16x384xf32> -> vector<16x384xf32>
    %65 = arith.addf %61, %64 : vector<16x384xf32>
    %c1_58 = arith.constant 1 : index
    %c2_59 = arith.constant 2 : index
    %c0_60 = arith.constant 0 : index
    %c0_61 = arith.constant 0 : index
    %66 = vector.load %arg4[%c1_58, %c2_59, %c0_60, %c0_61] : memref<3x3x16x16xf32, #tpu.memory_space<vmem>>, vector<1x1x16x16xf32>
    %67 = vector.shape_cast %66 : vector<1x1x16x16xf32> to vector<16x16xf32>
    %cst_62 = arith.constant dense<0.000000e+00> : vector<16x384xf32>
    %68 = tpu.matmul %67, %58, %cst_62 {dimension_numbers = #tpu.dot_dimension_numbers<[1], [0], [0], [1], [0, 0, 1, 1], [], []>} : vector<16x16xf32>, vector<16x384xf32>, vector<16x384xf32> -> vector<16x384xf32>
    %69 = arith.addf %65, %68 : vector<16x384xf32>
    %c1_63 = arith.constant 1 : index
    %c0_64 = arith.constant 0 : index
    %c0_65 = arith.constant 0 : index
    %70 = vector.load %arg5[%c1_63, %c0_64, %c0_65] : memref<3x16x1xf32, #tpu.memory_space<vmem>>, vector<1x16x1xf32>
    %71 = vector.shape_cast %70 : vector<1x16x1xf32> to vector<16x1xf32>
    %72 = vector.broadcast %71 : vector<16x1xf32> to vector<16x384xf32>
    %73 = arith.addf %69, %72 : vector<16x384xf32>
    %cst_66 = arith.constant 0.000000e+00 : f32
    %74 = vector.broadcast %cst_66 : f32 to vector<16x384xf32>
    %75 = arith.maximumf %73, %74 : vector<16x384xf32>
    %c1_67 = arith.constant 1 : index
    %c0_68 = arith.constant 0 : index
    %c0_69 = arith.constant 0 : index
    %76 = vector.load %arg6[%c1_67, %c0_68, %c0_69] : memref<3x16x16xf32, #tpu.memory_space<vmem>>, vector<1x16x16xf32>
    %77 = vector.shape_cast %76 : vector<1x16x16xf32> to vector<16x16xf32>
    %cst_70 = arith.constant dense<0.000000e+00> : vector<16x384xf32>
    %78 = tpu.matmul %77, %75, %cst_70 {dimension_numbers = #tpu.dot_dimension_numbers<[1], [0], [0], [1], [0, 0, 1, 1], [], []>} : vector<16x16xf32>, vector<16x384xf32>, vector<16x384xf32> -> vector<16x384xf32>
    %c1_71 = arith.constant 1 : index
    %c0_72 = arith.constant 0 : index
    %c0_73 = arith.constant 0 : index
    %79 = vector.load %arg7[%c1_71, %c0_72, %c0_73] : memref<3x16x1xf32, #tpu.memory_space<vmem>>, vector<1x16x1xf32>
    %80 = vector.shape_cast %79 : vector<1x16x1xf32> to vector<16x1xf32>
    %81 = vector.broadcast %80 : vector<16x1xf32> to vector<16x384xf32>
    %82 = arith.addf %78, %81 : vector<16x384xf32>
    %83 = arith.addf %56, %82 : vector<16x384xf32>
    %84 = vector.broadcast %24 : vector<1x384xf32> to vector<16x384xf32>
    %85 = arith.mulf %83, %84 : vector<16x384xf32>
    %c0_74 = arith.constant 0 : index
    %c128_75 = arith.constant 128 : index
    %86 = vector.load %arg11[%c0_74, %c128_75] : memref<16x640xf32, #tpu.memory_space<vmem>>, vector<16x384xf32>
    tpu.vector_store %arg11[%c0_74, %c128_75], %85 {strides = array<i32>} : memref<16x640xf32, #tpu.memory_space<vmem>>, vector<16x384xf32>,
    %c0_76 = arith.constant 0 : index
    %c128_77 = arith.constant 128 : index
    %87 = vector.load %arg11[%c0_76, %c128_77] : memref<16x640xf32, #tpu.memory_space<vmem>>, vector<16x384xf32>
    %c0_78 = arith.constant 0 : index
    %c124 = arith.constant 124 : index
    %88 = vector.load %arg11[%c0_78, %c124] : memref<16x640xf32, #tpu.memory_space<vmem>>, vector<16x384xf32>
    %c0_79 = arith.constant 0 : index
    %c132 = arith.constant 132 : index
    %89 = vector.load %arg11[%c0_79, %c132] : memref<16x640xf32, #tpu.memory_space<vmem>>, vector<16x384xf32>
    %c2_80 = arith.constant 2 : index
    %c0_81 = arith.constant 0 : index
    %c0_82 = arith.constant 0 : index
    %c0_83 = arith.constant 0 : index
    %90 = vector.load %arg4[%c2_80, %c0_81, %c0_82, %c0_83] : memref<3x3x16x16xf32, #tpu.memory_space<vmem>>, vector<1x1x16x16xf32>
    %91 = vector.shape_cast %90 : vector<1x1x16x16xf32> to vector<16x16xf32>
    %cst_84 = arith.constant dense<0.000000e+00> : vector<16x384xf32>
    %92 = tpu.matmul %91, %88, %cst_84 {dimension_numbers = #tpu.dot_dimension_numbers<[1], [0], [0], [1], [0, 0, 1, 1], [], []>} : vector<16x16xf32>, vector<16x384xf32>, vector<16x384xf32> -> vector<16x384xf32>
    %c2_85 = arith.constant 2 : index
    %c1_86 = arith.constant 1 : index
    %c0_87 = arith.constant 0 : index
    %c0_88 = arith.constant 0 : index
    %93 = vector.load %arg4[%c2_85, %c1_86, %c0_87, %c0_88] : memref<3x3x16x16xf32, #tpu.memory_space<vmem>>, vector<1x1x16x16xf32>
    %94 = vector.shape_cast %93 : vector<1x1x16x16xf32> to vector<16x16xf32>
    %cst_89 = arith.constant dense<0.000000e+00> : vector<16x384xf32>
    %95 = tpu.matmul %94, %87, %cst_89 {dimension_numbers = #tpu.dot_dimension_numbers<[1], [0], [0], [1], [0, 0, 1, 1], [], []>} : vector<16x16xf32>, vector<16x384xf32>, vector<16x384xf32> -> vector<16x384xf32>
    %96 = arith.addf %92, %95 : vector<16x384xf32>
    %c2_90 = arith.constant 2 : index
    %c2_91 = arith.constant 2 : index
    %c0_92 = arith.constant 0 : index
    %c0_93 = arith.constant 0 : index
    %97 = vector.load %arg4[%c2_90, %c2_91, %c0_92, %c0_93] : memref<3x3x16x16xf32, #tpu.memory_space<vmem>>, vector<1x1x16x16xf32>
    %98 = vector.shape_cast %97 : vector<1x1x16x16xf32> to vector<16x16xf32>
    %cst_94 = arith.constant dense<0.000000e+00> : vector<16x384xf32>
    %99 = tpu.matmul %98, %89, %cst_94 {dimension_numbers = #tpu.dot_dimension_numbers<[1], [0], [0], [1], [0, 0, 1, 1], [], []>} : vector<16x16xf32>, vector<16x384xf32>, vector<16x384xf32> -> vector<16x384xf32>
    %100 = arith.addf %96, %99 : vector<16x384xf32>
    %c2_95 = arith.constant 2 : index
    %c0_96 = arith.constant 0 : index
    %c0_97 = arith.constant 0 : index
    %101 = vector.load %arg5[%c2_95, %c0_96, %c0_97] : memref<3x16x1xf32, #tpu.memory_space<vmem>>, vector<1x16x1xf32>
    %102 = vector.shape_cast %101 : vector<1x16x1xf32> to vector<16x1xf32>
    %103 = vector.broadcast %102 : vector<16x1xf32> to vector<16x384xf32>
    %104 = arith.addf %100, %103 : vector<16x384xf32>
    %cst_98 = arith.constant 0.000000e+00 : f32
    %105 = vector.broadcast %cst_98 : f32 to vector<16x384xf32>
    %106 = arith.maximumf %104, %105 : vector<16x384xf32>
    %c2_99 = arith.constant 2 : index
    %c0_100 = arith.constant 0 : index
    %c0_101 = arith.constant 0 : index
    %107 = vector.load %arg6[%c2_99, %c0_100, %c0_101] : memref<3x16x16xf32, #tpu.memory_space<vmem>>, vector<1x16x16xf32>
    %108 = vector.shape_cast %107 : vector<1x16x16xf32> to vector<16x16xf32>
    %cst_102 = arith.constant dense<0.000000e+00> : vector<16x384xf32>
    %109 = tpu.matmul %108, %106, %cst_102 {dimension_numbers = #tpu.dot_dimension_numbers<[1], [0], [0], [1], [0, 0, 1, 1], [], []>} : vector<16x16xf32>, vector<16x384xf32>, vector<16x384xf32> -> vector<16x384xf32>
    %c2_103 = arith.constant 2 : index
    %c0_104 = arith.constant 0 : index
    %c0_105 = arith.constant 0 : index
    %110 = vector.load %arg7[%c2_103, %c0_104, %c0_105] : memref<3x16x1xf32, #tpu.memory_space<vmem>>, vector<1x16x1xf32>
    %111 = vector.shape_cast %110 : vector<1x16x1xf32> to vector<16x1xf32>
    %112 = vector.broadcast %111 : vector<16x1xf32> to vector<16x384xf32>
    %113 = arith.addf %109, %112 : vector<16x384xf32>
    %114 = arith.addf %87, %113 : vector<16x384xf32>
    %115 = vector.broadcast %24 : vector<1x384xf32> to vector<16x384xf32>
    %116 = arith.mulf %114, %115 : vector<16x384xf32>
    %c0_106 = arith.constant 0 : index
    %c128_107 = arith.constant 128 : index
    %117 = vector.load %arg11[%c0_106, %c128_107] : memref<16x640xf32, #tpu.memory_space<vmem>>, vector<16x384xf32>
    tpu.vector_store %arg11[%c0_106, %c128_107], %116 {strides = array<i32>} : memref<16x640xf32, #tpu.memory_space<vmem>>, vector<16x384xf32>,
    %c0_108 = arith.constant 0 : index
    %c256 = arith.constant 256 : index
    %118 = vector.load %arg11[%c0_108, %c256] : memref<16x640xf32, #tpu.memory_space<vmem>>, vector<16x128xf32>
    %c0_109 = arith.constant 0 : index
    %c128_110 = arith.constant 128 : index
    %119 = vector.load %arg12[%c0_109, %c128_110] : memref<1x384xf32, #tpu.memory_space<vmem>>, vector<1x128xf32>
    %c0_111 = arith.constant 0 : index
    %c0_112 = arith.constant 0 : index
    %120 = vector.load %arg8[%c0_111, %c0_112] : memref<10x16xf32, #tpu.memory_space<vmem>>, vector<10x16xf32>
    %cst_113 = arith.constant dense<0.000000e+00> : vector<10x128xf32>
    %121 = tpu.matmul %120, %118, %cst_113 {dimension_numbers = #tpu.dot_dimension_numbers<[1], [0], [0], [1], [0, 0, 1, 1], [], []>} : vector<10x16xf32>, vector<16x128xf32>, vector<10x128xf32> -> vector<10x128xf32>
    %c0_114 = arith.constant 0 : index
    %c0_115 = arith.constant 0 : index
    %122 = vector.load %arg9[%c0_114, %c0_115] : memref<10x1xf32, #tpu.memory_space<vmem>>, vector<10x1xf32>
    %123 = vector.broadcast %122 : vector<10x1xf32> to vector<10x128xf32>
    %124 = arith.addf %121, %123 : vector<10x128xf32>
    %125 = vector.broadcast %119 : vector<1x128xf32> to vector<10x128xf32>
    %126 = arith.mulf %124, %125 : vector<10x128xf32>
    %c0_116 = arith.constant 0 : index
    %c0_117 = arith.constant 0 : index
    %c0_118 = arith.constant 0 : index
    %127 = vector.load %arg10[%c0_116, %c0_117, %c0_118] : memref<1x10x128xf32, #tpu.memory_space<vmem>>, vector<1x10x128xf32>
    %128 = vector.shape_cast %127 : vector<1x10x128xf32> to vector<10x128xf32>
    %129 = vector.shape_cast %126 : vector<10x128xf32> to vector<1x10x128xf32>
    tpu.vector_store %arg10[%c0_116, %c0_117, %c0_118], %129 {strides = array<i32>} : memref<1x10x128xf32, #tpu.memory_space<vmem>>, vector<1x10x128xf32>,
    return
  }
  func.func @transform_2(%arg0: i32, %arg1: i32) -> (i32, i32, i32, i32) {
    %c0_i32 = arith.constant 0 : i32
    %c0_i32_0 = arith.constant 0 : i32
    %c0_i32_1 = arith.constant 0 : i32
    %c0_i32_2 = arith.constant 0 : i32
    %c0_i32_3 = arith.constant 0 : i32
    return %c0_i32, %c0_i32_0, %c0_i32_1, %c0_i32_2 : i32, i32, i32, i32
  }
  func.func @transform_3(%arg0: i32, %arg1: i32) -> (i32, i32, i32) {
    %c0_i32 = arith.constant 0 : i32
    %c0_i32_0 = arith.constant 0 : i32
    %c0_i32_1 = arith.constant 0 : i32
    %c0_i32_2 = arith.constant 0 : i32
    return %c0_i32, %c0_i32_0, %c0_i32_1 : i32, i32, i32
  }
  func.func @transform_4(%arg0: i32, %arg1: i32) -> (i32, i32, i32) {
    %c0_i32 = arith.constant 0 : i32
    %c0_i32_0 = arith.constant 0 : i32
    %c0_i32_1 = arith.constant 0 : i32
    %c0_i32_2 = arith.constant 0 : i32
    return %c0_i32, %c0_i32_0, %c0_i32_1 : i32, i32, i32
  }
  func.func @transform_5(%arg0: i32, %arg1: i32) -> (i32, i32, i32) {
    %c0_i32 = arith.constant 0 : i32
    %c0_i32_0 = arith.constant 0 : i32
    %c0_i32_1 = arith.constant 0 : i32
    %c0_i32_2 = arith.constant 0 : i32
    return %c0_i32, %c0_i32_0, %c0_i32_1 : i32, i32, i32
  }
  func.func @transform_6(%arg0: i32, %arg1: i32) -> (i32, i32) {
    %c0_i32 = arith.constant 0 : i32
    %c0_i32_0 = arith.constant 0 : i32
    %c0_i32_1 = arith.constant 0 : i32
    return %c0_i32, %c0_i32_0 : i32, i32
  }
  func.func @transform_7(%arg0: i32, %arg1: i32) -> (i32, i32) {
    %c0_i32 = arith.constant 0 : i32
    %c0_i32_0 = arith.constant 0 : i32
    %c0_i32_1 = arith.constant 0 : i32
    return %c0_i32, %c0_i32_0 : i32, i32
  }
  func.func @transform_8(%arg0: i32, %arg1: i32) -> (i32, i32, i32) {
    %c0_i32 = arith.constant 0 : i32
    %c0_i32_0 = arith.constant 0 : i32
    return %arg0, %c0_i32, %arg1 : i32, i32, i32
  }
}

</mosaic_0001>

<llo_original>
// kernel: _lambda_.2
$region0: #{_lambda_.2}
  #allocation0 [shape = 'u32[]', space=smem, size = 0x4, offset = 0x4, fixed_abs, tag = 'smem constant byte address 0x4 - core index']
  #allocation1 [shape = 'u32[144,128]{1,0:T(1,128)}', space=vmem, size = 0x12000, scoped, tag = 'internal scratch']
  %s0 = inlined_call_operand.vmem [shape: f32[2,20,256], index: 0, kind: input, shape index: {}]
  %s1 = inlined_call_operand.vmem [shape: f32[1,1,512], index: 1, kind: input, shape index: {}]
  %s2 = inlined_call_operand.vmem [shape: f32[16,20], index: 2, kind: input, shape index: {}]
  %s3 = inlined_call_operand.vmem [shape: f32[16,1], index: 3, kind: input, shape index: {}]
  %s4 = inlined_call_operand.vmem [shape: f32[2,16,512], index: 4, kind: output, shape index: {}]
  %s5 = sld [smem:[#allocation0]]
  $region121: #{_lambda_.2} parent=0
    _
  %s7 = ssub.s32 1, %s5
  %s8 = scalar_select 0, %s7, %s5
  $region1: #{_lambda_.2} parent=0
    #allocation2 [shape = 'u8[24576]{0}', space=vmem, size = 0x6000, scoped, tag = 'input window, operand 0']
    #allocation3 [shape = 'u8[16384]{0}', space=vmem, size = 0x4000, scoped, tag = 'output window, operand 0']
    loop: start=0, step=1, limit=10
    $region2: #{_lambda_.2} parent=1 // loop_pre_header
      _
    $region3: #{_lambda_.2} parent=1 // loop_header
      %s10 = sphi 0, %s14
      %p11 = scmp.ge.s32.totalorder %s10, 10
      %s17 = sphi 0, %s29
      %s18 = sphi 0, %s25
      %s19 = sphi 0, %s17
      %s20 = sphi 0, %s18
      %s21 = sphi 0, %s19
      %s22 = sphi 0, %s20
      %s44 = sphi 0, %s46
      %s47 = sphi 0, %s44
      %s48 = sphi 0, %s47
      %s64 = sphi 0, %s48
      %s70 = sphi 0, %s72
      %s73 = sphi 0, %s70
      %s74 = sphi 0, %s73
      %s90 = sphi 0, %s74
      %s94 = sphi 0, %s94
      %s96 = sphi 0, %s94
      %s97 = sphi 0, %s96
      %s111 = sphi 0, %s97
      %s115 = sphi 0, %s115
      %s117 = sphi 0, %s115
      %s118 = sphi 0, %s117
      %s132 = sphi 0, %s118
      %s140 = sphi 0, %s142
      %s143 = sphi 0, %s140
      %s144 = sphi 0, %s143
      %s160 = sphi 0, %s144
    $region4: #{_lambda_.2} parent=1 // loop_header_branch
      %13 = sbr.rel (%p11) target = $region8
    $region5: #{_lambda_.2} parent=1 // loop_body
      %s15 = ssub.s32 %s10, 1
      %s16 = ssub.s32 %s10, 2
      %s23 = sadd.s32 1, %s18
      %p24 = scmp.ge.s32.totalorder %s23, 4
      %s25 = scalar_select %p24, 0, %s23
      %s26 = sadd.s32 1, %s17
      %s27 = scalar_select %p24, %s26, %s17
      %p28 = scmp.ge.s32.totalorder %s27, 2
      %s29 = scalar_select %p28, 0, %s27
      %s30 = ssub.s32 %s18, 1
      %p31 = scmp.gt.s32.totalorder %s30, 0
      %s32 = scalar_select %p31, %s30, 0
      %p33 = scmp.lt.s32.totalorder %s32, 1
      %s34 = scalar_select %p33, %s32, 1
      %s35 = ssub.s32 %s25, 1
      %p36 = scmp.gt.s32.totalorder %s35, 0
      %s37 = scalar_select %p36, %s35, 0
      %p38 = scmp.lt.s32.totalorder %s37, 1
      %s39 = scalar_select %p38, %s37, 1
      %s40 = ssub.s32 %s17, %s29
      %s41 = ssub.s32 %s34, %s39
      %s42 = sor.u32 %s40, %s41
      %p43 = scmp.eq.s32.totalorder %s42, 0
      %s45 = sadd.s32 %s44, 1
      %s46 = scalar_select %p43, %s44, %s45
      %p49 = pneg %p43
      %p50 = scmp.eq.s32.totalorder %s10, 7
      %p51 = por %p49, %p50
      %p52 = scmp.ne.s32.totalorder %s44, %s47
      %p53 = scmp.eq.s32.totalorder %s10, 0
      %p54 = por %p52, %p53
      %p55 = scmp.ne.s32.totalorder %s44, %s47
      %p56 = scmp.eq.s32.totalorder %s15, 7
      %p57 = por %p55, %p56
      %p58 = scmp.ne.s32.totalorder %s47, %s48
      %p59 = scmp.eq.s32.totalorder %s15, 0
      %p60 = por %p58, %p59
      %p61 = scmp.ne.s32.totalorder %s47, %s48
      %p62 = scmp.eq.s32.totalorder %s16, 7
      %p63 = por %p61, %p62
      %p65 = scmp.ne.s32.totalorder %s48, %s64
      %p66 = scmp.eq.s32.totalorder %s16, 0
      %p67 = por %p65, %p66
      %s68 = ssub.s32 %s18, %s25
      %p69 = scmp.eq.s32.totalorder %s68, 0
      %s71 = sadd.s32 %s70, 1
      %s72 = scalar_select %p69, %s70, %s71
      %p75 = pneg %p69
      %p76 = scmp.eq.s32.totalorder %s10, 7
      %p77 = por %p75, %p76
      %p78 = scmp.ne.s32.totalorder %s70, %s73
      %p79 = scmp.eq.s32.totalorder %s10, 0
      %p80 = por %p78, %p79
      %p81 = scmp.ne.s32.totalorder %s70, %s73
      %p82 = scmp.eq.s32.totalorder %s15, 7
      %p83 = por %p81, %p82
      %p84 = scmp.ne.s32.totalorder %s73, %s74
      %p85 = scmp.eq.s32.totalorder %s15, 0
      %p86 = por %p84, %p85
      %p87 = scmp.ne.s32.totalorder %s73, %s74
      %p88 = scmp.eq.s32.totalorder %s16, 7
      %p89 = por %p87, %p88
      %p91 = scmp.ne.s32.totalorder %s74, %s90
      %p92 = scmp.eq.s32.totalorder %s16, 0
      %p93 = por %p91, %p92
      %s95 = sadd.s32 %s94, 1
      %p98 = scmp.eq.s32.totalorder %s10, 7
      %p99 = scmp.ne.s32.totalorder %s94, %s96
      %p100 = scmp.eq.s32.totalorder %s10, 0
      %p101 = por %p99, %p100
      %p102 = scmp.ne.s32.totalorder %s94, %s96
      %p103 = scmp.eq.s32.totalorder %s15, 7
      %p104 = por %p102, %p103
      %p105 = scmp.ne.s32.totalorder %s96, %s97
      %p106 = scmp.eq.s32.totalorder %s15, 0
      %p107 = por %p105, %p106
      %p108 = scmp.ne.s32.totalorder %s96, %s97
      %p109 = scmp.eq.s32.totalorder %s16, 7
      %p110 = por %p108, %p109
      %p112 = scmp.ne.s32.totalorder %s97, %s111
      %p113 = scmp.eq.s32.totalorder %s16, 0
      %p114 = por %p112, %p113
      %s116 = sadd.s32 %s115, 1
      %p119 = scmp.eq.s32.totalorder %s10, 7
      %p120 = scmp.ne.s32.totalorder %s115, %s117
      %p121 = scmp.eq.s32.totalorder %s10, 0
      %p122 = por %p120, %p121
      %p123 = scmp.ne.s32.totalorder %s115, %s117
      %p124 = scmp.eq.s32.totalorder %s15, 7
      %p125 = por %p123, %p124
      %p126 = scmp.ne.s32.totalorder %s117, %s118
      %p127 = scmp.eq.s32.totalorder %s15, 0
      %p128 = por %p126, %p127
      %p129 = scmp.ne.s32.totalorder %s117, %s118
      %p130 = scmp.eq.s32.totalorder %s16, 7
      %p131 = por %p129, %p130
      %p133 = scmp.ne.s32.totalorder %s118, %s132
      %p134 = scmp.eq.s32.totalorder %s16, 0
      %p135 = por %p133, %p134
      %s136 = ssub.s32 %s17, %s29
      %s137 = ssub.s32 %s18, %s25
      %s138 = sor.u32 %s136, %s137
      %p139 = scmp.eq.s32.totalorder %s138, 0
      %s141 = sadd.s32 %s140, 1
      %s142 = scalar_select %p139, %s140, %s141
      %p145 = pneg %p139
      %p146 = scmp.eq.s32.totalorder %s10, 7
      %p147 = por %p145, %p146
      %p148 = scmp.ne.s32.totalorder %s140, %s143
      %p149 = scmp.eq.s32.totalorder %s10, 0
      %p150 = por %p148, %p149
      %p151 = scmp.ne.s32.totalorder %s140, %s143
      %p152 = scmp.eq.s32.totalorder %s15, 7
      %p153 = por %p151, %p152
      %p154 = scmp.ne.s32.totalorder %s143, %s144
      %p155 = scmp.eq.s32.totalorder %s15, 0
      %p156 = por %p154, %p155
      %p157 = scmp.ne.s32.totalorder %s143, %s144
      %p158 = scmp.eq.s32.totalorder %s16, 7
      %p159 = por %p157, %p158
      %p161 = scmp.ne.s32.totalorder %s144, %s160
      %p162 = scmp.eq.s32.totalorder %s16, 0
      %p163 = por %p161, %p162
      %p164 = scmp.le.s32.totalorder 1, %s10
      %p165 = scmp.lt.s32.totalorder %s10, 9
      %p166 = pnand %p164, %p165
      %p167 = pneg %p166
      // Predicated region
      $region9: #{_lambda_.2} parent=5 // pred_check
        _
      $region10: #{_lambda_.2} parent=5 // pred_check_branch
        %169 = sbr.rel (%p166) target = $region12
      $region11: #{_lambda_.2} parent=5 // pred_region
        %s170 = ssub.s32 %s10, 1
        // Predicated region
        $region13: #{_lambda_.2} parent=11 // pred_check
          %p171 = pneg %p107
        $region14: #{_lambda_.2} parent=11 // pred_check_branch
          %173 = sbr.rel (%p171) target = $region16
        $region15: #{_lambda_.2} parent=11 // pred_region
          _
        $region16: #{_lambda_.2} parent=11 // pred_fallthru
          _
        // Predicated region
        $region17: #{_lambda_.2} parent=11 // pred_check
          %p174 = pneg %p128
        $region18: #{_lambda_.2} parent=11 // pred_check_branch
          %176 = sbr.rel (%p174) target = $region20
        $region19: #{_lambda_.2} parent=11 // pred_region
          _
        $region20: #{_lambda_.2} parent=11 // pred_fallthru
          _
      $region12: #{_lambda_.2} parent=5 // pred_fallthru
        _
      %p177 = scmp.lt.s32.totalorder %s10, 8
      // Predicated region
      $region21: #{_lambda_.2} parent=5 // pred_check
        %p178 = pneg %p177
      $region22: #{_lambda_.2} parent=5 // pred_check_branch
        %180 = sbr.rel (%p178) target = $region24
      $region23: #{_lambda_.2} parent=5 // pred_region
        // Predicated region
        $region25: #{_lambda_.2} parent=23 // pred_check
          %p181 = pneg %p54
        $region26: #{_lambda_.2} parent=23 // pred_check_branch
          %183 = sbr.rel (%p181) target = $region28
        $region27: #{_lambda_.2} parent=23 // pred_region
          %s184 = sand.u32 %s44, 1
          %s185 = sand.u32 %s44, 1
          %s186 = smul.addr %s185, 24
          %s187 = scalar_lea.vmem [#allocation2], %s186
          %s188 = ssub.s32 %s18, 1
          %p189 = scmp.gt.s32.totalorder %s188, 0
          %s190 = scalar_select %p189, %s188, 0
          %p191 = scmp.lt.s32.totalorder %s190, 1
          %s192 = scalar_select %p191, %s190, 1
          %s193 = smul.addr %s17, 6
          %s194 = sadd.s32 %s192, %s193
          %s195 = smul.addr %s194, 8
          %s196 = scalar_lea.vmem %s0, %s195
          // Predicated region
          $region29: #{_lambda_.2} parent=27 // pred_check
            _
          $region30: #{_lambda_.2} parent=27 // pred_check_branch
            %198 = sbr.rel (0) target = $region32
          $region31: #{_lambda_.2} parent=27 // pred_region
            // Predicated region
            $region33: #{_lambda_.2} parent=31 // pred_check
              _
            $region34: #{_lambda_.2} parent=31 // pred_check_branch
              %200 = sbr.rel (0) target = $region36
            $region35: #{_lambda_.2} parent=31 // pred_region
              // Predicated region
              $region48: #{_lambda_.2} parent=35 // pred_check
                _
              $region49: #{_lambda_.2} parent=35 // pred_check_branch
                %219 = sbr.rel (0) target = $region51
              $region50: #{_lambda_.2} parent=35 // pred_region
                loop: start=0, step=1, limit=1
                $region52: #{_lambda_.2} parent=50 // loop_pre_header
                  _
                $region53: #{_lambda_.2} parent=50 // loop_header
                  %s221 = sphi 0, %s225
                  %p222 = scmp.ge.s32.totalorder %s221, 1
                  %s226 = sphi %s196, %s196
                  %s227 = sphi %s187, %s187
                $region54: #{_lambda_.2} parent=50 // loop_header_branch
                  %224 = sbr.rel (%p222) target = $region58
                $region55: #{_lambda_.2} parent=50 // loop_body
                  %v228 = vld [vmem:[%s226] sm:$0xff]
                  %229 = vst [vmem:[%s227] sm:$0xff] %v228
                  %v230 = vld [vmem:[%s226 + $0x10] sm:$0xff]
                  %231 = vst [vmem:[%s227 + $0x8] sm:$0xff] %v230
                  %v232 = vld [vmem:[%s226 + $0x20] sm:$0xff]
                  %233 = vst [vmem:[%s227 + $0x10] sm:$0xff] %v232
                $region56: #{_lambda_.2} parent=50 // loop_footer
                  %s225 = sadd.s32 1, %s221
                $region57: #{_lambda_.2} parent=50 // loop_footer_branch
                  %220 = sbr.rel target = $region53
                $region58: #{_lambda_.2} parent=50 // loop_exit
                  _
              $region51: #{_lambda_.2} parent=35 // pred_fallthru
                _
              // Predicated region
              $region59: #{_lambda_.2} parent=35 // pred_check
                _
              $region60: #{_lambda_.2} parent=35 // pred_check_branch
                %235 = sbr.rel target = $region62
              $region61: #{_lambda_.2} parent=35 // pred_region
                _
              $region62: #{_lambda_.2} parent=35 // pred_fallthru
                _
            $region36: #{_lambda_.2} parent=31 // pred_fallthru
              _
            // Predicated region
            $region37: #{_lambda_.2} parent=31 // pred_check
              _
            $region38: #{_lambda_.2} parent=31 // pred_check_branch
              %202 = sbr.rel target = $region40
            $region39: #{_lambda_.2} parent=31 // pred_region
              loop: start=0, step=1, limit=1
              $region41: #{_lambda_.2} parent=39 // loop_pre_header
                _
              $region42: #{_lambda_.2} parent=39 // loop_header
                %s205 = sphi 0, %s209
                %p206 = scmp.ge.s32.totalorder %s205, 1
                %s210 = sphi %s196, %s196
                %s211 = sphi %s187, %s187
              $region43: #{_lambda_.2} parent=39 // loop_header_branch
                %208 = sbr.rel (%p206) target = $region47
              $region44: #{_lambda_.2} parent=39 // loop_body
                %v212 = vld [vmem:[%s210] sm:$0xff]
                %213 = vst [vmem:[%s211] sm:$0xff] %v212
                %v214 = vld [vmem:[%s210 + $0x10] sm:$0xff]
                %215 = vst [vmem:[%s211 + $0x8] sm:$0xff] %v214
                %v216 = vld [vmem:[%s210 + $0x20] sm:$0xff]
                %217 = vst [vmem:[%s211 + $0x10] sm:$0xff] %v216
              $region45: #{_lambda_.2} parent=39 // loop_footer
                %s209 = sadd.s32 1, %s205
              $region46: #{_lambda_.2} parent=39 // loop_footer_branch
                %204 = sbr.rel target = $region42
              $region47: #{_lambda_.2} parent=39 // loop_exit
                _
            $region40: #{_lambda_.2} parent=31 // pred_fallthru
              _
          $region32: #{_lambda_.2} parent=27 // pred_fallthru
            _
          %236 = vnop
        $region28: #{_lambda_.2} parent=23 // pred_fallthru
          _
        // Predicated region
        $region63: #{_lambda_.2} parent=23 // pred_check
          %p237 = pneg %p80
        $region64: #{_lambda_.2} parent=23 // pred_check_branch
          %239 = sbr.rel (%p237) target = $region66
        $region65: #{_lambda_.2} parent=23 // pred_region
          %p240 = scmp.lt.s32.totalorder %s18, 3
          %s241 = scalar_select %p240, %s18, 3
          %s242 = scalar_lea.vmem %s1, %s241
        $region66: #{_lambda_.2} parent=23 // pred_fallthru
          _
      $region24: #{_lambda_.2} parent=5 // pred_fallthru
        _
      %p243 = scmp.le.s32.totalorder 1, %s10
      %p244 = scmp.lt.s32.totalorder %s10, 9
      %p245 = pnand %p243, %p244
      %p246 = pneg %p245
      // Predicated region
      $region67: #{_lambda_.2} parent=5 // pred_check
        _
      $region68: #{_lambda_.2} parent=5 // pred_check_branch
        %248 = sbr.rel (%p245) target = $region70
      $region69: #{_lambda_.2} parent=5 // pred_region
        %s249 = ssub.s32 %s10, 1
        %s250 = sand.u32 %s47, 1
        %s251 = sand.u32 %s47, 1
        %s252 = smul.addr %s251, 24
        %s253 = scalar_lea.vmem [#allocation2], %s252
        // Predicated region
        $region71: #{_lambda_.2} parent=69 // pred_check
          %p254 = pneg %p60
        $region72: #{_lambda_.2} parent=69 // pred_check_branch
          %256 = sbr.rel (%p254) target = $region74
        $region73: #{_lambda_.2} parent=69 // pred_region
          _
        $region74: #{_lambda_.2} parent=69 // pred_fallthru
          _
        %s257 = sand.u32 %s47, 1
        %s258 = sand.u32 %s47, 1
        %s259 = smul.addr %s258, 24
        %s260 = scalar_lea.vmem [#allocation2], %s259
        %p261 = pneg %p60
        %p262 = pneg %p57
        %p263 = scmp.lt.s32.totalorder %s20, 3
        %s264 = scalar_select %p263, %s20, 3
        %s265 = scalar_lea.vmem %s1, %s264
        %p266 = pneg %p86
        %p267 = pneg %p83
        %p268 = pneg %p107
        %p269 = pneg %p104
        %p270 = pneg %p128
        %p271 = pneg %p125
        %p272 = pneg %p156
        %p273 = pneg %p153
        %s274 = sand.u32 %s143, 1
        %s275 = sand.u32 %s143, 1
        %s276 = smul.addr %s275, 16
        %s277 = scalar_lea.vmem [#allocation3], %s276
        %s278 = ssub.s32 %s20, 1
        %p279 = scmp.gt.s32.totalorder %s278, 0
        %s280 = scalar_select %p279, %s278, 0
        %p281 = scmp.lt.s32.totalorder %s280, 1
        %s282 = scalar_select %p281, %s280, 1
        %p283 = scmp.lt.s32.totalorder %s20, 3
        %s284 = scalar_select %p283, %s20, 3
        %s285 = scalar_lea.vmem %s1, %s284
        %v286 = vld [vmem:[%s2] sm:$0xff]
        %v287 = vld [vmem:[%s2 + $0x8] sm:$0xff]
        %v288 = vld [vmem:[%s253] sm:$0xff]
        %v289 = vld [vmem:[%s253 + $0x8] sm:$0xff]
        %v290 = vld [vmem:[%s253 + $0x10] sm:$0xf]
        %v291 = vld [vmem:[%s3] sm:$0xff]
        %v292 = vld [vmem:[%s3 + $0x8] sm:$0xff]
        %294 = vset.pattern.permute.xlu0 0
        %295 = vperm.xlu0 %294, %v291
        %v296 = vpop.permute.xlu0 %295
        %299 = vset.pattern.permute.xlu0 0
        %300 = vperm.xlu0 %299, %v292
        %v301 = vpop.permute.xlu0 %300
        %vm303 = vcmask 162816
        %v305 = vsel %vm303, %v286, 0
        %v308 = vsel %vm303, %v287, 0
        %vm310 = vcmask 1043456
        %v312 = vsel %vm310, %v290, 0
        %314 = vmatprep.subr.mxu0 0.0
        %315 = vmatpush1.msra.mxu0 %v288
        %316 = vmatprep.subr.mxu0 0.0
        %317 = vmatpush1.msra.mxu0 %v289
        %318 = vmatprep.subr.mxu0 0.0
        %319 = vmatpush1.msra.mxu0 %v312
        %320 = vmatprep.subr.mxu0 0.0
        %321 = vmatpush1.msra.mxu0 0.0
        %322 = vmatprep.subr.mxu0 0.0
        %323 = vmatpush1.msra.mxu0 0.0
        %324 = vmatprep.subr.mxu0 0.0
        %325 = vmatpush1.msra.mxu0 0.0
        %326 = vmatprep.subr.mxu0 0.0
        %327 = vmatpush1.msra.mxu0 0.0
        %328 = vmatprep.subr.mxu0 0.0
        %329 = vmatpush1.msra.mxu0 0.0
        %330 = vmatprep.subr.mxu0 0.0
        %331 = vmatpush1.msra.mxu0 0.0
        %332 = vmatprep.subr.mxu0 0.0
        %333 = vmatpush1.msra.mxu0 0.0
        %334 = vmatprep.subr.mxu0 0.0
        %335 = vmatpush1.msra.mxu0 0.0
        %336 = vmatprep.subr.mxu0 0.0
        %337 = vmatpush1.msra.mxu0 0.0
        %338 = vmatprep.subr.mxu0 0.0
        %339 = vmatpush1.msra.mxu0 0.0
        %340 = vmatprep.subr.mxu0 0.0
        %341 = vmatpush1.msra.mxu0 0.0
        %342 = vmatprep.subr.mxu0 0.0
        %343 = vmatpush1.msra.mxu0 0.0
        %344 = vmatprep.subr.mxu0 0.0
        %345 = vmatpush1.msra.mxu0 0.0
        %346 = vmatprep.subr.mxu0 0.0
        %347 = vmatpush1.msra.mxu0 0.0
        %348 = vmatprep.subr.mxu0 0.0
        %349 = vmatpush1.msra.mxu0 0.0
        %350 = vmatprep.subr.mxu0 0.0
        %351 = vmatpush1.msra.mxu0 0.0
        %352 = vmatprep.subr.mxu0 0.0
        %353 = vmatpush1.msra.mxu0 0.0
        %354 = vmatprep.subr.mxu0 0.0
        %355 = vmatpush1.msra.mxu0 0.0
        %356 = vmatprep.subr.mxu0 0.0
        %357 = vmatpush1.msra.mxu0 0.0
        %358 = vmatprep.subr.mxu0 0.0
        %359 = vmatpush1.msra.mxu0 0.0
        %360 = vmatprep.subr.mxu0 0.0
        %361 = vmatpush1.msra.mxu0 0.0
        %362 = vmatprep.subr.mxu0 0.0
        %363 = vmatpush1.msra.mxu0 0.0
        %364 = vmatprep.subr.mxu0 0.0
        %365 = vmatpush1.msra.mxu0 0.0
        %366 = vmatprep.subr.mxu0 0.0
        %367 = vmatpush1.msra.mxu0 0.0
        %368 = vmatprep.subr.mxu0 0.0
        %369 = vmatpush1.msra.mxu0 0.0
        %370 = vmatprep.subr.mxu0 0.0
        %371 = vmatpush1.msra.mxu0 0.0
        %372 = vmatprep.subr.mxu0 0.0
        %373 = vmatpush1.msra.mxu0 0.0
        %374 = vmatprep.subr.mxu0 0.0
        %375 = vmatpush1.msra.mxu0 0.0
        %376 = vmatprep.subr.mxu0 0.0
        %377 = vmatpush1.msra.mxu0 0.0
        %378 = vmatprep.mubr.f32.mxu0 0.0
        %379 = vmatmul.mubr.f32.gmra.mrb[0].mxu0 %v305
        %v380 = vpop.f32.mrb[0].mxu0
        %v381 = vadd.f32 %v296, %v380
        %v382 = vpop.f32.mrb[0].mxu0
        %383 = vmatprep.mubr.f32.mxu0 0.0
        %384 = vmatmul.mubr.f32.gmra.mrb[0].mxu0 %v308
        %v385 = vpop.f32.mrb[0].mxu0
        %v386 = vadd.f32 %v301, %v385
        %v387 = vpop.f32.mrb[0].mxu0
        %388 = vdwg.mxu0
        %v389 = vld [vmem:[%s285] sm:$0x1]
        %v391 = vlaneseq
        %v392 = vshrl.u32 %v391, 7
        %v393 = vsub.s32 0, %v392
        %v394 = vrot.slane %v389, %v393
        %v396 = vmul.f32 %v381, %v394
        %v397 = vmul.f32 %v386, %v394
        %398 = vst [vmem:[%s277] sm:$0xff] %v396
        %399 = vst [vmem:[%s277 + $0x8] sm:$0xff] %v397
        %s400 = sand.u32 %s143, 1
        %s401 = sand.u32 %s143, 1
        %s402 = smul.addr %s401, 16
        %s403 = scalar_lea.vmem [#allocation3], %s402
        // Predicated region
        $region75: #{_lambda_.2} parent=69 // pred_check
          %p404 = pneg %p153
        $region76: #{_lambda_.2} parent=69 // pred_check_branch
          %406 = sbr.rel (%p404) target = $region78
        $region77: #{_lambda_.2} parent=69 // pred_region
          %s407 = smul.addr %s19, 8
          %s408 = sadd.s32 %s20, %s407
          %s409 = smul.addr %s408, 8
          %s410 = scalar_lea.vmem %s4, %s409
          // Predicated region
          $region79: #{_lambda_.2} parent=77 // pred_check
            _
          $region80: #{_lambda_.2} parent=77 // pred_check_branch
            %412 = sbr.rel (0) target = $region82
          $region81: #{_lambda_.2} parent=77 // pred_region
            // Predicated region
            $region83: #{_lambda_.2} parent=81 // pred_check
              _
            $region84: #{_lambda_.2} parent=81 // pred_check_branch
              %414 = sbr.rel (0) target = $region86
            $region85: #{_lambda_.2} parent=81 // pred_region
              // Predicated region
              $region98: #{_lambda_.2} parent=85 // pred_check
                _
              $region99: #{_lambda_.2} parent=85 // pred_check_branch
                %431 = sbr.rel (0) target = $region101
              $region100: #{_lambda_.2} parent=85 // pred_region
                loop: start=0, step=1, limit=1
                $region102: #{_lambda_.2} parent=100 // loop_pre_header
                  _
                $region103: #{_lambda_.2} parent=100 // loop_header
                  %s433 = sphi 0, %s437
                  %p434 = scmp.ge.s32.totalorder %s433, 1
                  %s438 = sphi %s403, %s403
                  %s439 = sphi %s410, %s410
                $region104: #{_lambda_.2} parent=100 // loop_header_branch
                  %436 = sbr.rel (%p434) target = $region108
                $region105: #{_lambda_.2} parent=100 // loop_body
                  %v440 = vld [vmem:[%s438] sm:$0xff]
                  %441 = vst [vmem:[%s439] sm:$0xff] %v440
                  %v442 = vld [vmem:[%s438 + $0x8] sm:$0xff]
                  %443 = vst [vmem:[%s439 + $0x20] sm:$0xff] %v442
                $region106: #{_lambda_.2} parent=100 // loop_footer
                  %s437 = sadd.s32 1, %s433
                $region107: #{_lambda_.2} parent=100 // loop_footer_branch
                  %432 = sbr.rel target = $region103
                $region108: #{_lambda_.2} parent=100 // loop_exit
                  _
              $region101: #{_lambda_.2} parent=85 // pred_fallthru
                _
              // Predicated region
              $region109: #{_lambda_.2} parent=85 // pred_check
                _
              $region110: #{_lambda_.2} parent=85 // pred_check_branch
                %445 = sbr.rel target = $region112
              $region111: #{_lambda_.2} parent=85 // pred_region
                _
              $region112: #{_lambda_.2} parent=85 // pred_fallthru
                _
            $region86: #{_lambda_.2} parent=81 // pred_fallthru
              _
            // Predicated region
            $region87: #{_lambda_.2} parent=81 // pred_check
              _
            $region88: #{_lambda_.2} parent=81 // pred_check_branch
              %416 = sbr.rel target = $region90
            $region89: #{_lambda_.2} parent=81 // pred_region
              loop: start=0, step=1, limit=1
              $region91: #{_lambda_.2} parent=89 // loop_pre_header
                _
              $region92: #{_lambda_.2} parent=89 // loop_header
                %s419 = sphi 0, %s423
                %p420 = scmp.ge.s32.totalorder %s419, 1
                %s424 = sphi %s403, %s403
                %s425 = sphi %s410, %s410
              $region93: #{_lambda_.2} parent=89 // loop_header_branch
                %422 = sbr.rel (%p420) target = $region97
              $region94: #{_lambda_.2} parent=89 // loop_body
                %v426 = vld [vmem:[%s424] sm:$0xff]
                %427 = vst [vmem:[%s425] sm:$0xff] %v426
                %v428 = vld [vmem:[%s424 + $0x8] sm:$0xff]
                %429 = vst [vmem:[%s425 + $0x20] sm:$0xff] %v428
              $region95: #{_lambda_.2} parent=89 // loop_footer
                %s423 = sadd.s32 1, %s419
              $region96: #{_lambda_.2} parent=89 // loop_footer_branch
                %418 = sbr.rel target = $region92
              $region97: #{_lambda_.2} parent=89 // loop_exit
                _
            $region90: #{_lambda_.2} parent=81 // pred_fallthru
              _
          $region82: #{_lambda_.2} parent=77 // pred_fallthru
            _
          %446 = vnop
        $region78: #{_lambda_.2} parent=69 // pred_fallthru
          _
      $region70: #{_lambda_.2} parent=5 // pred_fallthru
        _
      %p447 = scmp.le.s32.totalorder 2, %s10
      // Predicated region
      $region113: #{_lambda_.2} parent=5 // pred_check
        %p448 = pneg %p447
      $region114: #{_lambda_.2} parent=5 // pred_check_branch
        %450 = sbr.rel (%p448) target = $region116
      $region115: #{_lambda_.2} parent=5 // pred_region
        %s451 = ssub.s32 %s10, 2
        // Predicated region
        $region117: #{_lambda_.2} parent=115 // pred_check
          %p452 = pneg %p159
        $region118: #{_lambda_.2} parent=115 // pred_check_branch
          %454 = sbr.rel (%p452) target = $region120
        $region119: #{_lambda_.2} parent=115 // pred_region
          %s455 = sand.u32 %s144, 1
          %s456 = sand.u32 %s144, 1
          %s457 = smul.addr %s456, 16
          %s458 = scalar_lea.vmem [#allocation3], %s457
        $region120: #{_lambda_.2} parent=115 // pred_fallthru
          _
      $region116: #{_lambda_.2} parent=5 // pred_fallthru
        _
    $region6: #{_lambda_.2} parent=1 // loop_footer
      %s14 = sadd.s32 1, %s10
    $region7: #{_lambda_.2} parent=1 // loop_footer_branch
      %9 = sbr.rel target = $region3
    $region8: #{_lambda_.2} parent=1 // loop_exit
      _

// kernel: _lambda_.3
$region0: #{_lambda_.3}
  #allocation0 [shape = 'u32[]', space=smem, size = 0x4, offset = 0x4, fixed_abs, tag = 'smem constant byte address 0x4 - core index']
  #allocation1 [shape = 'u32[144,128]{1,0:T(1,128)}', space=vmem, size = 0x12000, scoped, tag = 'internal scratch']
  #allocation2 [shape = 'f32[16,640]{1,0:T(8,128)}', space=vmem, size = 0xa000, scoped, tag = 'scratch operand']
  #allocation3 [shape = 'f32[1,384]{1,0:T(1,128)}', space=vmem, size = 0x600, scoped, tag = 'scratch operand']
  #allocation4 [shape = 's32[2]{0}', space=sflag, size = 0x8, scoped, tag = 'scratch operand']
  #allocation6 [shape = 's32[]', space=sflag, size = 0x4, offset = 0, fixed_abs, tag = 'sflag constant byte address 0x0 - dummy sync flag']
  #allocation7 [shape = 's32[]', space=sflag, size = 0x4, offset = 0, fixed_abs, tag = 'sflag constant byte address 0x0 - dummy sync flag']
  %s0 = inlined_call_operand.vmem [shape: f32[2,16,512], index: 0, kind: input, shape index: {}]
  %s1 = inlined_call_operand.vmem [shape: f32[2,1,512], index: 1, kind: input, shape index: {}]
  %s2 = inlined_call_operand.vmem [shape: f32[3,3,16,16], index: 2, kind: input, shape index: {}]
  %s3 = inlined_call_operand.vmem [shape: f32[3,16,1], index: 3, kind: input, shape index: {}]
  %s4 = inlined_call_operand.vmem [shape: f32[3,16,16], index: 4, kind: input, shape index: {}]
  %s5 = inlined_call_operand.vmem [shape: f32[3,16,1], index: 5, kind: input, shape index: {}]
  %s6 = inlined_call_operand.vmem [shape: f32[10,16], index: 6, kind: input, shape index: {}]
  %s7 = inlined_call_operand.vmem [shape: f32[10,1], index: 7, kind: input, shape index: {}]
  %s8 = inlined_call_operand.vmem [shape: f32[2,10,256], index: 8, kind: output, shape index: {}]
  %s9 = sld [smem:[#allocation0]]
  $region155: #{_lambda_.3} parent=0
    _
  %s11 = ssub.s32 1, %s9
  %s12 = scalar_select 0, %s11, %s9
  $region1: #{_lambda_.3} parent=0
    #allocation5 [shape = 'u8[16384]{0}', space=vmem, size = 0x4000, scoped, tag = 'output window, operand 0']
    loop: start=0, step=1, limit=6
    $region2: #{_lambda_.3} parent=1 // loop_pre_header
      _
    $region3: #{_lambda_.3} parent=1 // loop_header
      %s14 = sphi 0, %s18
      %p15 = scmp.ge.s32.totalorder %s14, 6
      %s21 = sphi 0, %s33
      %s22 = sphi 0, %s29
      %s23 = sphi 0, %s21
      %s24 = sphi 0, %s22
      %s25 = sphi 0, %s23
      %s26 = sphi 0, %s24
      %s34 = sphi 0, %s34
      %s36 = sphi 0, %s34
      %s37 = sphi 0, %s36
      %s51 = sphi 0, %s37
      %s55 = sphi 0, %s55
      %s57 = sphi 0, %s55
      %s58 = sphi 0, %s57
      %s72 = sphi 0, %s58
      %s76 = sphi 0, %s76
      %s78 = sphi 0, %s76
      %s79 = sphi 0, %s78
      %s93 = sphi 0, %s79
      %s97 = sphi 0, %s97
      %s99 = sphi 0, %s97
      %s100 = sphi 0, %s99
      %s114 = sphi 0, %s100
      %s118 = sphi 0, %s118
      %s120 = sphi 0, %s118
      %s121 = sphi 0, %s120
      %s135 = sphi 0, %s121
      %s139 = sphi 0, %s139
      %s141 = sphi 0, %s139
      %s142 = sphi 0, %s141
      %s156 = sphi 0, %s142
      %s164 = sphi 0, %s166
      %s167 = sphi 0, %s164
      %s168 = sphi 0, %s167
      %s184 = sphi 0, %s168
    $region4: #{_lambda_.3} parent=1 // loop_header_branch
      %17 = sbr.rel (%p15) target = $region8
    $region5: #{_lambda_.3} parent=1 // loop_body
      %s19 = ssub.s32 %s14, 1
      %s20 = ssub.s32 %s14, 2
      %s27 = sadd.s32 1, %s22
      %p28 = scmp.ge.s32.totalorder %s27, 2
      %s29 = scalar_select %p28, 0, %s27
      %s30 = sadd.s32 1, %s21
      %s31 = scalar_select %p28, %s30, %s21
      %p32 = scmp.ge.s32.totalorder %s31, 2
      %s33 = scalar_select %p32, 0, %s31
      %s35 = sadd.s32 %s34, 1
      %p38 = scmp.eq.s32.totalorder %s14, 3
      %p39 = scmp.ne.s32.totalorder %s34, %s36
      %p40 = scmp.eq.s32.totalorder %s14, 0
      %p41 = por %p39, %p40
      %p42 = scmp.ne.s32.totalorder %s34, %s36
      %p43 = scmp.eq.s32.totalorder %s19, 3
      %p44 = por %p42, %p43
      %p45 = scmp.ne.s32.totalorder %s36, %s37
      %p46 = scmp.eq.s32.totalorder %s19, 0
      %p47 = por %p45, %p46
      %p48 = scmp.ne.s32.totalorder %s36, %s37
      %p49 = scmp.eq.s32.totalorder %s20, 3
      %p50 = por %p48, %p49
      %p52 = scmp.ne.s32.totalorder %s37, %s51
      %p53 = scmp.eq.s32.totalorder %s20, 0
      %p54 = por %p52, %p53
      %s56 = sadd.s32 %s55, 1
      %p59 = scmp.eq.s32.totalorder %s14, 3
      %p60 = scmp.ne.s32.totalorder %s55, %s57
      %p61 = scmp.eq.s32.totalorder %s14, 0
      %p62 = por %p60, %p61
      %p63 = scmp.ne.s32.totalorder %s55, %s57
      %p64 = scmp.eq.s32.totalorder %s19, 3
      %p65 = por %p63, %p64
      %p66 = scmp.ne.s32.totalorder %s57, %s58
      %p67 = scmp.eq.s32.totalorder %s19, 0
      %p68 = por %p66, %p67
      %p69 = scmp.ne.s32.totalorder %s57, %s58
      %p70 = scmp.eq.s32.totalorder %s20, 3
      %p71 = por %p69, %p70
      %p73 = scmp.ne.s32.totalorder %s58, %s72
      %p74 = scmp.eq.s32.totalorder %s20, 0
      %p75 = por %p73, %p74
      %s77 = sadd.s32 %s76, 1
      %p80 = scmp.eq.s32.totalorder %s14, 3
      %p81 = scmp.ne.s32.totalorder %s76, %s78
      %p82 = scmp.eq.s32.totalorder %s14, 0
      %p83 = por %p81, %p82
      %p84 = scmp.ne.s32.totalorder %s76, %s78
      %p85 = scmp.eq.s32.totalorder %s19, 3
      %p86 = por %p84, %p85
      %p87 = scmp.ne.s32.totalorder %s78, %s79
      %p88 = scmp.eq.s32.totalorder %s19, 0
      %p89 = por %p87, %p88
      %p90 = scmp.ne.s32.totalorder %s78, %s79
      %p91 = scmp.eq.s32.totalorder %s20, 3
      %p92 = por %p90, %p91
      %p94 = scmp.ne.s32.totalorder %s79, %s93
      %p95 = scmp.eq.s32.totalorder %s20, 0
      %p96 = por %p94, %p95
      %s98 = sadd.s32 %s97, 1
      %p101 = scmp.eq.s32.totalorder %s14, 3
      %p102 = scmp.ne.s32.totalorder %s97, %s99
      %p103 = scmp.eq.s32.totalorder %s14, 0
      %p104 = por %p102, %p103
      %p105 = scmp.ne.s32.totalorder %s97, %s99
      %p106 = scmp.eq.s32.totalorder %s19, 3
      %p107 = por %p105, %p106
      %p108 = scmp.ne.s32.totalorder %s99, %s100
      %p109 = scmp.eq.s32.totalorder %s19, 0
      %p110 = por %p108, %p109
      %p111 = scmp.ne.s32.totalorder %s99, %s100
      %p112 = scmp.eq.s32.totalorder %s20, 3
      %p113 = por %p111, %p112
      %p115 = scmp.ne.s32.totalorder %s100, %s114
      %p116 = scmp.eq.s32.totalorder %s20, 0
      %p117 = por %p115, %p116
      %s119 = sadd.s32 %s118, 1
      %p122 = scmp.eq.s32.totalorder %s14, 3
      %p123 = scmp.ne.s32.totalorder %s118, %s120
      %p124 = scmp.eq.s32.totalorder %s14, 0
      %p125 = por %p123, %p124
      %p126 = scmp.ne.s32.totalorder %s118, %s120
      %p127 = scmp.eq.s32.totalorder %s19, 3
      %p128 = por %p126, %p127
      %p129 = scmp.ne.s32.totalorder %s120, %s121
      %p130 = scmp.eq.s32.totalorder %s19, 0
      %p131 = por %p129, %p130
      %p132 = scmp.ne.s32.totalorder %s120, %s121
      %p133 = scmp.eq.s32.totalorder %s20, 3
      %p134 = por %p132, %p133
      %p136 = scmp.ne.s32.totalorder %s121, %s135
      %p137 = scmp.eq.s32.totalorder %s20, 0
      %p138 = por %p136, %p137
      %s140 = sadd.s32 %s139, 1
      %p143 = scmp.eq.s32.totalorder %s14, 3
      %p144 = scmp.ne.s32.totalorder %s139, %s141
      %p145 = scmp.eq.s32.totalorder %s14, 0
      %p146 = por %p144, %p145
      %p147 = scmp.ne.s32.totalorder %s139, %s141
      %p148 = scmp.eq.s32.totalorder %s19, 3
      %p149 = por %p147, %p148
      %p150 = scmp.ne.s32.totalorder %s141, %s142
      %p151 = scmp.eq.s32.totalorder %s19, 0
      %p152 = por %p150, %p151
      %p153 = scmp.ne.s32.totalorder %s141, %s142
      %p154 = scmp.eq.s32.totalorder %s20, 3
      %p155 = por %p153, %p154
      %p157 = scmp.ne.s32.totalorder %s142, %s156
      %p158 = scmp.eq.s32.totalorder %s20, 0
      %p159 = por %p157, %p158
      %s160 = ssub.s32 %s21, %s33
      %s161 = ssub.s32 %s22, %s29
      %s162 = sor.u32 %s160, %s161
      %p163 = scmp.eq.s32.totalorder %s162, 0
      %s165 = sadd.s32 %s164, 1
      %s166 = scalar_select %p163, %s164, %s165
      %p169 = pneg %p163
      %p170 = scmp.eq.s32.totalorder %s14, 3
      %p171 = por %p169, %p170
      %p172 = scmp.ne.s32.totalorder %s164, %s167
      %p173 = scmp.eq.s32.totalorder %s14, 0
      %p174 = por %p172, %p173
      %p175 = scmp.ne.s32.totalorder %s164, %s167
      %p176 = scmp.eq.s32.totalorder %s19, 3
      %p177 = por %p175, %p176
      %p178 = scmp.ne.s32.totalorder %s167, %s168
      %p179 = scmp.eq.s32.totalorder %s19, 0
      %p180 = por %p178, %p179
      %p181 = scmp.ne.s32.totalorder %s167, %s168
      %p182 = scmp.eq.s32.totalorder %s20, 3
      %p183 = por %p181, %p182
      %p185 = scmp.ne.s32.totalorder %s168, %s184
      %p186 = scmp.eq.s32.totalorder %s20, 0
      %p187 = por %p185, %p186
      %p188 = scmp.le.s32.totalorder 1, %s14
      %p189 = scmp.lt.s32.totalorder %s14, 5
      %p190 = pnand %p188, %p189
      %p191 = pneg %p190
      // Predicated region
      $region9: #{_lambda_.3} parent=5 // pred_check
        _
      $region10: #{_lambda_.3} parent=5 // pred_check_branch
        %193 = sbr.rel (%p190) target = $region12
      $region11: #{_lambda_.3} parent=5 // pred_region
        %s194 = ssub.s32 %s14, 1
        // Predicated region
        $region13: #{_lambda_.3} parent=11 // pred_check
          %p195 = pneg %p47
        $region14: #{_lambda_.3} parent=11 // pred_check_branch
          %197 = sbr.rel (%p195) target = $region16
        $region15: #{_lambda_.3} parent=11 // pred_region
          _
        $region16: #{_lambda_.3} parent=11 // pred_fallthru
          _
        // Predicated region
        $region17: #{_lambda_.3} parent=11 // pred_check
          %p198 = pneg %p68
        $region18: #{_lambda_.3} parent=11 // pred_check_branch
          %200 = sbr.rel (%p198) target = $region20
        $region19: #{_lambda_.3} parent=11 // pred_region
          _
        $region20: #{_lambda_.3} parent=11 // pred_fallthru
          _
        // Predicated region
        $region21: #{_lambda_.3} parent=11 // pred_check
          %p201 = pneg %p89
        $region22: #{_lambda_.3} parent=11 // pred_check_branch
          %203 = sbr.rel (%p201) target = $region24
        $region23: #{_lambda_.3} parent=11 // pred_region
          _
        $region24: #{_lambda_.3} parent=11 // pred_fallthru
          _
        // Predicated region
        $region25: #{_lambda_.3} parent=11 // pred_check
          %p204 = pneg %p110
        $region26: #{_lambda_.3} parent=11 // pred_check_branch
          %206 = sbr.rel (%p204) target = $region28
        $region27: #{_lambda_.3} parent=11 // pred_region
          _
        $region28: #{_lambda_.3} parent=11 // pred_fallthru
          _
        // Predicated region
        $region29: #{_lambda_.3} parent=11 // pred_check
          %p207 = pneg %p131
        $region30: #{_lambda_.3} parent=11 // pred_check_branch
          %209 = sbr.rel (%p207) target = $region32
        $region31: #{_lambda_.3} parent=11 // pred_region
          _
        $region32: #{_lambda_.3} parent=11 // pred_fallthru
          _
        // Predicated region
        $region33: #{_lambda_.3} parent=11 // pred_check
          %p210 = pneg %p152
        $region34: #{_lambda_.3} parent=11 // pred_check_branch
          %212 = sbr.rel (%p210) target = $region36
        $region35: #{_lambda_.3} parent=11 // pred_region
          _
        $region36: #{_lambda_.3} parent=11 // pred_fallthru
          _
      $region12: #{_lambda_.3} parent=5 // pred_fallthru
        _
      %p213 = scmp.lt.s32.totalorder %s14, 4
      // Predicated region
      $region37: #{_lambda_.3} parent=5 // pred_check
        %p214 = pneg %p213
      $region38: #{_lambda_.3} parent=5 // pred_check_branch
        %216 = sbr.rel (%p214) target = $region40
      $region39: #{_lambda_.3} parent=5 // pred_region
        _
      $region40: #{_lambda_.3} parent=5 // pred_fallthru
        _
      %p217 = scmp.le.s32.totalorder 1, %s14
      %p218 = scmp.lt.s32.totalorder %s14, 5
      %p219 = pnand %p217, %p218
      %p220 = pneg %p219
      // Predicated region
      $region41: #{_lambda_.3} parent=5 // pred_check
        _
      $region42: #{_lambda_.3} parent=5 // pred_check_branch
        %222 = sbr.rel (%p219) target = $region44
      $region43: #{_lambda_.3} parent=5 // pred_region
        %s223 = ssub.s32 %s14, 1
        %p224 = pneg %p47
        %p225 = pneg %p44
        %p226 = pneg %p68
        %p227 = pneg %p65
        %p228 = pneg %p89
        %p229 = pneg %p86
        %p230 = pneg %p110
        %p231 = pneg %p107
        %p232 = pneg %p131
        %p233 = pneg %p128
        %p234 = pneg %p152
        %p235 = pneg %p149
        %p236 = pneg %p180
        %p237 = pneg %p177
        %s238 = sand.u32 %s167, 1
        %s239 = sand.u32 %s167, 1
        %s240 = smul.addr %s239, 16
        %s241 = scalar_lea.vmem [#allocation5], %s240
        %s242 = smul.u32 %s24, 128
        %243 = vst [vmem:[#allocation2] sm:$0xff] 0.0
        %244 = vst [vmem:[#allocation2 + $0x28] sm:$0xff] 0.0
        %245 = vst [vmem:[#allocation2 + $0x20] sm:$0xff] 0.0
        %246 = vst [vmem:[#allocation2 + $0x48] sm:$0xff] 0.0
        %s247 = sshra.s32 %s242, 7
        %s248 = sand.u32 %s242, 127
        %s249 = smul.u32 %s23, 8
        %s250 = sadd.s32 %s247, %s249
        %s251 = smul.addr %s250, 8
        %s252 = scalar_lea.vmem %s0, %s251
        %s253 = scalar_lea.vmem [#allocation2], 8
        %p255 = scmp.lt.u32.totalorder 24, 8
        %p256 = pneg %p255
        // Predicated region
        $region45: #{_lambda_.3} parent=43 // pred_check
          _
        $region46: #{_lambda_.3} parent=43 // pred_check_branch
          %258 = sbr.rel (%p255) target = $region48
        $region47: #{_lambda_.3} parent=43 // pred_region
          %s275 = sand.u32 24, 7
          %p276 = scmp.eq.s32.totalorder %s275, 0
          // Predicated region
          $region60: #{_lambda_.3} parent=47 // pred_check
            %p277 = pneg %p276
          $region61: #{_lambda_.3} parent=47 // pred_check_branch
            %279 = sbr.rel (%p277) target = $region63
          $region62: #{_lambda_.3} parent=47 // pred_region
            loop: start=0, step=1, limit=1
            $region64: #{_lambda_.3} parent=62 // loop_pre_header
              _
            $region65: #{_lambda_.3} parent=62 // loop_header
              %s281 = sphi 0, %s285
              %p282 = scmp.ge.s32.totalorder %s281, 1
              %s286 = sphi %s252, %s252
              %s287 = sphi %s253, %s253
            $region66: #{_lambda_.3} parent=62 // loop_header_branch
              %284 = sbr.rel (%p282) target = $region70
            $region67: #{_lambda_.3} parent=62 // loop_body
              %v288 = vld [vmem:[%s286] sm:$0xff]
              %289 = vst [vmem:[%s287] sm:$0xff] %v288
              %v290 = vld [vmem:[%s286 + $0x8] sm:$0xff]
              %291 = vst [vmem:[%s287 + $0x8] sm:$0xff] %v290
              %v292 = vld [vmem:[%s286 + $0x10] sm:$0xff]
              %293 = vst [vmem:[%s287 + $0x10] sm:$0xff] %v292
              %v294 = vld [vmem:[%s286 + $0x20] sm:$0xff]
              %295 = vst [vmem:[%s287 + $0x28] sm:$0xff] %v294
              %v296 = vld [vmem:[%s286 + $0x28] sm:$0xff]
              %297 = vst [vmem:[%s287 + $0x30] sm:$0xff] %v296
              %v298 = vld [vmem:[%s286 + $0x30] sm:$0xff]
              %299 = vst [vmem:[%s287 + $0x38] sm:$0xff] %v298
            $region68: #{_lambda_.3} parent=62 // loop_footer
              %s285 = sadd.s32 1, %s281
            $region69: #{_lambda_.3} parent=62 // loop_footer_branch
              %280 = sbr.rel target = $region65
            $region70: #{_lambda_.3} parent=62 // loop_exit
              _
          $region63: #{_lambda_.3} parent=47 // pred_fallthru
            _
          %p300 = pneg %p276
          // Predicated region
          $region71: #{_lambda_.3} parent=47 // pred_check
            _
          $region72: #{_lambda_.3} parent=47 // pred_check_branch
            %302 = sbr.rel (%p276) target = $region74
          $region73: #{_lambda_.3} parent=47 // pred_region
            %s303 = sand.u32 24, 7
          $region74: #{_lambda_.3} parent=47 // pred_fallthru
            _
        $region48: #{_lambda_.3} parent=43 // pred_fallthru
          _
        // Predicated region
        $region49: #{_lambda_.3} parent=43 // pred_check
          %p259 = pneg %p255
        $region50: #{_lambda_.3} parent=43 // pred_check_branch
          %261 = sbr.rel (%p259) target = $region52
        $region51: #{_lambda_.3} parent=43 // pred_region
          %s262 = sshllo.u32 0, 24
          loop: start=0, step=1, limit=1
          $region53: #{_lambda_.3} parent=51 // loop_pre_header
            _
          $region54: #{_lambda_.3} parent=51 // loop_header
            %s264 = sphi 0, %s268
            %p265 = scmp.ge.s32.totalorder %s264, 1
            %s269 = sphi %s252, %s252
            %s270 = sphi %s253, %s253
          $region55: #{_lambda_.3} parent=51 // loop_header_branch
            %267 = sbr.rel (%p265) target = $region59
          $region56: #{_lambda_.3} parent=51 // loop_body
            %v271 = vld [vmem:[%s269] sm:%s262]
            %272 = vst [vmem:[%s270] sm:%s262] %v271
            %v273 = vld [vmem:[%s269 + $0x20] sm:%s262]
            %274 = vst [vmem:[%s270 + $0x28] sm:%s262] %v273
          $region57: #{_lambda_.3} parent=51 // loop_footer
            %s268 = sadd.s32 1, %s264
          $region58: #{_lambda_.3} parent=51 // loop_footer_branch
            %263 = sbr.rel target = $region54
          $region59: #{_lambda_.3} parent=51 // loop_exit
            _
        $region52: #{_lambda_.3} parent=43 // pred_fallthru
          _
        // Predicated region
        $region75: #{_lambda_.3} parent=43 // pred_check
          _
        $region76: #{_lambda_.3} parent=43 // pred_check_branch
          %306 = sbr.rel (0) target = $region78
        $region77: #{_lambda_.3} parent=43 // pred_region
          %307 = vsyncadd [#allocation4], 768
        $region78: #{_lambda_.3} parent=43 // pred_fallthru
          _
        %s308 = smul.u32 %s23, 4
        %s309 = sadd.s32 %s247, %s308
        %s310 = scalar_lea.vmem %s1, %s309
        %s311 = scalar_lea.sflag [#allocation4], 1
        %p313 = scmp.lt.u32.totalorder 3, 8
        %p314 = pneg %p313
        // Predicated region
        $region79: #{_lambda_.3} parent=43 // pred_check
          _
        $region80: #{_lambda_.3} parent=43 // pred_check_branch
          %316 = sbr.rel (%p313) target = $region82
        $region81: #{_lambda_.3} parent=43 // pred_region
          %s331 = sand.u32 3, 7
          %p332 = scmp.eq.s32.totalorder %s331, 0
          %p333 = pneg %p332
          // Predicated region
          $region94: #{_lambda_.3} parent=81 // pred_check
            _
          $region95: #{_lambda_.3} parent=81 // pred_check_branch
            %335 = sbr.rel (%p332) target = $region97
          $region96: #{_lambda_.3} parent=81 // pred_region
            %s336 = sand.u32 3, 7
            %s337 = ssub.s32 3, %s336
            %s338 = scalar_lea.vmem %s310, %s337
            %s339 = ssub.s32 3, %s336
            %s340 = scalar_lea.vmem [#allocation3], %s339
            %s341 = sshllo.u32 0, %s336
            loop: start=0, step=1, limit=1
            $region98: #{_lambda_.3} parent=96 // loop_pre_header
              _
            $region99: #{_lambda_.3} parent=96 // loop_header
              %s343 = sphi 0, %s347
              %p344 = scmp.ge.s32.totalorder %s343, 1
              %s348 = sphi %s338, %s338
              %s349 = sphi %s340, %s340
            $region100: #{_lambda_.3} parent=96 // loop_header_branch
              %346 = sbr.rel (%p344) target = $region104
            $region101: #{_lambda_.3} parent=96 // loop_body
              %v350 = vld [vmem:[%s348] sm:%s341]
              %351 = vst [vmem:[%s349] sm:%s341] %v350
            $region102: #{_lambda_.3} parent=96 // loop_footer
              %s347 = sadd.s32 1, %s343
            $region103: #{_lambda_.3} parent=96 // loop_footer_branch
              %342 = sbr.rel target = $region99
            $region104: #{_lambda_.3} parent=96 // loop_exit
              _
          $region97: #{_lambda_.3} parent=81 // pred_fallthru
            _
        $region82: #{_lambda_.3} parent=43 // pred_fallthru
          _
        // Predicated region
        $region83: #{_lambda_.3} parent=43 // pred_check
          %p317 = pneg %p313
        $region84: #{_lambda_.3} parent=43 // pred_check_branch
          %319 = sbr.rel (%p317) target = $region86
        $region85: #{_lambda_.3} parent=43 // pred_region
          %s320 = sshllo.u32 0, 3
          loop: start=0, step=1, limit=1
          $region87: #{_lambda_.3} parent=85 // loop_pre_header
            _
          $region88: #{_lambda_.3} parent=85 // loop_header
            %s322 = sphi 0, %s326
            %p323 = scmp.ge.s32.totalorder %s322, 1
            %s327 = sphi %s310, %s310
            %s328 = sphi [#allocation3], [#allocation3]
          $region89: #{_lambda_.3} parent=85 // loop_header_branch
            %325 = sbr.rel (%p323) target = $region93
          $region90: #{_lambda_.3} parent=85 // loop_body
            %v329 = vld [vmem:[%s327] sm:%s320]
            %330 = vst [vmem:[%s328] sm:%s320] %v329
          $region91: #{_lambda_.3} parent=85 // loop_footer
            %s326 = sadd.s32 1, %s322
          $region92: #{_lambda_.3} parent=85 // loop_footer_branch
            %321 = sbr.rel target = $region88
          $region93: #{_lambda_.3} parent=85 // loop_exit
            _
        $region86: #{_lambda_.3} parent=43 // pred_fallthru
          _
        // Predicated region
        $region105: #{_lambda_.3} parent=43 // pred_check
          _
        $region106: #{_lambda_.3} parent=43 // pred_check_branch
          %354 = sbr.rel (0) target = $region108
        $region107: #{_lambda_.3} parent=43 // pred_region
          %355 = vsyncadd %s311, 48
        $region108: #{_lambda_.3} parent=43 // pred_fallthru
          _
        %s356 = smul.u32 8, 2
        %s357 = smul.u32 %s356, 3
        %s358 = sshll.u32 %s357, 4
        %359 = dma.done [#allocation4], %s358
        %s360 = smul.u32 1, 3
        %s361 = sshll.u32 %s360, 4
        %362 = dma.done %s311, %s361
        %v363 = vld [vmem:[#allocation3] sm:$0x7]
        %v364 = vld [vmem:[#allocation2 + $0x8] sm:$0xff]
        %v365 = vld [vmem:[#allocation2 + $0x10] sm:$0xff]
        %v366 = vld [vmem:[#allocation2 + $0x18] sm:$0xff]
        %v367 = vld [vmem:[#allocation2 + $0x30] sm:$0xff]
        %v368 = vld [vmem:[#allocation2 + $0x38] sm:$0xff]
        %v369 = vld [vmem:[#allocation2 + $0x40] sm:$0xff]
        %v370 = vld [vmem:[#allocation2] sm:$0xff]
        %v371 = vld [vmem:[#allocation2 + $0x28] sm:$0xff]
        %v372 = vld [vmem:[#allocation2 + $0x8] sm:$0xff]
        %v373 = vld [vmem:[#allocation2 + $0x10] sm:$0xff]
        %v374 = vld [vmem:[#allocation2 + $0x18] sm:$0xff]
        %v375 = vld [vmem:[#allocation2 + $0x20] sm:$0xff]
        %v376 = vld [vmem:[#allocation2 + $0x30] sm:$0xff]
        %v377 = vld [vmem:[#allocation2 + $0x38] sm:$0xff]
        %v378 = vld [vmem:[#allocation2 + $0x40] sm:$0xff]
        %v379 = vld [vmem:[#allocation2 + $0x48] sm:$0xff]
        %v380 = vld [vmem:[%s2] sm:$0xff]
        %v381 = vld [vmem:[%s2 + $0x8] sm:$0xff]
        %s382 = scalar_lea.vmem %s2, 16
        %v383 = vld [vmem:[%s382] sm:$0xff]
        %v384 = vld [vmem:[%s382 + $0x8] sm:$0xff]
        %vm385 = vcmask 130048
        %v387 = vsel %vm385, %v383, 0
        %v390 = vsel %vm385, %v384, 0
        %392 = vmatprep.subr.mxu0 %v365
        %393 = vmatpush1.msra.mxu0 %v364
        %394 = vmatprep.subr.mxu0 %v368
        %395 = vmatpush1.msra.mxu0 %v367
        %396 = vmatprep.subr.mxu0 0.0
        %397 = vmatpush1.msra.mxu0 0.0
        %398 = vmatprep.subr.mxu0 0.0
        %399 = vmatpush1.msra.mxu0 0.0
        %400 = vmatprep.subr.mxu0 0.0
        %401 = vmatpush1.msra.mxu0 0.0
        %402 = vmatprep.subr.mxu0 0.0
        %403 = vmatpush1.msra.mxu0 0.0
        %404 = vmatprep.subr.mxu0 0.0
        %405 = vmatpush1.msra.mxu0 0.0
        %406 = vmatprep.subr.mxu0 0.0
        %407 = vmatpush1.msra.mxu0 0.0
        %408 = vmatprep.subr.mxu0 0.0
        %409 = vmatpush1.msra.mxu0 0.0
        %410 = vmatprep.subr.mxu0 0.0
        %411 = vmatpush1.msra.mxu0 0.0
        %412 = vmatprep.subr.mxu0 0.0
        %413 = vmatpush1.msra.mxu0 0.0
        %414 = vmatprep.subr.mxu0 0.0
        %415 = vmatpush1.msra.mxu0 0.0
        %416 = vmatprep.subr.mxu0 0.0
        %417 = vmatpush1.msra.mxu0 0.0
        %418 = vmatprep.subr.mxu0 0.0
        %419 = vmatpush1.msra.mxu0 0.0
        %420 = vmatprep.subr.mxu0 0.0
        %421 = vmatpush1.msra.mxu0 0.0
        %422 = vmatprep.subr.mxu0 0.0
        %423 = vmatpush1.msra.mxu0 0.0
        %424 = vmatprep.subr.mxu0 0.0
        %425 = vmatpush1.msra.mxu0 0.0
        %426 = vmatprep.subr.mxu0 0.0
        %427 = vmatpush1.msra.mxu0 0.0
        %428 = vmatprep.subr.mxu0 0.0
        %429 = vmatpush1.msra.mxu0 0.0
        %430 = vmatprep.subr.mxu0 0.0
        %431 = vmatpush1.msra.mxu0 0.0
        %432 = vmatprep.subr.mxu0 0.0
        %433 = vmatpush1.msra.mxu0 0.0
        %434 = vmatprep.subr.mxu0 0.0
        %435 = vmatpush1.msra.mxu0 0.0
        %436 = vmatprep.subr.mxu0 0.0
        %437 = vmatpush1.msra.mxu0 0.0
        %438 = vmatprep.subr.mxu0 0.0
        %439 = vmatpush1.msra.mxu0 0.0
        %440 = vmatprep.subr.mxu0 0.0
        %441 = vmatpush1.msra.mxu0 0.0
        %442 = vmatprep.subr.mxu0 0.0
        %443 = vmatpush1.msra.mxu0 0.0
        %444 = vmatprep.subr.mxu0 0.0
        %445 = vmatpush1.msra.mxu0 0.0
        %446 = vmatprep.subr.mxu0 0.0
        %447 = vmatpush1.msra.mxu0 0.0
        %448 = vmatprep.subr.mxu0 0.0
        %449 = vmatpush1.msra.mxu0 0.0
        %450 = vmatprep.subr.mxu0 0.0
        %451 = vmatpush1.msra.mxu0 0.0
        %452 = vmatprep.subr.mxu0 0.0
        %453 = vmatpush1.msra.mxu0 0.0
        %454 = vmatprep.subr.mxu0 0.0
        %455 = vmatpush1.msra.mxu0 0.0
        %456 = vmatprep.mubr.f32.mxu0 0.0
        %457 = vmatmul.mubr.f32.gmra.mrb[0].mxu0 %v387
        %v458 = vpop.f32.mrb[0].mxu0
        %v459 = vadd.f32 0.0, %v458
        %v460 = vpop.f32.mrb[0].mxu0
        %v461 = vadd.f32 0.0, %v460
        %462 = vmatprep.mubr.f32.mxu0 0.0
        %463 = vmatmul.mubr.f32.gmra.mrb[0].mxu0 %v390
        %v464 = vpop.f32.mrb[0].mxu0
        %v465 = vadd.f32 0.0, %v464
        %v466 = vpop.f32.mrb[0].mxu0
        %v467 = vadd.f32 0.0, %v466
        %468 = vdwg.mxu0
        %469 = vmatprep.subr.mxu0 0.0
        %470 = vmatpush1.msra.mxu0 %v366
        %471 = vmatprep.subr.mxu0 0.0
        %472 = vmatpush1.msra.mxu0 %v369
        %473 = vmatprep.subr.mxu0 0.0
        %474 = vmatpush1.msra.mxu0 0.0
        %475 = vmatprep.subr.mxu0 0.0
        %476 = vmatpush1.msra.mxu0 0.0
        %477 = vmatprep.subr.mxu0 0.0
        %478 = vmatpush1.msra.mxu0 0.0
        %479 = vmatprep.subr.mxu0 0.0
        %480 = vmatpush1.msra.mxu0 0.0
        %481 = vmatprep.subr.mxu0 0.0
        %482 = vmatpush1.msra.mxu0 0.0
        %483 = vmatprep.subr.mxu0 0.0
        %484 = vmatpush1.msra.mxu0 0.0
        %485 = vmatprep.subr.mxu0 0.0
        %486 = vmatpush1.msra.mxu0 0.0
        %487 = vmatprep.subr.mxu0 0.0
        %488 = vmatpush1.msra.mxu0 0.0
        %489 = vmatprep.subr.mxu0 0.0
        %490 = vmatpush1.msra.mxu0 0.0
        %491 = vmatprep.subr.mxu0 0.0
        %492 = vmatpush1.msra.mxu0 0.0
        %493 = vmatprep.subr.mxu0 0.0
        %494 = vmatpush1.msra.mxu0 0.0
        %495 = vmatprep.subr.mxu0 0.0
        %496 = vmatpush1.msra.mxu0 0.0
        %497 = vmatprep.subr.mxu0 0.0
        %498 = vmatpush1.msra.mxu0 0.0
        %499 = vmatprep.subr.mxu0 0.0
        %500 = vmatpush1.msra.mxu0 0.0
        %501 = vmatprep.subr.mxu0 0.0
        %502 = vmatpush1.msra.mxu0 0.0
        %503 = vmatprep.subr.mxu0 0.0
        %504 = vmatpush1.msra.mxu0 0.0
        %505 = vmatprep.subr.mxu0 0.0
        %506 = vmatpush1.msra.mxu0 0.0
        %507 = vmatprep.subr.mxu0 0.0
        %508 = vmatpush1.msra.mxu0 0.0
        %509 = vmatprep.subr.mxu0 0.0
        %510 = vmatpush1.msra.mxu0 0.0
        %511 = vmatprep.subr.mxu0 0.0
        %512 = vmatpush1.msra.mxu0 0.0
        %513 = vmatprep.subr.mxu0 0.0
        %514 = vmatpush1.msra.mxu0 0.0
        %515 = vmatprep.subr.mxu0 0.0
        %516 = vmatpush1.msra.mxu0 0.0
        %517 = vmatprep.subr.mxu0 0.0
        %518 = vmatpush1.msra.mxu0 0.0
        %519 = vmatprep.subr.mxu0 0.0
        %520 = vmatpush1.msra.mxu0 0.0
        %521 = vmatprep.subr.mxu0 0.0
        %522 = vmatpush1.msra.mxu0 0.0
        %523 = vmatprep.subr.mxu0 0.0
        %524 = vmatpush1.msra.mxu0 0.0
        %525 = vmatprep.subr.mxu0 0.0
        %526 = vmatpush1.msra.mxu0 0.0
        %527 = vmatprep.subr.mxu0 0.0
        %528 = vmatpush1.msra.mxu0 0.0
        %529 = vmatprep.subr.mxu0 0.0
        %530 = vmatpush1.msra.mxu0 0.0
        %531 = vmatprep.subr.mxu0 0.0
        %532 = vmatpush1.msra.mxu0 0.0
        %533 = vmatprep.mubr.f32.mxu0 0.0
        %534 = vmatmul.mubr.f32.gmra.mrb[0].mxu0 %v387
        %v535 = vpop.f32.mrb[0].mxu0
        %v536 = vadd.f32 0.0, %v535
        %v537 = vpop.f32.mrb[0].mxu0
        %538 = vmatprep.mubr.f32.mxu0 0.0
        %539 = vmatmul.mubr.f32.gmra.mrb[0].mxu0 %v390
        %v540 = vpop.f32.mrb[0].mxu0
        %v541 = vadd.f32 0.0, %v540
        %v542 = vpop.f32.mrb[0].mxu0
        %543 = vdwg.mxu0
        %552 = vrot.lane.b32.xlu0 %v370, 1
        %v553 = vpop.permute.xlu0 %552
        %554 = vrot.lane.b32.xlu0 %v364, 1
        %v555 = vpop.permute.xlu0 %554
        %556 = vrot.lane.b32.xlu0 %v365, 1
        %v557 = vpop.permute.xlu0 %556
        %558 = vrot.lane.b32.xlu0 %v366, 1
        %v559 = vpop.permute.xlu0 %558
        %560 = vrot.lane.b32.xlu0 %v371, 1
        %v561 = vpop.permute.xlu0 %560
        %562 = vrot.lane.b32.xlu0 %v367, 1
        %v563 = vpop.permute.xlu0 %562
        %564 = vrot.lane.b32.xlu0 %v368, 1
        %v565 = vpop.permute.xlu0 %564
        %566 = vrot.lane.b32.xlu0 %v369, 1
        %v567 = vpop.permute.xlu0 %566
        %vm568 = vcmask 7168
        %v569 = vsel %vm568, %v553, %v555
        %v570 = vsel %vm568, %v555, %v557
        %v571 = vsel %vm568, %v557, %v559
        %v572 = vsel %vm568, %v561, %v563
        %v573 = vsel %vm568, %v563, %v565
        %v574 = vsel %vm568, %v565, %v567
        %v582 = vsel %vm385, %v380, 0
        %v585 = vsel %vm385, %v381, 0
        %587 = vmatprep.subr.mxu0 %v570
        %588 = vmatpush1.msra.mxu0 %v569
        %589 = vmatprep.subr.mxu0 %v573
        %590 = vmatpush1.msra.mxu0 %v572
        %591 = vmatprep.subr.mxu0 0.0
        %592 = vmatpush1.msra.mxu0 0.0
        %593 = vmatprep.subr.mxu0 0.0
        %594 = vmatpush1.msra.mxu0 0.0
        %595 = vmatprep.subr.mxu0 0.0
        %596 = vmatpush1.msra.mxu0 0.0
        %597 = vmatprep.subr.mxu0 0.0
        %598 = vmatpush1.msra.mxu0 0.0
        %599 = vmatprep.subr.mxu0 0.0
        %600 = vmatpush1.msra.mxu0 0.0
        %601 = vmatprep.subr.mxu0 0.0
        %602 = vmatpush1.msra.mxu0 0.0
        %603 = vmatprep.subr.mxu0 0.0
        %604 = vmatpush1.msra.mxu0 0.0
        %605 = vmatprep.subr.mxu0 0.0
        %606 = vmatpush1.msra.mxu0 0.0
        %607 = vmatprep.subr.mxu0 0.0
        %608 = vmatpush1.msra.mxu0 0.0
        %609 = vmatprep.subr.mxu0 0.0
        %610 = vmatpush1.msra.mxu0 0.0
        %611 = vmatprep.subr.mxu0 0.0
        %612 = vmatpush1.msra.mxu0 0.0
        %613 = vmatprep.subr.mxu0 0.0
        %614 = vmatpush1.msra.mxu0 0.0
        %615 = vmatprep.subr.mxu0 0.0
        %616 = vmatpush1.msra.mxu0 0.0
        %617 = vmatprep.subr.mxu0 0.0
        %618 = vmatpush1.msra.mxu0 0.0
        %619 = vmatprep.subr.mxu0 0.0
        %620 = vmatpush1.msra.mxu0 0.0
        %621 = vmatprep.subr.mxu0 0.0
        %622 = vmatpush1.msra.mxu0 0.0
        %623 = vmatprep.subr.mxu0 0.0
        %624 = vmatpush1.msra.mxu0 0.0
        %625 = vmatprep.subr.mxu0 0.0
        %626 = vmatpush1.msra.mxu0 0.0
        %627 = vmatprep.subr.mxu0 0.0
        %628 = vmatpush1.msra.mxu0 0.0
        %629 = vmatprep.subr.mxu0 0.0
        %630 = vmatpush1.msra.mxu0 0.0
        %631 = vmatprep.subr.mxu0 0.0
        %632 = vmatpush1.msra.mxu0 0.0
        %633 = vmatprep.subr.mxu0 0.0
        %634 = vmatpush1.msra.mxu0 0.0
        %635 = vmatprep.subr.mxu0 0.0
        %636 = vmatpush1.msra.mxu0 0.0
        %637 = vmatprep.subr.mxu0 0.0
        %638 = vmatpush1.msra.mxu0 0.0
        %639 = vmatprep.subr.mxu0 0.0
        %640 = vmatpush1.msra.mxu0 0.0
        %641 = vmatprep.subr.mxu0 0.0
        %642 = vmatpush1.msra.mxu0 0.0
        %643 = vmatprep.subr.mxu0 0.0
        %644 = vmatpush1.msra.mxu0 0.0
        %645 = vmatprep.subr.mxu0 0.0
        %646 = vmatpush1.msra.mxu0 0.0
        %647 = vmatprep.subr.mxu0 0.0
        %648 = vmatpush1.msra.mxu0 0.0
        %649 = vmatprep.subr.mxu0 0.0
        %650 = vmatpush1.msra.mxu0 0.0
        %651 = vmatprep.mubr.f32.mxu0 0.0
        %652 = vmatmul.mubr.f32.gmra.mrb[0].mxu0 %v582
        %v653 = vpop.f32.mrb[0].mxu0
        %v654 = vadd.f32 %v459, %v653
        %v655 = vpop.f32.mrb[0].mxu0
        %v656 = vadd.f32 %v461, %v655
        %657 = vmatprep.mubr.f32.mxu0 0.0
        %658 = vmatmul.mubr.f32.gmra.mrb[0].mxu0 %v585
        %v659 = vpop.f32.mrb[0].mxu0
        %v660 = vadd.f32 %v465, %v659
        %v661 = vpop.f32.mrb[0].mxu0
        %v662 = vadd.f32 %v467, %v661
        %663 = vdwg.mxu0
        %664 = vmatprep.subr.mxu0 0.0
        %665 = vmatpush1.msra.mxu0 %v571
        %666 = vmatprep.subr.mxu0 0.0
        %667 = vmatpush1.msra.mxu0 %v574
        %668 = vmatprep.subr.mxu0 0.0
        %669 = vmatpush1.msra.mxu0 0.0
        %670 = vmatprep.subr.mxu0 0.0
        %671 = vmatpush1.msra.mxu0 0.0
        %672 = vmatprep.subr.mxu0 0.0
        %673 = vmatpush1.msra.mxu0 0.0
        %674 = vmatprep.subr.mxu0 0.0
        %675 = vmatpush1.msra.mxu0 0.0
        %676 = vmatprep.subr.mxu0 0.0
        %677 = vmatpush1.msra.mxu0 0.0
        %678 = vmatprep.subr.mxu0 0.0
        %679 = vmatpush1.msra.mxu0 0.0
        %680 = vmatprep.subr.mxu0 0.0
        %681 = vmatpush1.msra.mxu0 0.0
        %682 = vmatprep.subr.mxu0 0.0
        %683 = vmatpush1.msra.mxu0 0.0
        %684 = vmatprep.subr.mxu0 0.0
        %685 = vmatpush1.msra.mxu0 0.0
        %686 = vmatprep.subr.mxu0 0.0
        %687 = vmatpush1.msra.mxu0 0.0
        %688 = vmatprep.subr.mxu0 0.0
        %689 = vmatpush1.msra.mxu0 0.0
        %690 = vmatprep.subr.mxu0 0.0
        %691 = vmatpush1.msra.mxu0 0.0
        %692 = vmatprep.subr.mxu0 0.0
        %693 = vmatpush1.msra.mxu0 0.0
        %694 = vmatprep.subr.mxu0 0.0
        %695 = vmatpush1.msra.mxu0 0.0
        %696 = vmatprep.subr.mxu0 0.0
        %697 = vmatpush1.msra.mxu0 0.0
        %698 = vmatprep.subr.mxu0 0.0
        %699 = vmatpush1.msra.mxu0 0.0
        %700 = vmatprep.subr.mxu0 0.0
        %701 = vmatpush1.msra.mxu0 0.0
        %702 = vmatprep.subr.mxu0 0.0
        %703 = vmatpush1.msra.mxu0 0.0
        %704 = vmatprep.subr.mxu0 0.0
        %705 = vmatpush1.msra.mxu0 0.0
        %706 = vmatprep.subr.mxu0 0.0
        %707 = vmatpush1.msra.mxu0 0.0
        %708 = vmatprep.subr.mxu0 0.0
        %709 = vmatpush1.msra.mxu0 0.0
        %710 = vmatprep.subr.mxu0 0.0
        %711 = vmatpush1.msra.mxu0 0.0
        %712 = vmatprep.subr.mxu0 0.0
        %713 = vmatpush1.msra.mxu0 0.0
        %714 = vmatprep.subr.mxu0 0.0
        %715 = vmatpush1.msra.mxu0 0.0
        %716 = vmatprep.subr.mxu0 0.0
        %717 = vmatpush1.msra.mxu0 0.0
        %718 = vmatprep.subr.mxu0 0.0
        %719 = vmatpush1.msra.mxu0 0.0
        %720 = vmatprep.subr.mxu0 0.0
        %721 = vmatpush1.msra.mxu0 0.0
        %722 = vmatprep.subr.mxu0 0.0
        %723 = vmatpush1.msra.mxu0 0.0
        %724 = vmatprep.subr.mxu0 0.0
        %725 = vmatpush1.msra.mxu0 0.0
        %726 = vmatprep.subr.mxu0 0.0
        %727 = vmatpush1.msra.mxu0 0.0
        %728 = vmatprep.mubr.f32.mxu0 0.0
        %729 = vmatmul.mubr.f32.gmra.mrb[0].mxu0 %v582
        %v730 = vpop.f32.mrb[0].mxu0
        %v731 = vadd.f32 %v536, %v730
        %v732 = vpop.f32.mrb[0].mxu0
        %733 = vmatprep.mubr.f32.mxu0 0.0
        %734 = vmatmul.mubr.f32.gmra.mrb[0].mxu0 %v585
        %v735 = vpop.f32.mrb[0].mxu0
        %v736 = vadd.f32 %v541, %v735
        %v737 = vpop.f32.mrb[0].mxu0
        %738 = vdwg.mxu0
        %s739 = scalar_lea.vmem %s2, 32
        %v740 = vld [vmem:[%s739] sm:$0xff]
        %v741 = vld [vmem:[%s739 + $0x8] sm:$0xff]
        %750 = vrot.lane.b32.xlu0 %v372, 127
        %v751 = vpop.permute.xlu0 %750
        %752 = vrot.lane.b32.xlu0 %v373, 127
        %v753 = vpop.permute.xlu0 %752
        %754 = vrot.lane.b32.xlu0 %v374, 127
        %v755 = vpop.permute.xlu0 %754
        %756 = vrot.lane.b32.xlu0 %v375, 127
        %v757 = vpop.permute.xlu0 %756
        %758 = vrot.lane.b32.xlu0 %v376, 127
        %v759 = vpop.permute.xlu0 %758
        %760 = vrot.lane.b32.xlu0 %v377, 127
        %v761 = vpop.permute.xlu0 %760
        %762 = vrot.lane.b32.xlu0 %v378, 127
        %v763 = vpop.permute.xlu0 %762
        %764 = vrot.lane.b32.xlu0 %v379, 127
        %v765 = vpop.permute.xlu0 %764
        %vm766 = vcmask 1039360
        %v767 = vsel %vm766, %v751, %v753
        %v768 = vsel %vm766, %v753, %v755
        %v769 = vsel %vm766, %v755, %v757
        %v770 = vsel %vm766, %v759, %v761
        %v771 = vsel %vm766, %v761, %v763
        %v772 = vsel %vm766, %v763, %v765
        %v780 = vsel %vm385, %v740, 0
        %v783 = vsel %vm385, %v741, 0
        %785 = vmatprep.subr.mxu0 %v768
        %786 = vmatpush1.msra.mxu0 %v767
        %787 = vmatprep.subr.mxu0 %v771
        %788 = vmatpush1.msra.mxu0 %v770
        %789 = vmatprep.subr.mxu0 0.0
        %790 = vmatpush1.msra.mxu0 0.0
        %791 = vmatprep.subr.mxu0 0.0
        %792 = vmatpush1.msra.mxu0 0.0
        %793 = vmatprep.subr.mxu0 0.0
        %794 = vmatpush1.msra.mxu0 0.0
        %795 = vmatprep.subr.mxu0 0.0
        %796 = vmatpush1.msra.mxu0 0.0
        %797 = vmatprep.subr.mxu0 0.0
        %798 = vmatpush1.msra.mxu0 0.0
        %799 = vmatprep.subr.mxu0 0.0
        %800 = vmatpush1.msra.mxu0 0.0
        %801 = vmatprep.subr.mxu0 0.0
        %802 = vmatpush1.msra.mxu0 0.0
        %803 = vmatprep.subr.mxu0 0.0
        %804 = vmatpush1.msra.mxu0 0.0
        %805 = vmatprep.subr.mxu0 0.0
        %806 = vmatpush1.msra.mxu0 0.0
        %807 = vmatprep.subr.mxu0 0.0
        %808 = vmatpush1.msra.mxu0 0.0
        %809 = vmatprep.subr.mxu0 0.0
        %810 = vmatpush1.msra.mxu0 0.0
        %811 = vmatprep.subr.mxu0 0.0
        %812 = vmatpush1.msra.mxu0 0.0
        %813 = vmatprep.subr.mxu0 0.0
        %814 = vmatpush1.msra.mxu0 0.0
        %815 = vmatprep.subr.mxu0 0.0
        %816 = vmatpush1.msra.mxu0 0.0
        %817 = vmatprep.subr.mxu0 0.0
        %818 = vmatpush1.msra.mxu0 0.0
        %819 = vmatprep.subr.mxu0 0.0
        %820 = vmatpush1.msra.mxu0 0.0
        %821 = vmatprep.subr.mxu0 0.0
        %822 = vmatpush1.msra.mxu0 0.0
        %823 = vmatprep.subr.mxu0 0.0
        %824 = vmatpush1.msra.mxu0 0.0
        %825 = vmatprep.subr.mxu0 0.0
        %826 = vmatpush1.msra.mxu0 0.0
        %827 = vmatprep.subr.mxu0 0.0
        %828 = vmatpush1.msra.mxu0 0.0
        %829 = vmatprep.subr.mxu0 0.0
        %830 = vmatpush1.msra.mxu0 0.0
        %831 = vmatprep.subr.mxu0 0.0
        %832 = vmatpush1.msra.mxu0 0.0
        %833 = vmatprep.subr.mxu0 0.0
        %834 = vmatpush1.msra.mxu0 0.0
        %835 = vmatprep.subr.mxu0 0.0
        %836 = vmatpush1.msra.mxu0 0.0
        %837 = vmatprep.subr.mxu0 0.0
        %838 = vmatpush1.msra.mxu0 0.0
        %839 = vmatprep.subr.mxu0 0.0
        %840 = vmatpush1.msra.mxu0 0.0
        %841 = vmatprep.subr.mxu0 0.0
        %842 = vmatpush1.msra.mxu0 0.0
        %843 = vmatprep.subr.mxu0 0.0
        %844 = vmatpush1.msra.mxu0 0.0
        %845 = vmatprep.subr.mxu0 0.0
        %846 = vmatpush1.msra.mxu0 0.0
        %847 = vmatprep.subr.mxu0 0.0
        %848 = vmatpush1.msra.mxu0 0.0
        %849 = vmatprep.mubr.f32.mxu0 0.0
        %850 = vmatmul.mubr.f32.gmra.mrb[0].mxu0 %v780
        %v851 = vpop.f32.mrb[0].mxu0
        %v852 = vadd.f32 0.0, %v851
        %v853 = vpop.f32.mrb[0].mxu0
        %v854 = vadd.f32 0.0, %v853
        %855 = vmatprep.mubr.f32.mxu0 0.0
        %856 = vmatmul.mubr.f32.gmra.mrb[0].mxu0 %v783
        %v857 = vpop.f32.mrb[0].mxu0
        %v858 = vadd.f32 0.0, %v857
        %v859 = vpop.f32.mrb[0].mxu0
        %v860 = vadd.f32 0.0, %v859
        %861 = vdwg.mxu0
        %862 = vmatprep.subr.mxu0 0.0
        %863 = vmatpush1.msra.mxu0 %v769
        %864 = vmatprep.subr.mxu0 0.0
        %865 = vmatpush1.msra.mxu0 %v772
        %866 = vmatprep.subr.mxu0 0.0
        %867 = vmatpush1.msra.mxu0 0.0
        %868 = vmatprep.subr.mxu0 0.0
        %869 = vmatpush1.msra.mxu0 0.0
        %870 = vmatprep.subr.mxu0 0.0
        %871 = vmatpush1.msra.mxu0 0.0
        %872 = vmatprep.subr.mxu0 0.0
        %873 = vmatpush1.msra.mxu0 0.0
        %874 = vmatprep.subr.mxu0 0.0
        %875 = vmatpush1.msra.mxu0 0.0
        %876 = vmatprep.subr.mxu0 0.0
        %877 = vmatpush1.msra.mxu0 0.0
        %878 = vmatprep.subr.mxu0 0.0
        %879 = vmatpush1.msra.mxu0 0.0
        %880 = vmatprep.subr.mxu0 0.0
        %881 = vmatpush1.msra.mxu0 0.0
        %882 = vmatprep.subr.mxu0 0.0
        %883 = vmatpush1.msra.mxu0 0.0
        %884 = vmatprep.subr.mxu0 0.0
        %885 = vmatpush1.msra.mxu0 0.0
        %886 = vmatprep.subr.mxu0 0.0
        %887 = vmatpush1.msra.mxu0 0.0
        %888 = vmatprep.subr.mxu0 0.0
        %889 = vmatpush1.msra.mxu0 0.0
        %890 = vmatprep.subr.mxu0 0.0
        %891 = vmatpush1.msra.mxu0 0.0
        %892 = vmatprep.subr.mxu0 0.0
        %893 = vmatpush1.msra.mxu0 0.0
        %894 = vmatprep.subr.mxu0 0.0
        %895 = vmatpush1.msra.mxu0 0.0
        %896 = vmatprep.subr.mxu0 0.0
        %897 = vmatpush1.msra.mxu0 0.0
        %898 = vmatprep.subr.mxu0 0.0
        %899 = vmatpush1.msra.mxu0 0.0
        %900 = vmatprep.subr.mxu0 0.0
        %901 = vmatpush1.msra.mxu0 0.0
        %902 = vmatprep.subr.mxu0 0.0
        %903 = vmatpush1.msra.mxu0 0.0
        %904 = vmatprep.subr.mxu0 0.0
        %905 = vmatpush1.msra.mxu0 0.0
        %906 = vmatprep.subr.mxu0 0.0
        %907 = vmatpush1.msra.mxu0 0.0
        %908 = vmatprep.subr.mxu0 0.0
        %909 = vmatpush1.msra.mxu0 0.0
        %910 = vmatprep.subr.mxu0 0.0
        %911 = vmatpush1.msra.mxu0 0.0
        %912 = vmatprep.subr.mxu0 0.0
        %913 = vmatpush1.msra.mxu0 0.0
        %914 = vmatprep.subr.mxu0 0.0
        %915 = vmatpush1.msra.mxu0 0.0
        %916 = vmatprep.subr.mxu0 0.0
        %917 = vmatpush1.msra.mxu0 0.0
        %918 = vmatprep.subr.mxu0 0.0
        %919 = vmatpush1.msra.mxu0 0.0
        %920 = vmatprep.subr.mxu0 0.0
        %921 = vmatpush1.msra.mxu0 0.0
        %922 = vmatprep.subr.mxu0 0.0
        %923 = vmatpush1.msra.mxu0 0.0
        %924 = vmatprep.subr.mxu0 0.0
        %925 = vmatpush1.msra.mxu0 0.0
        %926 = vmatprep.mubr.f32.mxu0 0.0
        %927 = vmatmul.mubr.f32.gmra.mrb[0].mxu0 %v780
        %v928 = vpop.f32.mrb[0].mxu0
        %v929 = vadd.f32 0.0, %v928
        %v930 = vpop.f32.mrb[0].mxu0
        %931 = vmatprep.mubr.f32.mxu0 0.0
        %932 = vmatmul.mubr.f32.gmra.mrb[0].mxu0 %v783
        %v933 = vpop.f32.mrb[0].mxu0
        %v934 = vadd.f32 0.0, %v933
        %v935 = vpop.f32.mrb[0].mxu0
        %936 = vdwg.mxu0
        %v937 = vadd.f32 %v654, %v852
        %v938 = vadd.f32 %v656, %v854
        %v939 = vadd.f32 %v731, %v929
        %v940 = vadd.f32 %v660, %v858
        %v941 = vadd.f32 %v662, %v860
        %v942 = vadd.f32 %v736, %v934
        %v943 = vld [vmem:[%s3] sm:$0xff]
        %v944 = vld [vmem:[%s3 + $0x8] sm:$0xff]
        %946 = vset.pattern.permute.xlu0 0
        %947 = vperm.xlu0 %946, %v943
        %v948 = vpop.permute.xlu0 %947
        %951 = vset.pattern.permute.xlu0 0
        %952 = vperm.xlu0 %951, %v944
        %v953 = vpop.permute.xlu0 %952
        %v955 = vadd.f32 %v937, %v948
        %v956 = vadd.f32 %v938, %v948
        %v957 = vadd.f32 %v939, %v948
        %v958 = vadd.f32 %v940, %v953
        %v959 = vadd.f32 %v941, %v953
        %v960 = vadd.f32 %v942, %v953
        %v961 = vmax.f32 %v955, 0.0
        %v962 = vmax.f32 %v956, 0.0
        %v963 = vmax.f32 %v957, 0.0
        %v964 = vmax.f32 %v958, 0.0
        %v965 = vmax.f32 %v959, 0.0
        %v966 = vmax.f32 %v960, 0.0
        %v967 = vld [vmem:[%s4] sm:$0xff]
        %v968 = vld [vmem:[%s4 + $0x8] sm:$0xff]
        %v969 = vld [vmem:[%s5] sm:$0xff]
        %v970 = vld [vmem:[%s5 + $0x8] sm:$0xff]
        %972 = vset.pattern.permute.xlu0 0
        %973 = vperm.xlu0 %972, %v969
        %v974 = vpop.permute.xlu0 %973
        %977 = vset.pattern.permute.xlu0 0
        %978 = vperm.xlu0 %977, %v970
        %v979 = vpop.permute.xlu0 %978
        %v982 = vsel %vm385, %v967, 0
        %v985 = vsel %vm385, %v968, 0
        %987 = vmatprep.subr.mxu0 %v962
        %988 = vmatpush1.msra.mxu0 %v961
        %989 = vmatprep.subr.mxu0 %v965
        %990 = vmatpush1.msra.mxu0 %v964
        %991 = vmatprep.subr.mxu0 0.0
        %992 = vmatpush1.msra.mxu0 0.0
        %993 = vmatprep.subr.mxu0 0.0
        %994 = vmatpush1.msra.mxu0 0.0
        %995 = vmatprep.subr.mxu0 0.0
        %996 = vmatpush1.msra.mxu0 0.0
        %997 = vmatprep.subr.mxu0 0.0
        %998 = vmatpush1.msra.mxu0 0.0
        %999 = vmatprep.subr.mxu0 0.0
        %1000 = vmatpush1.msra.mxu0 0.0
        %1001 = vmatprep.subr.mxu0 0.0
        %1002 = vmatpush1.msra.mxu0 0.0
        %1003 = vmatprep.subr.mxu0 0.0
        %1004 = vmatpush1.msra.mxu0 0.0
        %1005 = vmatprep.subr.mxu0 0.0
        %1006 = vmatpush1.msra.mxu0 0.0
        %1007 = vmatprep.subr.mxu0 0.0
        %1008 = vmatpush1.msra.mxu0 0.0
        %1009 = vmatprep.subr.mxu0 0.0
        %1010 = vmatpush1.msra.mxu0 0.0
        %1011 = vmatprep.subr.mxu0 0.0
        %1012 = vmatpush1.msra.mxu0 0.0
        %1013 = vmatprep.subr.mxu0 0.0
        %1014 = vmatpush1.msra.mxu0 0.0
        %1015 = vmatprep.subr.mxu0 0.0
        %1016 = vmatpush1.msra.mxu0 0.0
        %1017 = vmatprep.subr.mxu0 0.0
        %1018 = vmatpush1.msra.mxu0 0.0
        %1019 = vmatprep.subr.mxu0 0.0
        %1020 = vmatpush1.msra.mxu0 0.0
        %1021 = vmatprep.subr.mxu0 0.0
        %1022 = vmatpush1.msra.mxu0 0.0
        %1023 = vmatprep.subr.mxu0 0.0
        %1024 = vmatpush1.msra.mxu0 0.0
        %1025 = vmatprep.subr.mxu0 0.0
        %1026 = vmatpush1.msra.mxu0 0.0
        %1027 = vmatprep.subr.mxu0 0.0
        %1028 = vmatpush1.msra.mxu0 0.0
        %1029 = vmatprep.subr.mxu0 0.0
        %1030 = vmatpush1.msra.mxu0 0.0
        %1031 = vmatprep.subr.mxu0 0.0
        %1032 = vmatpush1.msra.mxu0 0.0
        %1033 = vmatprep.subr.mxu0 0.0
        %1034 = vmatpush1.msra.mxu0 0.0
        %1035 = vmatprep.subr.mxu0 0.0
        %1036 = vmatpush1.msra.mxu0 0.0
        %1037 = vmatprep.subr.mxu0 0.0
        %1038 = vmatpush1.msra.mxu0 0.0
        %1039 = vmatprep.subr.mxu0 0.0
        %1040 = vmatpush1.msra.mxu0 0.0
        %1041 = vmatprep.subr.mxu0 0.0
        %1042 = vmatpush1.msra.mxu0 0.0
        %1043 = vmatprep.subr.mxu0 0.0
        %1044 = vmatpush1.msra.mxu0 0.0
        %1045 = vmatprep.subr.mxu0 0.0
        %1046 = vmatpush1.msra.mxu0 0.0
        %1047 = vmatprep.subr.mxu0 0.0
        %1048 = vmatpush1.msra.mxu0 0.0
        %1049 = vmatprep.subr.mxu0 0.0
        %1050 = vmatpush1.msra.mxu0 0.0
        %1051 = vmatprep.mubr.f32.mxu0 0.0
        %1052 = vmatmul.mubr.f32.gmra.mrb[0].mxu0 %v982
        %v1053 = vpop.f32.mrb[0].mxu0
        %v1054 = vadd.f32 %v974, %v1053
        %v1055 = vpop.f32.mrb[0].mxu0
        %v1056 = vadd.f32 %v974, %v1055
        %1057 = vmatprep.mubr.f32.mxu0 0.0
        %1058 = vmatmul.mubr.f32.gmra.mrb[0].mxu0 %v985
        %v1059 = vpop.f32.mrb[0].mxu0
        %v1060 = vadd.f32 %v979, %v1059
        %v1061 = vpop.f32.mrb[0].mxu0
        %v1062 = vadd.f32 %v979, %v1061
        %1063 = vdwg.mxu0
        %1064 = vmatprep.subr.mxu0 0.0
        %1065 = vmatpush1.msra.mxu0 %v963
        %1066 = vmatprep.subr.mxu0 0.0
        %1067 = vmatpush1.msra.mxu0 %v966
        %1068 = vmatprep.subr.mxu0 0.0
        %1069 = vmatpush1.msra.mxu0 0.0
        %1070 = vmatprep.subr.mxu0 0.0
        %1071 = vmatpush1.msra.mxu0 0.0
        %1072 = vmatprep.subr.mxu0 0.0
        %1073 = vmatpush1.msra.mxu0 0.0
        %1074 = vmatprep.subr.mxu0 0.0
        %1075 = vmatpush1.msra.mxu0 0.0
        %1076 = vmatprep.subr.mxu0 0.0
        %1077 = vmatpush1.msra.mxu0 0.0
        %1078 = vmatprep.subr.mxu0 0.0
        %1079 = vmatpush1.msra.mxu0 0.0
        %1080 = vmatprep.subr.mxu0 0.0
        %1081 = vmatpush1.msra.mxu0 0.0
        %1082 = vmatprep.subr.mxu0 0.0
        %1083 = vmatpush1.msra.mxu0 0.0
        %1084 = vmatprep.subr.mxu0 0.0
        %1085 = vmatpush1.msra.mxu0 0.0
        %1086 = vmatprep.subr.mxu0 0.0
        %1087 = vmatpush1.msra.mxu0 0.0
        %1088 = vmatprep.subr.mxu0 0.0
        %1089 = vmatpush1.msra.mxu0 0.0
        %1090 = vmatprep.subr.mxu0 0.0
        %1091 = vmatpush1.msra.mxu0 0.0
        %1092 = vmatprep.subr.mxu0 0.0
        %1093 = vmatpush1.msra.mxu0 0.0
        %1094 = vmatprep.subr.mxu0 0.0
        %1095 = vmatpush1.msra.mxu0 0.0
        %1096 = vmatprep.subr.mxu0 0.0
        %1097 = vmatpush1.msra.mxu0 0.0
        %1098 = vmatprep.subr.mxu0 0.0
        %1099 = vmatpush1.msra.mxu0 0.0
        %1100 = vmatprep.subr.mxu0 0.0
        %1101 = vmatpush1.msra.mxu0 0.0
        %1102 = vmatprep.subr.mxu0 0.0
        %1103 = vmatpush1.msra.mxu0 0.0
        %1104 = vmatprep.subr.mxu0 0.0
        %1105 = vmatpush1.msra.mxu0 0.0
        %1106 = vmatprep.subr.mxu0 0.0
        %1107 = vmatpush1.msra.mxu0 0.0
        %1108 = vmatprep.subr.mxu0 0.0
        %1109 = vmatpush1.msra.mxu0 0.0
        %1110 = vmatprep.subr.mxu0 0.0
        %1111 = vmatpush1.msra.mxu0 0.0
        %1112 = vmatprep.subr.mxu0 0.0
        %1113 = vmatpush1.msra.mxu0 0.0
        %1114 = vmatprep.subr.mxu0 0.0
        %1115 = vmatpush1.msra.mxu0 0.0
        %1116 = vmatprep.subr.mxu0 0.0
        %1117 = vmatpush1.msra.mxu0 0.0
        %1118 = vmatprep.subr.mxu0 0.0
        %1119 = vmatpush1.msra.mxu0 0.0
        %1120 = vmatprep.subr.mxu0 0.0
        %1121 = vmatpush1.msra.mxu0 0.0
        %1122 = vmatprep.subr.mxu0 0.0
        %1123 = vmatpush1.msra.mxu0 0.0
        %1124 = vmatprep.subr.mxu0 0.0
        %1125 = vmatpush1.msra.mxu0 0.0
        %1126 = vmatprep.subr.mxu0 0.0
        %1127 = vmatpush1.msra.mxu0 0.0
        %1128 = vmatprep.mubr.f32.mxu0 0.0
        %1129 = vmatmul.mubr.f32.gmra.mrb[0].mxu0 %v982
        %v1130 = vpop.f32.mrb[0].mxu0
        %v1131 = vadd.f32 %v974, %v1130
        %v1132 = vpop.f32.mrb[0].mxu0
        %1133 = vmatprep.mubr.f32.mxu0 0.0
        %1134 = vmatmul.mubr.f32.gmra.mrb[0].mxu0 %v985
        %v1135 = vpop.f32.mrb[0].mxu0
        %v1136 = vadd.f32 %v979, %v1135
        %v1137 = vpop.f32.mrb[0].mxu0
        %1138 = vdwg.mxu0
        %v1139 = vadd.f32 %v364, %v1054
        %v1140 = vadd.f32 %v365, %v1056
        %v1141 = vadd.f32 %v366, %v1131
        %v1142 = vadd.f32 %v367, %v1060
        %v1143 = vadd.f32 %v368, %v1062
        %v1144 = vadd.f32 %v369, %v1136
        %v1146 = vlaneseq
        %v1147 = vshrl.u32 %v1146, 7
        %v1148 = vsub.s32 0, %v1147
        %v1149 = vrot.slane %v363, %v1148
        %v1150 = vlaneseq
        %v1151 = vshrl.u32 %v1150, 7
        %v1152 = vsub.s32 1, %v1151
        %v1153 = vrot.slane %v363, %v1152
        %v1154 = vlaneseq
        %v1155 = vshrl.u32 %v1154, 7
        %v1156 = vsub.s32 2, %v1155
        %v1157 = vrot.slane %v363, %v1156
        %v1161 = vmul.f32 %v1139, %v1149
        %v1162 = vmul.f32 %v1140, %v1153
        %v1163 = vmul.f32 %v1141, %v1157
        %v1164 = vmul.f32 %v1142, %v1149
        %v1165 = vmul.f32 %v1143, %v1153
        %v1166 = vmul.f32 %v1144, %v1157
        %1167 = vst [vmem:[#allocation2 + $0x8] sm:$0xff] %v1161
        %1168 = vst [vmem:[#allocation2 + $0x10] sm:$0xff] %v1162
        %1169 = vst [vmem:[#allocation2 + $0x18] sm:$0xff] %v1163
        %1170 = vst [vmem:[#allocation2 + $0x30] sm:$0xff] %v1164
        %1171 = vst [vmem:[#allocation2 + $0x38] sm:$0xff] %v1165
        %1172 = vst [vmem:[#allocation2 + $0x40] sm:$0xff] %v1166
        %v1173 = vld [vmem:[#allocation2 + $0x8] sm:$0xff]
        %v1174 = vld [vmem:[#allocation2 + $0x10] sm:$0xff]
        %v1175 = vld [vmem:[#allocation2 + $0x18] sm:$0xff]
        %v1176 = vld [vmem:[#allocation2 + $0x30] sm:$0xff]
        %v1177 = vld [vmem:[#allocation2 + $0x38] sm:$0xff]
        %v1178 = vld [vmem:[#allocation2 + $0x40] sm:$0xff]
        %v1179 = vld [vmem:[#allocation2] sm:$0xff]
        %v1180 = vld [vmem:[#allocation2 + $0x28] sm:$0xff]
        %v1181 = vld [vmem:[#allocation2 + $0x8] sm:$0xff]
        %v1182 = vld [vmem:[#allocation2 + $0x10] sm:$0xff]
        %v1183 = vld [vmem:[#allocation2 + $0x18] sm:$0xff]
        %v1184 = vld [vmem:[#allocation2 + $0x20] sm:$0xff]
        %v1185 = vld [vmem:[#allocation2 + $0x30] sm:$0xff]
        %v1186 = vld [vmem:[#allocation2 + $0x38] sm:$0xff]
        %v1187 = vld [vmem:[#allocation2 + $0x40] sm:$0xff]
        %v1188 = vld [vmem:[#allocation2 + $0x48] sm:$0xff]
        %s1189 = scalar_lea.vmem %s2, 48
        %v1190 = vld [vmem:[%s1189] sm:$0xff]
        %v1191 = vld [vmem:[%s1189 + $0x8] sm:$0xff]
        %s1192 = scalar_lea.vmem %s2, 64
        %v1193 = vld [vmem:[%s1192] sm:$0xff]
        %v1194 = vld [vmem:[%s1192 + $0x8] sm:$0xff]
        %v1196 = vsel %vm385, %v1193, 0
        %v1199 = vsel %vm385, %v1194, 0
        %1201 = vmatprep.subr.mxu0 %v1174
        %1202 = vmatpush1.msra.mxu0 %v1173
        %1203 = vmatprep.subr.mxu0 %v1177
        %1204 = vmatpush1.msra.mxu0 %v1176
        %1205 = vmatprep.subr.mxu0 0.0
        %1206 = vmatpush1.msra.mxu0 0.0
        %1207 = vmatprep.subr.mxu0 0.0
        %1208 = vmatpush1.msra.mxu0 0.0
        %1209 = vmatprep.subr.mxu0 0.0
        %1210 = vmatpush1.msra.mxu0 0.0
        %1211 = vmatprep.subr.mxu0 0.0
        %1212 = vmatpush1.msra.mxu0 0.0
        %1213 = vmatprep.subr.mxu0 0.0
        %1214 = vmatpush1.msra.mxu0 0.0
        %1215 = vmatprep.subr.mxu0 0.0
        %1216 = vmatpush1.msra.mxu0 0.0
        %1217 = vmatprep.subr.mxu0 0.0
        %1218 = vmatpush1.msra.mxu0 0.0
        %1219 = vmatprep.subr.mxu0 0.0
        %1220 = vmatpush1.msra.mxu0 0.0
        %1221 = vmatprep.subr.mxu0 0.0
        %1222 = vmatpush1.msra.mxu0 0.0
        %1223 = vmatprep.subr.mxu0 0.0
        %1224 = vmatpush1.msra.mxu0 0.0
        %1225 = vmatprep.subr.mxu0 0.0
        %1226 = vmatpush1.msra.mxu0 0.0
        %1227 = vmatprep.subr.mxu0 0.0
        %1228 = vmatpush1.msra.mxu0 0.0
        %1229 = vmatprep.subr.mxu0 0.0
        %1230 = vmatpush1.msra.mxu0 0.0
        %1231 = vmatprep.subr.mxu0 0.0
        %1232 = vmatpush1.msra.mxu0 0.0
        %1233 = vmatprep.subr.mxu0 0.0
        %1234 = vmatpush1.msra.mxu0 0.0
        %1235 = vmatprep.subr.mxu0 0.0
        %1236 = vmatpush1.msra.mxu0 0.0
        %1237 = vmatprep.subr.mxu0 0.0
        %1238 = vmatpush1.msra.mxu0 0.0
        %1239 = vmatprep.subr.mxu0 0.0
        %1240 = vmatpush1.msra.mxu0 0.0
        %1241 = vmatprep.subr.mxu0 0.0
        %1242 = vmatpush1.msra.mxu0 0.0
        %1243 = vmatprep.subr.mxu0 0.0
        %1244 = vmatpush1.msra.mxu0 0.0
        %1245 = vmatprep.subr.mxu0 0.0
        %1246 = vmatpush1.msra.mxu0 0.0
        %1247 = vmatprep.subr.mxu0 0.0
        %1248 = vmatpush1.msra.mxu0 0.0
        %1249 = vmatprep.subr.mxu0 0.0
        %1250 = vmatpush1.msra.mxu0 0.0
        %1251 = vmatprep.subr.mxu0 0.0
        %1252 = vmatpush1.msra.mxu0 0.0
        %1253 = vmatprep.subr.mxu0 0.0
        %1254 = vmatpush1.msra.mxu0 0.0
        %1255 = vmatprep.subr.mxu0 0.0
        %1256 = vmatpush1.msra.mxu0 0.0
        %1257 = vmatprep.subr.mxu0 0.0
        %1258 = vmatpush1.msra.mxu0 0.0
        %1259 = vmatprep.subr.mxu0 0.0
        %1260 = vmatpush1.msra.mxu0 0.0
        %1261 = vmatprep.subr.mxu0 0.0
        %1262 = vmatpush1.msra.mxu0 0.0
        %1263 = vmatprep.subr.mxu0 0.0
        %1264 = vmatpush1.msra.mxu0 0.0
        %1265 = vmatprep.mubr.f32.mxu0 0.0
        %1266 = vmatmul.mubr.f32.gmra.mrb[0].mxu0 %v1196
        %v1267 = vpop.f32.mrb[0].mxu0
        %v1268 = vadd.f32 0.0, %v1267
        %v1269 = vpop.f32.mrb[0].mxu0
        %v1270 = vadd.f32 0.0, %v1269
        %1271 = vmatprep.mubr.f32.mxu0 0.0
        %1272 = vmatmul.mubr.f32.gmra.mrb[0].mxu0 %v1199
        %v1273 = vpop.f32.mrb[0].mxu0
        %v1274 = vadd.f32 0.0, %v1273
        %v1275 = vpop.f32.mrb[0].mxu0
        %v1276 = vadd.f32 0.0, %v1275
        %1277 = vdwg.mxu0
        %1278 = vmatprep.subr.mxu0 0.0
        %1279 = vmatpush1.msra.mxu0 %v1175
        %1280 = vmatprep.subr.mxu0 0.0
        %1281 = vmatpush1.msra.mxu0 %v1178
        %1282 = vmatprep.subr.mxu0 0.0
        %1283 = vmatpush1.msra.mxu0 0.0
        %1284 = vmatprep.subr.mxu0 0.0
        %1285 = vmatpush1.msra.mxu0 0.0
        %1286 = vmatprep.subr.mxu0 0.0
        %1287 = vmatpush1.msra.mxu0 0.0
        %1288 = vmatprep.subr.mxu0 0.0
        %1289 = vmatpush1.msra.mxu0 0.0
        %1290 = vmatprep.subr.mxu0 0.0
        %1291 = vmatpush1.msra.mxu0 0.0
        %1292 = vmatprep.subr.mxu0 0.0
        %1293 = vmatpush1.msra.mxu0 0.0
        %1294 = vmatprep.subr.mxu0 0.0
        %1295 = vmatpush1.msra.mxu0 0.0
        %1296 = vmatprep.subr.mxu0 0.0
        %1297 = vmatpush1.msra.mxu0 0.0
        %1298 = vmatprep.subr.mxu0 0.0
        %1299 = vmatpush1.msra.mxu0 0.0
        %1300 = vmatprep.subr.mxu0 0.0
        %1301 = vmatpush1.msra.mxu0 0.0
        %1302 = vmatprep.subr.mxu0 0.0
        %1303 = vmatpush1.msra.mxu0 0.0
        %1304 = vmatprep.subr.mxu0 0.0
        %1305 = vmatpush1.msra.mxu0 0.0
        %1306 = vmatprep.subr.mxu0 0.0
        %1307 = vmatpush1.msra.mxu0 0.0
        %1308 = vmatprep.subr.mxu0 0.0
        %1309 = vmatpush1.msra.mxu0 0.0
        %1310 = vmatprep.subr.mxu0 0.0
        %1311 = vmatpush1.msra.mxu0 0.0
        %1312 = vmatprep.subr.mxu0 0.0
        %1313 = vmatpush1.msra.mxu0 0.0
        %1314 = vmatprep.subr.mxu0 0.0
        %1315 = vmatpush1.msra.mxu0 0.0
        %1316 = vmatprep.subr.mxu0 0.0
        %1317 = vmatpush1.msra.mxu0 0.0
        %1318 = vmatprep.subr.mxu0 0.0
        %1319 = vmatpush1.msra.mxu0 0.0
        %1320 = vmatprep.subr.mxu0 0.0
        %1321 = vmatpush1.msra.mxu0 0.0
        %1322 = vmatprep.subr.mxu0 0.0
        %1323 = vmatpush1.msra.mxu0 0.0
        %1324 = vmatprep.subr.mxu0 0.0
        %1325 = vmatpush1.msra.mxu0 0.0
        %1326 = vmatprep.subr.mxu0 0.0
        %1327 = vmatpush1.msra.mxu0 0.0
        %1328 = vmatprep.subr.mxu0 0.0
        %1329 = vmatpush1.msra.mxu0 0.0
        %1330 = vmatprep.subr.mxu0 0.0
        %1331 = vmatpush1.msra.mxu0 0.0
        %1332 = vmatprep.subr.mxu0 0.0
        %1333 = vmatpush1.msra.mxu0 0.0
        %1334 = vmatprep.subr.mxu0 0.0
        %1335 = vmatpush1.msra.mxu0 0.0
        %1336 = vmatprep.subr.mxu0 0.0
        %1337 = vmatpush1.msra.mxu0 0.0
        %1338 = vmatprep.subr.mxu0 0.0
        %1339 = vmatpush1.msra.mxu0 0.0
        %1340 = vmatprep.subr.mxu0 0.0
        %1341 = vmatpush1.msra.mxu0 0.0
        %1342 = vmatprep.mubr.f32.mxu0 0.0
        %1343 = vmatmul.mubr.f32.gmra.mrb[0].mxu0 %v1196
        %v1344 = vpop.f32.mrb[0].mxu0
        %v1345 = vadd.f32 0.0, %v1344
        %v1346 = vpop.f32.mrb[0].mxu0
        %1347 = vmatprep.mubr.f32.mxu0 0.0
        %1348 = vmatmul.mubr.f32.gmra.mrb[0].mxu0 %v1199
        %v1349 = vpop.f32.mrb[0].mxu0
        %v1350 = vadd.f32 0.0, %v1349
        %v1351 = vpop.f32.mrb[0].mxu0
        %1352 = vdwg.mxu0
        %1361 = vrot.lane.b32.xlu0 %v1179, 2
        %v1362 = vpop.permute.xlu0 %1361
        %1363 = vrot.lane.b32.xlu0 %v1173, 2
        %v1364 = vpop.permute.xlu0 %1363
        %1365 = vrot.lane.b32.xlu0 %v1174, 2
        %v1366 = vpop.permute.xlu0 %1365
        %1367 = vrot.lane.b32.xlu0 %v1175, 2
        %v1368 = vpop.permute.xlu0 %1367
        %1369 = vrot.lane.b32.xlu0 %v1180, 2
        %v1370 = vpop.permute.xlu0 %1369
        %1371 = vrot.lane.b32.xlu0 %v1176, 2
        %v1372 = vpop.permute.xlu0 %1371
        %1373 = vrot.lane.b32.xlu0 %v1177, 2
        %v1374 = vpop.permute.xlu0 %1373
        %1375 = vrot.lane.b32.xlu0 %v1178, 2
        %v1376 = vpop.permute.xlu0 %1375
        %vm1377 = vcmask 15360
        %v1378 = vsel %vm1377, %v1362, %v1364
        %v1379 = vsel %vm1377, %v1364, %v1366
        %v1380 = vsel %vm1377, %v1366, %v1368
        %v1381 = vsel %vm1377, %v1370, %v1372
        %v1382 = vsel %vm1377, %v1372, %v1374
        %v1383 = vsel %vm1377, %v1374, %v1376
        %v1391 = vsel %vm385, %v1190, 0
        %v1394 = vsel %vm385, %v1191, 0
        %1396 = vmatprep.subr.mxu0 %v1379
        %1397 = vmatpush1.msra.mxu0 %v1378
        %1398 = vmatprep.subr.mxu0 %v1382
        %1399 = vmatpush1.msra.mxu0 %v1381
        %1400 = vmatprep.subr.mxu0 0.0
        %1401 = vmatpush1.msra.mxu0 0.0
        %1402 = vmatprep.subr.mxu0 0.0
        %1403 = vmatpush1.msra.mxu0 0.0
        %1404 = vmatprep.subr.mxu0 0.0
        %1405 = vmatpush1.msra.mxu0 0.0
        %1406 = vmatprep.subr.mxu0 0.0
        %1407 = vmatpush1.msra.mxu0 0.0
        %1408 = vmatprep.subr.mxu0 0.0
        %1409 = vmatpush1.msra.mxu0 0.0
        %1410 = vmatprep.subr.mxu0 0.0
        %1411 = vmatpush1.msra.mxu0 0.0
        %1412 = vmatprep.subr.mxu0 0.0
        %1413 = vmatpush1.msra.mxu0 0.0
        %1414 = vmatprep.subr.mxu0 0.0
        %1415 = vmatpush1.msra.mxu0 0.0
        %1416 = vmatprep.subr.mxu0 0.0
        %1417 = vmatpush1.msra.mxu0 0.0
        %1418 = vmatprep.subr.mxu0 0.0
        %1419 = vmatpush1.msra.mxu0 0.0
        %1420 = vmatprep.subr.mxu0 0.0
        %1421 = vmatpush1.msra.mxu0 0.0
        %1422 = vmatprep.subr.mxu0 0.0
        %1423 = vmatpush1.msra.mxu0 0.0
        %1424 = vmatprep.subr.mxu0 0.0
        %1425 = vmatpush1.msra.mxu0 0.0
        %1426 = vmatprep.subr.mxu0 0.0
        %1427 = vmatpush1.msra.mxu0 0.0
        %1428 = vmatprep.subr.mxu0 0.0
        %1429 = vmatpush1.msra.mxu0 0.0
        %1430 = vmatprep.subr.mxu0 0.0
        %1431 = vmatpush1.msra.mxu0 0.0
        %1432 = vmatprep.subr.mxu0 0.0
        %1433 = vmatpush1.msra.mxu0 0.0
        %1434 = vmatprep.subr.mxu0 0.0
        %1435 = vmatpush1.msra.mxu0 0.0
        %1436 = vmatprep.subr.mxu0 0.0
        %1437 = vmatpush1.msra.mxu0 0.0
        %1438 = vmatprep.subr.mxu0 0.0
        %1439 = vmatpush1.msra.mxu0 0.0
        %1440 = vmatprep.subr.mxu0 0.0
        %1441 = vmatpush1.msra.mxu0 0.0
        %1442 = vmatprep.subr.mxu0 0.0
        %1443 = vmatpush1.msra.mxu0 0.0
        %1444 = vmatprep.subr.mxu0 0.0
        %1445 = vmatpush1.msra.mxu0 0.0
        %1446 = vmatprep.subr.mxu0 0.0
        %1447 = vmatpush1.msra.mxu0 0.0
        %1448 = vmatprep.subr.mxu0 0.0
        %1449 = vmatpush1.msra.mxu0 0.0
        %1450 = vmatprep.subr.mxu0 0.0
        %1451 = vmatpush1.msra.mxu0 0.0
        %1452 = vmatprep.subr.mxu0 0.0
        %1453 = vmatpush1.msra.mxu0 0.0
        %1454 = vmatprep.subr.mxu0 0.0
        %1455 = vmatpush1.msra.mxu0 0.0
        %1456 = vmatprep.subr.mxu0 0.0
        %1457 = vmatpush1.msra.mxu0 0.0
        %1458 = vmatprep.subr.mxu0 0.0
        %1459 = vmatpush1.msra.mxu0 0.0
        %1460 = vmatprep.mubr.f32.mxu0 0.0
        %1461 = vmatmul.mubr.f32.gmra.mrb[0].mxu0 %v1391
        %v1462 = vpop.f32.mrb[0].mxu0
        %v1463 = vadd.f32 %v1268, %v1462
        %v1464 = vpop.f32.mrb[0].mxu0
        %v1465 = vadd.f32 %v1270, %v1464
        %1466 = vmatprep.mubr.f32.mxu0 0.0
        %1467 = vmatmul.mubr.f32.gmra.mrb[0].mxu0 %v1394
        %v1468 = vpop.f32.mrb[0].mxu0
        %v1469 = vadd.f32 %v1274, %v1468
        %v1470 = vpop.f32.mrb[0].mxu0
        %v1471 = vadd.f32 %v1276, %v1470
        %1472 = vdwg.mxu0
        %1473 = vmatprep.subr.mxu0 0.0
        %1474 = vmatpush1.msra.mxu0 %v1380
        %1475 = vmatprep.subr.mxu0 0.0
        %1476 = vmatpush1.msra.mxu0 %v1383
        %1477 = vmatprep.subr.mxu0 0.0
        %1478 = vmatpush1.msra.mxu0 0.0
        %1479 = vmatprep.subr.mxu0 0.0
        %1480 = vmatpush1.msra.mxu0 0.0
        %1481 = vmatprep.subr.mxu0 0.0
        %1482 = vmatpush1.msra.mxu0 0.0
        %1483 = vmatprep.subr.mxu0 0.0
        %1484 = vmatpush1.msra.mxu0 0.0
        %1485 = vmatprep.subr.mxu0 0.0
        %1486 = vmatpush1.msra.mxu0 0.0
        %1487 = vmatprep.subr.mxu0 0.0
        %1488 = vmatpush1.msra.mxu0 0.0
        %1489 = vmatprep.subr.mxu0 0.0
        %1490 = vmatpush1.msra.mxu0 0.0
        %1491 = vmatprep.subr.mxu0 0.0
        %1492 = vmatpush1.msra.mxu0 0.0
        %1493 = vmatprep.subr.mxu0 0.0
        %1494 = vmatpush1.msra.mxu0 0.0
        %1495 = vmatprep.subr.mxu0 0.0
        %1496 = vmatpush1.msra.mxu0 0.0
        %1497 = vmatprep.subr.mxu0 0.0
        %1498 = vmatpush1.msra.mxu0 0.0
        %1499 = vmatprep.subr.mxu0 0.0
        %1500 = vmatpush1.msra.mxu0 0.0
        %1501 = vmatprep.subr.mxu0 0.0
        %1502 = vmatpush1.msra.mxu0 0.0
        %1503 = vmatprep.subr.mxu0 0.0
        %1504 = vmatpush1.msra.mxu0 0.0
        %1505 = vmatprep.subr.mxu0 0.0
        %1506 = vmatpush1.msra.mxu0 0.0
        %1507 = vmatprep.subr.mxu0 0.0
        %1508 = vmatpush1.msra.mxu0 0.0
        %1509 = vmatprep.subr.mxu0 0.0
        %1510 = vmatpush1.msra.mxu0 0.0
        %1511 = vmatprep.subr.mxu0 0.0
        %1512 = vmatpush1.msra.mxu0 0.0
        %1513 = vmatprep.subr.mxu0 0.0
        %1514 = vmatpush1.msra.mxu0 0.0
        %1515 = vmatprep.subr.mxu0 0.0
        %1516 = vmatpush1.msra.mxu0 0.0
        %1517 = vmatprep.subr.mxu0 0.0
        %1518 = vmatpush1.msra.mxu0 0.0
        %1519 = vmatprep.subr.mxu0 0.0
        %1520 = vmatpush1.msra.mxu0 0.0
        %1521 = vmatprep.subr.mxu0 0.0
        %1522 = vmatpush1.msra.mxu0 0.0
        %1523 = vmatprep.subr.mxu0 0.0
        %1524 = vmatpush1.msra.mxu0 0.0
        %1525 = vmatprep.subr.mxu0 0.0
        %1526 = vmatpush1.msra.mxu0 0.0
        %1527 = vmatprep.subr.mxu0 0.0
        %1528 = vmatpush1.msra.mxu0 0.0
        %1529 = vmatprep.subr.mxu0 0.0
        %1530 = vmatpush1.msra.mxu0 0.0
        %1531 = vmatprep.subr.mxu0 0.0
        %1532 = vmatpush1.msra.mxu0 0.0
        %1533 = vmatprep.subr.mxu0 0.0
        %1534 = vmatpush1.msra.mxu0 0.0
        %1535 = vmatprep.subr.mxu0 0.0
        %1536 = vmatpush1.msra.mxu0 0.0
        %1537 = vmatprep.mubr.f32.mxu0 0.0
        %1538 = vmatmul.mubr.f32.gmra.mrb[0].mxu0 %v1391
        %v1539 = vpop.f32.mrb[0].mxu0
        %v1540 = vadd.f32 %v1345, %v1539
        %v1541 = vpop.f32.mrb[0].mxu0
        %1542 = vmatprep.mubr.f32.mxu0 0.0
        %1543 = vmatmul.mubr.f32.gmra.mrb[0].mxu0 %v1394
        %v1544 = vpop.f32.mrb[0].mxu0
        %v1545 = vadd.f32 %v1350, %v1544
        %v1546 = vpop.f32.mrb[0].mxu0
        %1547 = vdwg.mxu0
        %s1548 = scalar_lea.vmem %s2, 80
        %v1549 = vld [vmem:[%s1548] sm:$0xff]
        %v1550 = vld [vmem:[%s1548 + $0x8] sm:$0xff]
        %1559 = vrot.lane.b32.xlu0 %v1181, 126
        %v1560 = vpop.permute.xlu0 %1559
        %1561 = vrot.lane.b32.xlu0 %v1182, 126
        %v1562 = vpop.permute.xlu0 %1561
        %1563 = vrot.lane.b32.xlu0 %v1183, 126
        %v1564 = vpop.permute.xlu0 %1563
        %1565 = vrot.lane.b32.xlu0 %v1184, 126
        %v1566 = vpop.permute.xlu0 %1565
        %1567 = vrot.lane.b32.xlu0 %v1185, 126
        %v1568 = vpop.permute.xlu0 %1567
        %1569 = vrot.lane.b32.xlu0 %v1186, 126
        %v1570 = vpop.permute.xlu0 %1569
        %1571 = vrot.lane.b32.xlu0 %v1187, 126
        %v1572 = vpop.permute.xlu0 %1571
        %1573 = vrot.lane.b32.xlu0 %v1188, 126
        %v1574 = vpop.permute.xlu0 %1573
        %vm1575 = vcmask 1031168
        %v1576 = vsel %vm1575, %v1560, %v1562
        %v1577 = vsel %vm1575, %v1562, %v1564
        %v1578 = vsel %vm1575, %v1564, %v1566
        %v1579 = vsel %vm1575, %v1568, %v1570
        %v1580 = vsel %vm1575, %v1570, %v1572
        %v1581 = vsel %vm1575, %v1572, %v1574
        %v1589 = vsel %vm385, %v1549, 0
        %v1592 = vsel %vm385, %v1550, 0
        %1594 = vmatprep.subr.mxu0 %v1577
        %1595 = vmatpush1.msra.mxu0 %v1576
        %1596 = vmatprep.subr.mxu0 %v1580
        %1597 = vmatpush1.msra.mxu0 %v1579
        %1598 = vmatprep.subr.mxu0 0.0
        %1599 = vmatpush1.msra.mxu0 0.0
        %1600 = vmatprep.subr.mxu0 0.0
        %1601 = vmatpush1.msra.mxu0 0.0
        %1602 = vmatprep.subr.mxu0 0.0
        %1603 = vmatpush1.msra.mxu0 0.0
        %1604 = vmatprep.subr.mxu0 0.0
        %1605 = vmatpush1.msra.mxu0 0.0
        %1606 = vmatprep.subr.mxu0 0.0
        %1607 = vmatpush1.msra.mxu0 0.0
        %1608 = vmatprep.subr.mxu0 0.0
        %1609 = vmatpush1.msra.mxu0 0.0
        %1610 = vmatprep.subr.mxu0 0.0
        %1611 = vmatpush1.msra.mxu0 0.0
        %1612 = vmatprep.subr.mxu0 0.0
        %1613 = vmatpush1.msra.mxu0 0.0
        %1614 = vmatprep.subr.mxu0 0.0
        %1615 = vmatpush1.msra.mxu0 0.0
        %1616 = vmatprep.subr.mxu0 0.0
        %1617 = vmatpush1.msra.mxu0 0.0
        %1618 = vmatprep.subr.mxu0 0.0
        %1619 = vmatpush1.msra.mxu0 0.0
        %1620 = vmatprep.subr.mxu0 0.0
        %1621 = vmatpush1.msra.mxu0 0.0
        %1622 = vmatprep.subr.mxu0 0.0
        %1623 = vmatpush1.msra.mxu0 0.0
        %1624 = vmatprep.subr.mxu0 0.0
        %1625 = vmatpush1.msra.mxu0 0.0
        %1626 = vmatprep.subr.mxu0 0.0
        %1627 = vmatpush1.msra.mxu0 0.0
        %1628 = vmatprep.subr.mxu0 0.0
        %1629 = vmatpush1.msra.mxu0 0.0
        %1630 = vmatprep.subr.mxu0 0.0
        %1631 = vmatpush1.msra.mxu0 0.0
        %1632 = vmatprep.subr.mxu0 0.0
        %1633 = vmatpush1.msra.mxu0 0.0
        %1634 = vmatprep.subr.mxu0 0.0
        %1635 = vmatpush1.msra.mxu0 0.0
        %1636 = vmatprep.subr.mxu0 0.0
        %1637 = vmatpush1.msra.mxu0 0.0
        %1638 = vmatprep.subr.mxu0 0.0
        %1639 = vmatpush1.msra.mxu0 0.0
        %1640 = vmatprep.subr.mxu0 0.0
        %1641 = vmatpush1.msra.mxu0 0.0
        %1642 = vmatprep.subr.mxu0 0.0
        %1643 = vmatpush1.msra.mxu0 0.0
        %1644 = vmatprep.subr.mxu0 0.0
        %1645 = vmatpush1.msra.mxu0 0.0
        %1646 = vmatprep.subr.mxu0 0.0
        %1647 = vmatpush1.msra.mxu0 0.0
        %1648 = vmatprep.subr.mxu0 0.0
        %1649 = vmatpush1.msra.mxu0 0.0
        %1650 = vmatprep.subr.mxu0 0.0
        %1651 = vmatpush1.msra.mxu0 0.0
        %1652 = vmatprep.subr.mxu0 0.0
        %1653 = vmatpush1.msra.mxu0 0.0
        %1654 = vmatprep.subr.mxu0 0.0
        %1655 = vmatpush1.msra.mxu0 0.0
        %1656 = vmatprep.subr.mxu0 0.0
        %1657 = vmatpush1.msra.mxu0 0.0
        %1658 = vmatprep.mubr.f32.mxu0 0.0
        %1659 = vmatmul.mubr.f32.gmra.mrb[0].mxu0 %v1589
        %v1660 = vpop.f32.mrb[0].mxu0
        %v1661 = vadd.f32 0.0, %v1660
        %v1662 = vpop.f32.mrb[0].mxu0
        %v1663 = vadd.f32 0.0, %v1662
        %1664 = vmatprep.mubr.f32.mxu0 0.0
        %1665 = vmatmul.mubr.f32.gmra.mrb[0].mxu0 %v1592
        %v1666 = vpop.f32.mrb[0].mxu0
        %v1667 = vadd.f32 0.0, %v1666
        %v1668 = vpop.f32.mrb[0].mxu0
        %v1669 = vadd.f32 0.0, %v1668
        %1670 = vdwg.mxu0
        %1671 = vmatprep.subr.mxu0 0.0
        %1672 = vmatpush1.msra.mxu0 %v1578
        %1673 = vmatprep.subr.mxu0 0.0
        %1674 = vmatpush1.msra.mxu0 %v1581
        %1675 = vmatprep.subr.mxu0 0.0
        %1676 = vmatpush1.msra.mxu0 0.0
        %1677 = vmatprep.subr.mxu0 0.0
        %1678 = vmatpush1.msra.mxu0 0.0
        %1679 = vmatprep.subr.mxu0 0.0
        %1680 = vmatpush1.msra.mxu0 0.0
        %1681 = vmatprep.subr.mxu0 0.0
        %1682 = vmatpush1.msra.mxu0 0.0
        %1683 = vmatprep.subr.mxu0 0.0
        %1684 = vmatpush1.msra.mxu0 0.0
        %1685 = vmatprep.subr.mxu0 0.0
        %1686 = vmatpush1.msra.mxu0 0.0
        %1687 = vmatprep.subr.mxu0 0.0
        %1688 = vmatpush1.msra.mxu0 0.0
        %1689 = vmatprep.subr.mxu0 0.0
        %1690 = vmatpush1.msra.mxu0 0.0
        %1691 = vmatprep.subr.mxu0 0.0
        %1692 = vmatpush1.msra.mxu0 0.0
        %1693 = vmatprep.subr.mxu0 0.0
        %1694 = vmatpush1.msra.mxu0 0.0
        %1695 = vmatprep.subr.mxu0 0.0
        %1696 = vmatpush1.msra.mxu0 0.0
        %1697 = vmatprep.subr.mxu0 0.0
        %1698 = vmatpush1.msra.mxu0 0.0
        %1699 = vmatprep.subr.mxu0 0.0
        %1700 = vmatpush1.msra.mxu0 0.0
        %1701 = vmatprep.subr.mxu0 0.0
        %1702 = vmatpush1.msra.mxu0 0.0
        %1703 = vmatprep.subr.mxu0 0.0
        %1704 = vmatpush1.msra.mxu0 0.0
        %1705 = vmatprep.subr.mxu0 0.0
        %1706 = vmatpush1.msra.mxu0 0.0
        %1707 = vmatprep.subr.mxu0 0.0
        %1708 = vmatpush1.msra.mxu0 0.0
        %1709 = vmatprep.subr.mxu0 0.0
        %1710 = vmatpush1.msra.mxu0 0.0
        %1711 = vmatprep.subr.mxu0 0.0
        %1712 = vmatpush1.msra.mxu0 0.0
        %1713 = vmatprep.subr.mxu0 0.0
        %1714 = vmatpush1.msra.mxu0 0.0
        %1715 = vmatprep.subr.mxu0 0.0
        %1716 = vmatpush1.msra.mxu0 0.0
        %1717 = vmatprep.subr.mxu0 0.0
        %1718 = vmatpush1.msra.mxu0 0.0
        %1719 = vmatprep.subr.mxu0 0.0
        %1720 = vmatpush1.msra.mxu0 0.0
        %1721 = vmatprep.subr.mxu0 0.0
        %1722 = vmatpush1.msra.mxu0 0.0
        %1723 = vmatprep.subr.mxu0 0.0
        %1724 = vmatpush1.msra.mxu0 0.0
        %1725 = vmatprep.subr.mxu0 0.0
        %1726 = vmatpush1.msra.mxu0 0.0
        %1727 = vmatprep.subr.mxu0 0.0
        %1728 = vmatpush1.msra.mxu0 0.0
        %1729 = vmatprep.subr.mxu0 0.0
        %1730 = vmatpush1.msra.mxu0 0.0
        %1731 = vmatprep.subr.mxu0 0.0
        %1732 = vmatpush1.msra.mxu0 0.0
        %1733 = vmatprep.subr.mxu0 0.0
        %1734 = vmatpush1.msra.mxu0 0.0
        %1735 = vmatprep.mubr.f32.mxu0 0.0
        %1736 = vmatmul.mubr.f32.gmra.mrb[0].mxu0 %v1589
        %v1737 = vpop.f32.mrb[0].mxu0
        %v1738 = vadd.f32 0.0, %v1737
        %v1739 = vpop.f32.mrb[0].mxu0
        %1740 = vmatprep.mubr.f32.mxu0 0.0
        %1741 = vmatmul.mubr.f32.gmra.mrb[0].mxu0 %v1592
        %v1742 = vpop.f32.mrb[0].mxu0
        %v1743 = vadd.f32 0.0, %v1742
        %v1744 = vpop.f32.mrb[0].mxu0
        %1745 = vdwg.mxu0
        %v1746 = vadd.f32 %v1463, %v1661
        %v1747 = vadd.f32 %v1465, %v1663
        %v1748 = vadd.f32 %v1540, %v1738
        %v1749 = vadd.f32 %v1469, %v1667
        %v1750 = vadd.f32 %v1471, %v1669
        %v1751 = vadd.f32 %v1545, %v1743
        %s1752 = scalar_lea.vmem %s3, 16
        %v1753 = vld [vmem:[%s1752] sm:$0xff]
        %v1754 = vld [vmem:[%s1752 + $0x8] sm:$0xff]
        %1756 = vset.pattern.permute.xlu0 0
        %1757 = vperm.xlu0 %1756, %v1753
        %v1758 = vpop.permute.xlu0 %1757
        %1761 = vset.pattern.permute.xlu0 0
        %1762 = vperm.xlu0 %1761, %v1754
        %v1763 = vpop.permute.xlu0 %1762
        %v1765 = vadd.f32 %v1746, %v1758
        %v1766 = vadd.f32 %v1747, %v1758
        %v1767 = vadd.f32 %v1748, %v1758
        %v1768 = vadd.f32 %v1749, %v1763
        %v1769 = vadd.f32 %v1750, %v1763
        %v1770 = vadd.f32 %v1751, %v1763
        %v1771 = vmax.f32 %v1765, 0.0
        %v1772 = vmax.f32 %v1766, 0.0
        %v1773 = vmax.f32 %v1767, 0.0
        %v1774 = vmax.f32 %v1768, 0.0
        %v1775 = vmax.f32 %v1769, 0.0
        %v1776 = vmax.f32 %v1770, 0.0
        %s1777 = scalar_lea.vmem %s4, 16
        %v1778 = vld [vmem:[%s1777] sm:$0xff]
        %v1779 = vld [vmem:[%s1777 + $0x8] sm:$0xff]
        %s1780 = scalar_lea.vmem %s5, 16
        %v1781 = vld [vmem:[%s1780] sm:$0xff]
        %v1782 = vld [vmem:[%s1780 + $0x8] sm:$0xff]
        %1784 = vset.pattern.permute.xlu0 0
        %1785 = vperm.xlu0 %1784, %v1781
        %v1786 = vpop.permute.xlu0 %1785
        %1789 = vset.pattern.permute.xlu0 0
        %1790 = vperm.xlu0 %1789, %v1782
        %v1791 = vpop.permute.xlu0 %1790
        %v1794 = vsel %vm385, %v1778, 0
        %v1797 = vsel %vm385, %v1779, 0
        %1799 = vmatprep.subr.mxu0 %v1772
        %1800 = vmatpush1.msra.mxu0 %v1771
        %1801 = vmatprep.subr.mxu0 %v1775
        %1802 = vmatpush1.msra.mxu0 %v1774
        %1803 = vmatprep.subr.mxu0 0.0
        %1804 = vmatpush1.msra.mxu0 0.0
        %1805 = vmatprep.subr.mxu0 0.0
        %1806 = vmatpush1.msra.mxu0 0.0
        %1807 = vmatprep.subr.mxu0 0.0
        %1808 = vmatpush1.msra.mxu0 0.0
        %1809 = vmatprep.subr.mxu0 0.0
        %1810 = vmatpush1.msra.mxu0 0.0
        %1811 = vmatprep.subr.mxu0 0.0
        %1812 = vmatpush1.msra.mxu0 0.0
        %1813 = vmatprep.subr.mxu0 0.0
        %1814 = vmatpush1.msra.mxu0 0.0
        %1815 = vmatprep.subr.mxu0 0.0
        %1816 = vmatpush1.msra.mxu0 0.0
        %1817 = vmatprep.subr.mxu0 0.0
        %1818 = vmatpush1.msra.mxu0 0.0
        %1819 = vmatprep.subr.mxu0 0.0
        %1820 = vmatpush1.msra.mxu0 0.0
        %1821 = vmatprep.subr.mxu0 0.0
        %1822 = vmatpush1.msra.mxu0 0.0
        %1823 = vmatprep.subr.mxu0 0.0
        %1824 = vmatpush1.msra.mxu0 0.0
        %1825 = vmatprep.subr.mxu0 0.0
        %1826 = vmatpush1.msra.mxu0 0.0
        %1827 = vmatprep.subr.mxu0 0.0
        %1828 = vmatpush1.msra.mxu0 0.0
        %1829 = vmatprep.subr.mxu0 0.0
        %1830 = vmatpush1.msra.mxu0 0.0
        %1831 = vmatprep.subr.mxu0 0.0
        %1832 = vmatpush1.msra.mxu0 0.0
        %1833 = vmatprep.subr.mxu0 0.0
        %1834 = vmatpush1.msra.mxu0 0.0
        %1835 = vmatprep.subr.mxu0 0.0
        %1836 = vmatpush1.msra.mxu0 0.0
        %1837 = vmatprep.subr.mxu0 0.0
        %1838 = vmatpush1.msra.mxu0 0.0
        %1839 = vmatprep.subr.mxu0 0.0
        %1840 = vmatpush1.msra.mxu0 0.0
        %1841 = vmatprep.subr.mxu0 0.0
        %1842 = vmatpush1.msra.mxu0 0.0
        %1843 = vmatprep.subr.mxu0 0.0
        %1844 = vmatpush1.msra.mxu0 0.0
        %1845 = vmatprep.subr.mxu0 0.0
        %1846 = vmatpush1.msra.mxu0 0.0
        %1847 = vmatprep.subr.mxu0 0.0
        %1848 = vmatpush1.msra.mxu0 0.0
        %1849 = vmatprep.subr.mxu0 0.0
        %1850 = vmatpush1.msra.mxu0 0.0
        %1851 = vmatprep.subr.mxu0 0.0
        %1852 = vmatpush1.msra.mxu0 0.0
        %1853 = vmatprep.subr.mxu0 0.0
        %1854 = vmatpush1.msra.mxu0 0.0
        %1855 = vmatprep.subr.mxu0 0.0
        %1856 = vmatpush1.msra.mxu0 0.0
        %1857 = vmatprep.subr.mxu0 0.0
        %1858 = vmatpush1.msra.mxu0 0.0
        %1859 = vmatprep.subr.mxu0 0.0
        %1860 = vmatpush1.msra.mxu0 0.0
        %1861 = vmatprep.subr.mxu0 0.0
        %1862 = vmatpush1.msra.mxu0 0.0
        %1863 = vmatprep.mubr.f32.mxu0 0.0
        %1864 = vmatmul.mubr.f32.gmra.mrb[0].mxu0 %v1794
        %v1865 = vpop.f32.mrb[0].mxu0
        %v1866 = vadd.f32 %v1786, %v1865
        %v1867 = vpop.f32.mrb[0].mxu0
        %v1868 = vadd.f32 %v1786, %v1867
        %1869 = vmatprep.mubr.f32.mxu0 0.0
        %1870 = vmatmul.mubr.f32.gmra.mrb[0].mxu0 %v1797
        %v1871 = vpop.f32.mrb[0].mxu0
        %v1872 = vadd.f32 %v1791, %v1871
        %v1873 = vpop.f32.mrb[0].mxu0
        %v1874 = vadd.f32 %v1791, %v1873
        %1875 = vdwg.mxu0
        %1876 = vmatprep.subr.mxu0 0.0
        %1877 = vmatpush1.msra.mxu0 %v1773
        %1878 = vmatprep.subr.mxu0 0.0
        %1879 = vmatpush1.msra.mxu0 %v1776
        %1880 = vmatprep.subr.mxu0 0.0
        %1881 = vmatpush1.msra.mxu0 0.0
        %1882 = vmatprep.subr.mxu0 0.0
        %1883 = vmatpush1.msra.mxu0 0.0
        %1884 = vmatprep.subr.mxu0 0.0
        %1885 = vmatpush1.msra.mxu0 0.0
        %1886 = vmatprep.subr.mxu0 0.0
        %1887 = vmatpush1.msra.mxu0 0.0
        %1888 = vmatprep.subr.mxu0 0.0
        %1889 = vmatpush1.msra.mxu0 0.0
        %1890 = vmatprep.subr.mxu0 0.0
        %1891 = vmatpush1.msra.mxu0 0.0
        %1892 = vmatprep.subr.mxu0 0.0
        %1893 = vmatpush1.msra.mxu0 0.0
        %1894 = vmatprep.subr.mxu0 0.0
        %1895 = vmatpush1.msra.mxu0 0.0
        %1896 = vmatprep.subr.mxu0 0.0
        %1897 = vmatpush1.msra.mxu0 0.0
        %1898 = vmatprep.subr.mxu0 0.0
        %1899 = vmatpush1.msra.mxu0 0.0
        %1900 = vmatprep.subr.mxu0 0.0
        %1901 = vmatpush1.msra.mxu0 0.0
        %1902 = vmatprep.subr.mxu0 0.0
        %1903 = vmatpush1.msra.mxu0 0.0
        %1904 = vmatprep.subr.mxu0 0.0
        %1905 = vmatpush1.msra.mxu0 0.0
        %1906 = vmatprep.subr.mxu0 0.0
        %1907 = vmatpush1.msra.mxu0 0.0
        %1908 = vmatprep.subr.mxu0 0.0
        %1909 = vmatpush1.msra.mxu0 0.0
        %1910 = vmatprep.subr.mxu0 0.0
        %1911 = vmatpush1.msra.mxu0 0.0
        %1912 = vmatprep.subr.mxu0 0.0
        %1913 = vmatpush1.msra.mxu0 0.0
        %1914 = vmatprep.subr.mxu0 0.0
        %1915 = vmatpush1.msra.mxu0 0.0
        %1916 = vmatprep.subr.mxu0 0.0
        %1917 = vmatpush1.msra.mxu0 0.0
        %1918 = vmatprep.subr.mxu0 0.0
        %1919 = vmatpush1.msra.mxu0 0.0
        %1920 = vmatprep.subr.mxu0 0.0
        %1921 = vmatpush1.msra.mxu0 0.0
        %1922 = vmatprep.subr.mxu0 0.0
        %1923 = vmatpush1.msra.mxu0 0.0
        %1924 = vmatprep.subr.mxu0 0.0
        %1925 = vmatpush1.msra.mxu0 0.0
        %1926 = vmatprep.subr.mxu0 0.0
        %1927 = vmatpush1.msra.mxu0 0.0
        %1928 = vmatprep.subr.mxu0 0.0
        %1929 = vmatpush1.msra.mxu0 0.0
        %1930 = vmatprep.subr.mxu0 0.0
        %1931 = vmatpush1.msra.mxu0 0.0
        %1932 = vmatprep.subr.mxu0 0.0
        %1933 = vmatpush1.msra.mxu0 0.0
        %1934 = vmatprep.subr.mxu0 0.0
        %1935 = vmatpush1.msra.mxu0 0.0
        %1936 = vmatprep.subr.mxu0 0.0
        %1937 = vmatpush1.msra.mxu0 0.0
        %1938 = vmatprep.subr.mxu0 0.0
        %1939 = vmatpush1.msra.mxu0 0.0
        %1940 = vmatprep.mubr.f32.mxu0 0.0
        %1941 = vmatmul.mubr.f32.gmra.mrb[0].mxu0 %v1794
        %v1942 = vpop.f32.mrb[0].mxu0
        %v1943 = vadd.f32 %v1786, %v1942
        %v1944 = vpop.f32.mrb[0].mxu0
        %1945 = vmatprep.mubr.f32.mxu0 0.0
        %1946 = vmatmul.mubr.f32.gmra.mrb[0].mxu0 %v1797
        %v1947 = vpop.f32.mrb[0].mxu0
        %v1948 = vadd.f32 %v1791, %v1947
        %v1949 = vpop.f32.mrb[0].mxu0
        %1950 = vdwg.mxu0
        %v1951 = vadd.f32 %v1173, %v1866
        %v1952 = vadd.f32 %v1174, %v1868
        %v1953 = vadd.f32 %v1175, %v1943
        %v1954 = vadd.f32 %v1176, %v1872
        %v1955 = vadd.f32 %v1177, %v1874
        %v1956 = vadd.f32 %v1178, %v1948
        %v1957 = vmul.f32 %v1951, %v1149
        %v1958 = vmul.f32 %v1952, %v1153
        %v1959 = vmul.f32 %v1953, %v1157
        %v1960 = vmul.f32 %v1954, %v1149
        %v1961 = vmul.f32 %v1955, %v1153
        %v1962 = vmul.f32 %v1956, %v1157
        %1963 = vst [vmem:[#allocation2 + $0x8] sm:$0xff] %v1957
        %1964 = vst [vmem:[#allocation2 + $0x10] sm:$0xff] %v1958
        %1965 = vst [vmem:[#allocation2 + $0x18] sm:$0xff] %v1959
        %1966 = vst [vmem:[#allocation2 + $0x30] sm:$0xff] %v1960
        %1967 = vst [vmem:[#allocation2 + $0x38] sm:$0xff] %v1961
        %1968 = vst [vmem:[#allocation2 + $0x40] sm:$0xff] %v1962
        %v1969 = vld [vmem:[#allocation2 + $0x8] sm:$0xff]
        %v1970 = vld [vmem:[#allocation2 + $0x10] sm:$0xff]
        %v1971 = vld [vmem:[#allocation2 + $0x18] sm:$0xff]
        %v1972 = vld [vmem:[#allocation2 + $0x30] sm:$0xff]
        %v1973 = vld [vmem:[#allocation2 + $0x38] sm:$0xff]
        %v1974 = vld [vmem:[#allocation2 + $0x40] sm:$0xff]
        %v1975 = vld [vmem:[#allocation2] sm:$0xff]
        %v1976 = vld [vmem:[#allocation2 + $0x28] sm:$0xff]
        %v1977 = vld [vmem:[#allocation2 + $0x8] sm:$0xff]
        %v1978 = vld [vmem:[#allocation2 + $0x10] sm:$0xff]
        %v1979 = vld [vmem:[#allocation2 + $0x18] sm:$0xff]
        %v1980 = vld [vmem:[#allocation2 + $0x20] sm:$0xff]
        %v1981 = vld [vmem:[#allocation2 + $0x30] sm:$0xff]
        %v1982 = vld [vmem:[#allocation2 + $0x38] sm:$0xff]
        %v1983 = vld [vmem:[#allocation2 + $0x40] sm:$0xff]
        %v1984 = vld [vmem:[#allocation2 + $0x48] sm:$0xff]
        %s1985 = scalar_lea.vmem %s2, 96
        %v1986 = vld [vmem:[%s1985] sm:$0xff]
        %v1987 = vld [vmem:[%s1985 + $0x8] sm:$0xff]
        %s1988 = scalar_lea.vmem %s2, 112
        %v1989 = vld [vmem:[%s1988] sm:$0xff]
        %v1990 = vld [vmem:[%s1988 + $0x8] sm:$0xff]
        %v1992 = vsel %vm385, %v1989, 0
        %v1995 = vsel %vm385, %v1990, 0
        %1997 = vmatprep.subr.mxu0 %v1970
        %1998 = vmatpush1.msra.mxu0 %v1969
        %1999 = vmatprep.subr.mxu0 %v1973
        %2000 = vmatpush1.msra.mxu0 %v1972
        %2001 = vmatprep.subr.mxu0 0.0
        %2002 = vmatpush1.msra.mxu0 0.0
        %2003 = vmatprep.subr.mxu0 0.0
        %2004 = vmatpush1.msra.mxu0 0.0
        %2005 = vmatprep.subr.mxu0 0.0
        %2006 = vmatpush1.msra.mxu0 0.0
        %2007 = vmatprep.subr.mxu0 0.0
        %2008 = vmatpush1.msra.mxu0 0.0
        %2009 = vmatprep.subr.mxu0 0.0
        %2010 = vmatpush1.msra.mxu0 0.0
        %2011 = vmatprep.subr.mxu0 0.0
        %2012 = vmatpush1.msra.mxu0 0.0
        %2013 = vmatprep.subr.mxu0 0.0
        %2014 = vmatpush1.msra.mxu0 0.0
        %2015 = vmatprep.subr.mxu0 0.0
        %2016 = vmatpush1.msra.mxu0 0.0
        %2017 = vmatprep.subr.mxu0 0.0
        %2018 = vmatpush1.msra.mxu0 0.0
        %2019 = vmatprep.subr.mxu0 0.0
        %2020 = vmatpush1.msra.mxu0 0.0
        %2021 = vmatprep.subr.mxu0 0.0
        %2022 = vmatpush1.msra.mxu0 0.0
        %2023 = vmatprep.subr.mxu0 0.0
        %2024 = vmatpush1.msra.mxu0 0.0
        %2025 = vmatprep.subr.mxu0 0.0
        %2026 = vmatpush1.msra.mxu0 0.0
        %2027 = vmatprep.subr.mxu0 0.0
        %2028 = vmatpush1.msra.mxu0 0.0
        %2029 = vmatprep.subr.mxu0 0.0
        %2030 = vmatpush1.msra.mxu0 0.0
        %2031 = vmatprep.subr.mxu0 0.0
        %2032 = vmatpush1.msra.mxu0 0.0
        %2033 = vmatprep.subr.mxu0 0.0
        %2034 = vmatpush1.msra.mxu0 0.0
        %2035 = vmatprep.subr.mxu0 0.0
        %2036 = vmatpush1.msra.mxu0 0.0
        %2037 = vmatprep.subr.mxu0 0.0
        %2038 = vmatpush1.msra.mxu0 0.0
        %2039 = vmatprep.subr.mxu0 0.0
        %2040 = vmatpush1.msra.mxu0 0.0
        %2041 = vmatprep.subr.mxu0 0.0
        %2042 = vmatpush1.msra.mxu0 0.0
        %2043 = vmatprep.subr.mxu0 0.0
        %2044 = vmatpush1.msra.mxu0 0.0
        %2045 = vmatprep.subr.mxu0 0.0
        %2046 = vmatpush1.msra.mxu0 0.0
        %2047 = vmatprep.subr.mxu0 0.0
        %2048 = vmatpush1.msra.mxu0 0.0
        %2049 = vmatprep.subr.mxu0 0.0
        %2050 = vmatpush1.msra.mxu0 0.0
        %2051 = vmatprep.subr.mxu0 0.0
        %2052 = vmatpush1.msra.mxu0 0.0
        %2053 = vmatprep.subr.mxu0 0.0
        %2054 = vmatpush1.msra.mxu0 0.0
        %2055 = vmatprep.subr.mxu0 0.0
        %2056 = vmatpush1.msra.mxu0 0.0
        %2057 = vmatprep.subr.mxu0 0.0
        %2058 = vmatpush1.msra.mxu0 0.0
        %2059 = vmatprep.subr.mxu0 0.0
        %2060 = vmatpush1.msra.mxu0 0.0
        %2061 = vmatprep.mubr.f32.mxu0 0.0
        %2062 = vmatmul.mubr.f32.gmra.mrb[0].mxu0 %v1992
        %v2063 = vpop.f32.mrb[0].mxu0
        %v2064 = vadd.f32 0.0, %v2063
        %v2065 = vpop.f32.mrb[0].mxu0
        %v2066 = vadd.f32 0.0, %v2065
        %2067 = vmatprep.mubr.f32.mxu0 0.0
        %2068 = vmatmul.mubr.f32.gmra.mrb[0].mxu0 %v1995
        %v2069 = vpop.f32.mrb[0].mxu0
        %v2070 = vadd.f32 0.0, %v2069
        %v2071 = vpop.f32.mrb[0].mxu0
        %v2072 = vadd.f32 0.0, %v2071
        %2073 = vdwg.mxu0
        %2074 = vmatprep.subr.mxu0 0.0
        %2075 = vmatpush1.msra.mxu0 %v1971
        %2076 = vmatprep.subr.mxu0 0.0
        %2077 = vmatpush1.msra.mxu0 %v1974
        %2078 = vmatprep.subr.mxu0 0.0
        %2079 = vmatpush1.msra.mxu0 0.0
        %2080 = vmatprep.subr.mxu0 0.0
        %2081 = vmatpush1.msra.mxu0 0.0
        %2082 = vmatprep.subr.mxu0 0.0
        %2083 = vmatpush1.msra.mxu0 0.0
        %2084 = vmatprep.subr.mxu0 0.0
        %2085 = vmatpush1.msra.mxu0 0.0
        %2086 = vmatprep.subr.mxu0 0.0
        %2087 = vmatpush1.msra.mxu0 0.0
        %2088 = vmatprep.subr.mxu0 0.0
        %2089 = vmatpush1.msra.mxu0 0.0
        %2090 = vmatprep.subr.mxu0 0.0
        %2091 = vmatpush1.msra.mxu0 0.0
        %2092 = vmatprep.subr.mxu0 0.0
        %2093 = vmatpush1.msra.mxu0 0.0
        %2094 = vmatprep.subr.mxu0 0.0
        %2095 = vmatpush1.msra.mxu0 0.0
        %2096 = vmatprep.subr.mxu0 0.0
        %2097 = vmatpush1.msra.mxu0 0.0
        %2098 = vmatprep.subr.mxu0 0.0
        %2099 = vmatpush1.msra.mxu0 0.0
        %2100 = vmatprep.subr.mxu0 0.0
        %2101 = vmatpush1.msra.mxu0 0.0
        %2102 = vmatprep.subr.mxu0 0.0
        %2103 = vmatpush1.msra.mxu0 0.0
        %2104 = vmatprep.subr.mxu0 0.0
        %2105 = vmatpush1.msra.mxu0 0.0
        %2106 = vmatprep.subr.mxu0 0.0
        %2107 = vmatpush1.msra.mxu0 0.0
        %2108 = vmatprep.subr.mxu0 0.0
        %2109 = vmatpush1.msra.mxu0 0.0
        %2110 = vmatprep.subr.mxu0 0.0
        %2111 = vmatpush1.msra.mxu0 0.0
        %2112 = vmatprep.subr.mxu0 0.0
        %2113 = vmatpush1.msra.mxu0 0.0
        %2114 = vmatprep.subr.mxu0 0.0
        %2115 = vmatpush1.msra.mxu0 0.0
        %2116 = vmatprep.subr.mxu0 0.0
        %2117 = vmatpush1.msra.mxu0 0.0
        %2118 = vmatprep.subr.mxu0 0.0
        %2119 = vmatpush1.msra.mxu0 0.0
        %2120 = vmatprep.subr.mxu0 0.0
        %2121 = vmatpush1.msra.mxu0 0.0
        %2122 = vmatprep.subr.mxu0 0.0
        %2123 = vmatpush1.msra.mxu0 0.0
        %2124 = vmatprep.subr.mxu0 0.0
        %2125 = vmatpush1.msra.mxu0 0.0
        %2126 = vmatprep.subr.mxu0 0.0
        %2127 = vmatpush1.msra.mxu0 0.0
        %2128 = vmatprep.subr.mxu0 0.0
        %2129 = vmatpush1.msra.mxu0 0.0
        %2130 = vmatprep.subr.mxu0 0.0
        %2131 = vmatpush1.msra.mxu0 0.0
        %2132 = vmatprep.subr.mxu0 0.0
        %2133 = vmatpush1.msra.mxu0 0.0
        %2134 = vmatprep.subr.mxu0 0.0
        %2135 = vmatpush1.msra.mxu0 0.0
        %2136 = vmatprep.subr.mxu0 0.0
        %2137 = vmatpush1.msra.mxu0 0.0
        %2138 = vmatprep.mubr.f32.mxu0 0.0
        %2139 = vmatmul.mubr.f32.gmra.mrb[0].mxu0 %v1992
        %v2140 = vpop.f32.mrb[0].mxu0
        %v2141 = vadd.f32 0.0, %v2140
        %v2142 = vpop.f32.mrb[0].mxu0
        %2143 = vmatprep.mubr.f32.mxu0 0.0
        %2144 = vmatmul.mubr.f32.gmra.mrb[0].mxu0 %v1995
        %v2145 = vpop.f32.mrb[0].mxu0
        %v2146 = vadd.f32 0.0, %v2145
        %v2147 = vpop.f32.mrb[0].mxu0
        %2148 = vdwg.mxu0
        %2157 = vrot.lane.b32.xlu0 %v1975, 4
        %v2158 = vpop.permute.xlu0 %2157
        %2159 = vrot.lane.b32.xlu0 %v1969, 4
        %v2160 = vpop.permute.xlu0 %2159
        %2161 = vrot.lane.b32.xlu0 %v1970, 4
        %v2162 = vpop.permute.xlu0 %2161
        %2163 = vrot.lane.b32.xlu0 %v1971, 4
        %v2164 = vpop.permute.xlu0 %2163
        %2165 = vrot.lane.b32.xlu0 %v1976, 4
        %v2166 = vpop.permute.xlu0 %2165
        %2167 = vrot.lane.b32.xlu0 %v1972, 4
        %v2168 = vpop.permute.xlu0 %2167
        %2169 = vrot.lane.b32.xlu0 %v1973, 4
        %v2170 = vpop.permute.xlu0 %2169
        %2171 = vrot.lane.b32.xlu0 %v1974, 4
        %v2172 = vpop.permute.xlu0 %2171
        %vm2173 = vcmask 31744
        %v2174 = vsel %vm2173, %v2158, %v2160
        %v2175 = vsel %vm2173, %v2160, %v2162
        %v2176 = vsel %vm2173, %v2162, %v2164
        %v2177 = vsel %vm2173, %v2166, %v2168
        %v2178 = vsel %vm2173, %v2168, %v2170
        %v2179 = vsel %vm2173, %v2170, %v2172
        %v2187 = vsel %vm385, %v1986, 0
        %v2190 = vsel %vm385, %v1987, 0
        %2192 = vmatprep.subr.mxu0 %v2175
        %2193 = vmatpush1.msra.mxu0 %v2174
        %2194 = vmatprep.subr.mxu0 %v2178
        %2195 = vmatpush1.msra.mxu0 %v2177
        %2196 = vmatprep.subr.mxu0 0.0
        %2197 = vmatpush1.msra.mxu0 0.0
        %2198 = vmatprep.subr.mxu0 0.0
        %2199 = vmatpush1.msra.mxu0 0.0
        %2200 = vmatprep.subr.mxu0 0.0
        %2201 = vmatpush1.msra.mxu0 0.0
        %2202 = vmatprep.subr.mxu0 0.0
        %2203 = vmatpush1.msra.mxu0 0.0
        %2204 = vmatprep.subr.mxu0 0.0
        %2205 = vmatpush1.msra.mxu0 0.0
        %2206 = vmatprep.subr.mxu0 0.0
        %2207 = vmatpush1.msra.mxu0 0.0
        %2208 = vmatprep.subr.mxu0 0.0
        %2209 = vmatpush1.msra.mxu0 0.0
        %2210 = vmatprep.subr.mxu0 0.0
        %2211 = vmatpush1.msra.mxu0 0.0
        %2212 = vmatprep.subr.mxu0 0.0
        %2213 = vmatpush1.msra.mxu0 0.0
        %2214 = vmatprep.subr.mxu0 0.0
        %2215 = vmatpush1.msra.mxu0 0.0
        %2216 = vmatprep.subr.mxu0 0.0
        %2217 = vmatpush1.msra.mxu0 0.0
        %2218 = vmatprep.subr.mxu0 0.0
        %2219 = vmatpush1.msra.mxu0 0.0
        %2220 = vmatprep.subr.mxu0 0.0
        %2221 = vmatpush1.msra.mxu0 0.0
        %2222 = vmatprep.subr.mxu0 0.0
        %2223 = vmatpush1.msra.mxu0 0.0
        %2224 = vmatprep.subr.mxu0 0.0
        %2225 = vmatpush1.msra.mxu0 0.0
        %2226 = vmatprep.subr.mxu0 0.0
        %2227 = vmatpush1.msra.mxu0 0.0
        %2228 = vmatprep.subr.mxu0 0.0
        %2229 = vmatpush1.msra.mxu0 0.0
        %2230 = vmatprep.subr.mxu0 0.0
        %2231 = vmatpush1.msra.mxu0 0.0
        %2232 = vmatprep.subr.mxu0 0.0
        %2233 = vmatpush1.msra.mxu0 0.0
        %2234 = vmatprep.subr.mxu0 0.0
        %2235 = vmatpush1.msra.mxu0 0.0
        %2236 = vmatprep.subr.mxu0 0.0
        %2237 = vmatpush1.msra.mxu0 0.0
        %2238 = vmatprep.subr.mxu0 0.0
        %2239 = vmatpush1.msra.mxu0 0.0
        %2240 = vmatprep.subr.mxu0 0.0
        %2241 = vmatpush1.msra.mxu0 0.0
        %2242 = vmatprep.subr.mxu0 0.0
        %2243 = vmatpush1.msra.mxu0 0.0
        %2244 = vmatprep.subr.mxu0 0.0
        %2245 = vmatpush1.msra.mxu0 0.0
        %2246 = vmatprep.subr.mxu0 0.0
        %2247 = vmatpush1.msra.mxu0 0.0
        %2248 = vmatprep.subr.mxu0 0.0
        %2249 = vmatpush1.msra.mxu0 0.0
        %2250 = vmatprep.subr.mxu0 0.0
        %2251 = vmatpush1.msra.mxu0 0.0
        %2252 = vmatprep.subr.mxu0 0.0
        %2253 = vmatpush1.msra.mxu0 0.0
        %2254 = vmatprep.subr.mxu0 0.0
        %2255 = vmatpush1.msra.mxu0 0.0
        %2256 = vmatprep.mubr.f32.mxu0 0.0
        %2257 = vmatmul.mubr.f32.gmra.mrb[0].mxu0 %v2187
        %v2258 = vpop.f32.mrb[0].mxu0
        %v2259 = vadd.f32 %v2064, %v2258
        %v2260 = vpop.f32.mrb[0].mxu0
        %v2261 = vadd.f32 %v2066, %v2260
        %2262 = vmatprep.mubr.f32.mxu0 0.0
        %2263 = vmatmul.mubr.f32.gmra.mrb[0].mxu0 %v2190
        %v2264 = vpop.f32.mrb[0].mxu0
        %v2265 = vadd.f32 %v2070, %v2264
        %v2266 = vpop.f32.mrb[0].mxu0
        %v2267 = vadd.f32 %v2072, %v2266
        %2268 = vdwg.mxu0
        %2269 = vmatprep.subr.mxu0 0.0
        %2270 = vmatpush1.msra.mxu0 %v2176
        %2271 = vmatprep.subr.mxu0 0.0
        %2272 = vmatpush1.msra.mxu0 %v2179
        %2273 = vmatprep.subr.mxu0 0.0
        %2274 = vmatpush1.msra.mxu0 0.0
        %2275 = vmatprep.subr.mxu0 0.0
        %2276 = vmatpush1.msra.mxu0 0.0
        %2277 = vmatprep.subr.mxu0 0.0
        %2278 = vmatpush1.msra.mxu0 0.0
        %2279 = vmatprep.subr.mxu0 0.0
        %2280 = vmatpush1.msra.mxu0 0.0
        %2281 = vmatprep.subr.mxu0 0.0
        %2282 = vmatpush1.msra.mxu0 0.0
        %2283 = vmatprep.subr.mxu0 0.0
        %2284 = vmatpush1.msra.mxu0 0.0
        %2285 = vmatprep.subr.mxu0 0.0
        %2286 = vmatpush1.msra.mxu0 0.0
        %2287 = vmatprep.subr.mxu0 0.0
        %2288 = vmatpush1.msra.mxu0 0.0
        %2289 = vmatprep.subr.mxu0 0.0
        %2290 = vmatpush1.msra.mxu0 0.0
        %2291 = vmatprep.subr.mxu0 0.0
        %2292 = vmatpush1.msra.mxu0 0.0
        %2293 = vmatprep.subr.mxu0 0.0
        %2294 = vmatpush1.msra.mxu0 0.0
        %2295 = vmatprep.subr.mxu0 0.0
        %2296 = vmatpush1.msra.mxu0 0.0
        %2297 = vmatprep.subr.mxu0 0.0
        %2298 = vmatpush1.msra.mxu0 0.0
        %2299 = vmatprep.subr.mxu0 0.0
        %2300 = vmatpush1.msra.mxu0 0.0
        %2301 = vmatprep.subr.mxu0 0.0
        %2302 = vmatpush1.msra.mxu0 0.0
        %2303 = vmatprep.subr.mxu0 0.0
        %2304 = vmatpush1.msra.mxu0 0.0
        %2305 = vmatprep.subr.mxu0 0.0
        %2306 = vmatpush1.msra.mxu0 0.0
        %2307 = vmatprep.subr.mxu0 0.0
        %2308 = vmatpush1.msra.mxu0 0.0
        %2309 = vmatprep.subr.mxu0 0.0
        %2310 = vmatpush1.msra.mxu0 0.0
        %2311 = vmatprep.subr.mxu0 0.0
        %2312 = vmatpush1.msra.mxu0 0.0
        %2313 = vmatprep.subr.mxu0 0.0
        %2314 = vmatpush1.msra.mxu0 0.0
        %2315 = vmatprep.subr.mxu0 0.0
        %2316 = vmatpush1.msra.mxu0 0.0
        %2317 = vmatprep.subr.mxu0 0.0
        %2318 = vmatpush1.msra.mxu0 0.0
        %2319 = vmatprep.subr.mxu0 0.0
        %2320 = vmatpush1.msra.mxu0 0.0
        %2321 = vmatprep.subr.mxu0 0.0
        %2322 = vmatpush1.msra.mxu0 0.0
        %2323 = vmatprep.subr.mxu0 0.0
        %2324 = vmatpush1.msra.mxu0 0.0
        %2325 = vmatprep.subr.mxu0 0.0
        %2326 = vmatpush1.msra.mxu0 0.0
        %2327 = vmatprep.subr.mxu0 0.0
        %2328 = vmatpush1.msra.mxu0 0.0
        %2329 = vmatprep.subr.mxu0 0.0
        %2330 = vmatpush1.msra.mxu0 0.0
        %2331 = vmatprep.subr.mxu0 0.0
        %2332 = vmatpush1.msra.mxu0 0.0
        %2333 = vmatprep.mubr.f32.mxu0 0.0
        %2334 = vmatmul.mubr.f32.gmra.mrb[0].mxu0 %v2187
        %v2335 = vpop.f32.mrb[0].mxu0
        %v2336 = vadd.f32 %v2141, %v2335
        %v2337 = vpop.f32.mrb[0].mxu0
        %2338 = vmatprep.mubr.f32.mxu0 0.0
        %2339 = vmatmul.mubr.f32.gmra.mrb[0].mxu0 %v2190
        %v2340 = vpop.f32.mrb[0].mxu0
        %v2341 = vadd.f32 %v2146, %v2340
        %v2342 = vpop.f32.mrb[0].mxu0
        %2343 = vdwg.mxu0
        %s2344 = scalar_lea.vmem %s2, 128
        %v2345 = vld [vmem:[%s2344] sm:$0xff]
        %v2346 = vld [vmem:[%s2344 + $0x8] sm:$0xff]
        %2355 = vrot.lane.b32.xlu0 %v1977, 124
        %v2356 = vpop.permute.xlu0 %2355
        %2357 = vrot.lane.b32.xlu0 %v1978, 124
        %v2358 = vpop.permute.xlu0 %2357
        %2359 = vrot.lane.b32.xlu0 %v1979, 124
        %v2360 = vpop.permute.xlu0 %2359
        %2361 = vrot.lane.b32.xlu0 %v1980, 124
        %v2362 = vpop.permute.xlu0 %2361
        %2363 = vrot.lane.b32.xlu0 %v1981, 124
        %v2364 = vpop.permute.xlu0 %2363
        %2365 = vrot.lane.b32.xlu0 %v1982, 124
        %v2366 = vpop.permute.xlu0 %2365
        %2367 = vrot.lane.b32.xlu0 %v1983, 124
        %v2368 = vpop.permute.xlu0 %2367
        %2369 = vrot.lane.b32.xlu0 %v1984, 124
        %v2370 = vpop.permute.xlu0 %2369
        %vm2371 = vcmask 1014784
        %v2372 = vsel %vm2371, %v2356, %v2358
        %v2373 = vsel %vm2371, %v2358, %v2360
        %v2374 = vsel %vm2371, %v2360, %v2362
        %v2375 = vsel %vm2371, %v2364, %v2366
        %v2376 = vsel %vm2371, %v2366, %v2368
        %v2377 = vsel %vm2371, %v2368, %v2370
        %v2385 = vsel %vm385, %v2345, 0
        %v2388 = vsel %vm385, %v2346, 0
        %2390 = vmatprep.subr.mxu0 %v2373
        %2391 = vmatpush1.msra.mxu0 %v2372
        %2392 = vmatprep.subr.mxu0 %v2376
        %2393 = vmatpush1.msra.mxu0 %v2375
        %2394 = vmatprep.subr.mxu0 0.0
        %2395 = vmatpush1.msra.mxu0 0.0
        %2396 = vmatprep.subr.mxu0 0.0
        %2397 = vmatpush1.msra.mxu0 0.0
        %2398 = vmatprep.subr.mxu0 0.0
        %2399 = vmatpush1.msra.mxu0 0.0
        %2400 = vmatprep.subr.mxu0 0.0
        %2401 = vmatpush1.msra.mxu0 0.0
        %2402 = vmatprep.subr.mxu0 0.0
        %2403 = vmatpush1.msra.mxu0 0.0
        %2404 = vmatprep.subr.mxu0 0.0
        %2405 = vmatpush1.msra.mxu0 0.0
        %2406 = vmatprep.subr.mxu0 0.0
        %2407 = vmatpush1.msra.mxu0 0.0
        %2408 = vmatprep.subr.mxu0 0.0
        %2409 = vmatpush1.msra.mxu0 0.0
        %2410 = vmatprep.subr.mxu0 0.0
        %2411 = vmatpush1.msra.mxu0 0.0
        %2412 = vmatprep.subr.mxu0 0.0
        %2413 = vmatpush1.msra.mxu0 0.0
        %2414 = vmatprep.subr.mxu0 0.0
        %2415 = vmatpush1.msra.mxu0 0.0
        %2416 = vmatprep.subr.mxu0 0.0
        %2417 = vmatpush1.msra.mxu0 0.0
        %2418 = vmatprep.subr.mxu0 0.0
        %2419 = vmatpush1.msra.mxu0 0.0
        %2420 = vmatprep.subr.mxu0 0.0
        %2421 = vmatpush1.msra.mxu0 0.0
        %2422 = vmatprep.subr.mxu0 0.0
        %2423 = vmatpush1.msra.mxu0 0.0
        %2424 = vmatprep.subr.mxu0 0.0
        %2425 = vmatpush1.msra.mxu0 0.0
        %2426 = vmatprep.subr.mxu0 0.0
        %2427 = vmatpush1.msra.mxu0 0.0
        %2428 = vmatprep.subr.mxu0 0.0
        %2429 = vmatpush1.msra.mxu0 0.0
        %2430 = vmatprep.subr.mxu0 0.0
        %2431 = vmatpush1.msra.mxu0 0.0
        %2432 = vmatprep.subr.mxu0 0.0
        %2433 = vmatpush1.msra.mxu0 0.0
        %2434 = vmatprep.subr.mxu0 0.0
        %2435 = vmatpush1.msra.mxu0 0.0
        %2436 = vmatprep.subr.mxu0 0.0
        %2437 = vmatpush1.msra.mxu0 0.0
        %2438 = vmatprep.subr.mxu0 0.0
        %2439 = vmatpush1.msra.mxu0 0.0
        %2440 = vmatprep.subr.mxu0 0.0
        %2441 = vmatpush1.msra.mxu0 0.0
        %2442 = vmatprep.subr.mxu0 0.0
        %2443 = vmatpush1.msra.mxu0 0.0
        %2444 = vmatprep.subr.mxu0 0.0
        %2445 = vmatpush1.msra.mxu0 0.0
        %2446 = vmatprep.subr.mxu0 0.0
        %2447 = vmatpush1.msra.mxu0 0.0
        %2448 = vmatprep.subr.mxu0 0.0
        %2449 = vmatpush1.msra.mxu0 0.0
        %2450 = vmatprep.subr.mxu0 0.0
        %2451 = vmatpush1.msra.mxu0 0.0
        %2452 = vmatprep.subr.mxu0 0.0
        %2453 = vmatpush1.msra.mxu0 0.0
        %2454 = vmatprep.mubr.f32.mxu0 0.0
        %2455 = vmatmul.mubr.f32.gmra.mrb[0].mxu0 %v2385
        %v2456 = vpop.f32.mrb[0].mxu0
        %v2457 = vadd.f32 0.0, %v2456
        %v2458 = vpop.f32.mrb[0].mxu0
        %v2459 = vadd.f32 0.0, %v2458
        %2460 = vmatprep.mubr.f32.mxu0 0.0
        %2461 = vmatmul.mubr.f32.gmra.mrb[0].mxu0 %v2388
        %v2462 = vpop.f32.mrb[0].mxu0
        %v2463 = vadd.f32 0.0, %v2462
        %v2464 = vpop.f32.mrb[0].mxu0
        %v2465 = vadd.f32 0.0, %v2464
        %2466 = vdwg.mxu0
        %2467 = vmatprep.subr.mxu0 0.0
        %2468 = vmatpush1.msra.mxu0 %v2374
        %2469 = vmatprep.subr.mxu0 0.0
        %2470 = vmatpush1.msra.mxu0 %v2377
        %2471 = vmatprep.subr.mxu0 0.0
        %2472 = vmatpush1.msra.mxu0 0.0
        %2473 = vmatprep.subr.mxu0 0.0
        %2474 = vmatpush1.msra.mxu0 0.0
        %2475 = vmatprep.subr.mxu0 0.0
        %2476 = vmatpush1.msra.mxu0 0.0
        %2477 = vmatprep.subr.mxu0 0.0
        %2478 = vmatpush1.msra.mxu0 0.0
        %2479 = vmatprep.subr.mxu0 0.0
        %2480 = vmatpush1.msra.mxu0 0.0
        %2481 = vmatprep.subr.mxu0 0.0
        %2482 = vmatpush1.msra.mxu0 0.0
        %2483 = vmatprep.subr.mxu0 0.0
        %2484 = vmatpush1.msra.mxu0 0.0
        %2485 = vmatprep.subr.mxu0 0.0
        %2486 = vmatpush1.msra.mxu0 0.0
        %2487 = vmatprep.subr.mxu0 0.0
        %2488 = vmatpush1.msra.mxu0 0.0
        %2489 = vmatprep.subr.mxu0 0.0
        %2490 = vmatpush1.msra.mxu0 0.0
        %2491 = vmatprep.subr.mxu0 0.0
        %2492 = vmatpush1.msra.mxu0 0.0
        %2493 = vmatprep.subr.mxu0 0.0
        %2494 = vmatpush1.msra.mxu0 0.0
        %2495 = vmatprep.subr.mxu0 0.0
        %2496 = vmatpush1.msra.mxu0 0.0
        %2497 = vmatprep.subr.mxu0 0.0
        %2498 = vmatpush1.msra.mxu0 0.0
        %2499 = vmatprep.subr.mxu0 0.0
        %2500 = vmatpush1.msra.mxu0 0.0
        %2501 = vmatprep.subr.mxu0 0.0
        %2502 = vmatpush1.msra.mxu0 0.0
        %2503 = vmatprep.subr.mxu0 0.0
        %2504 = vmatpush1.msra.mxu0 0.0
        %2505 = vmatprep.subr.mxu0 0.0
        %2506 = vmatpush1.msra.mxu0 0.0
        %2507 = vmatprep.subr.mxu0 0.0
        %2508 = vmatpush1.msra.mxu0 0.0
        %2509 = vmatprep.subr.mxu0 0.0
        %2510 = vmatpush1.msra.mxu0 0.0
        %2511 = vmatprep.subr.mxu0 0.0
        %2512 = vmatpush1.msra.mxu0 0.0
        %2513 = vmatprep.subr.mxu0 0.0
        %2514 = vmatpush1.msra.mxu0 0.0
        %2515 = vmatprep.subr.mxu0 0.0
        %2516 = vmatpush1.msra.mxu0 0.0
        %2517 = vmatprep.subr.mxu0 0.0
        %2518 = vmatpush1.msra.mxu0 0.0
        %2519 = vmatprep.subr.mxu0 0.0
        %2520 = vmatpush1.msra.mxu0 0.0
        %2521 = vmatprep.subr.mxu0 0.0
        %2522 = vmatpush1.msra.mxu0 0.0
        %2523 = vmatprep.subr.mxu0 0.0
        %2524 = vmatpush1.msra.mxu0 0.0
        %2525 = vmatprep.subr.mxu0 0.0
        %2526 = vmatpush1.msra.mxu0 0.0
        %2527 = vmatprep.subr.mxu0 0.0
        %2528 = vmatpush1.msra.mxu0 0.0
        %2529 = vmatprep.subr.mxu0 0.0
        %2530 = vmatpush1.msra.mxu0 0.0
        %2531 = vmatprep.mubr.f32.mxu0 0.0
        %2532 = vmatmul.mubr.f32.gmra.mrb[0].mxu0 %v2385
        %v2533 = vpop.f32.mrb[0].mxu0
        %v2534 = vadd.f32 0.0, %v2533
        %v2535 = vpop.f32.mrb[0].mxu0
        %2536 = vmatprep.mubr.f32.mxu0 0.0
        %2537 = vmatmul.mubr.f32.gmra.mrb[0].mxu0 %v2388
        %v2538 = vpop.f32.mrb[0].mxu0
        %v2539 = vadd.f32 0.0, %v2538
        %v2540 = vpop.f32.mrb[0].mxu0
        %2541 = vdwg.mxu0
        %v2542 = vadd.f32 %v2259, %v2457
        %v2543 = vadd.f32 %v2261, %v2459
        %v2544 = vadd.f32 %v2336, %v2534
        %v2545 = vadd.f32 %v2265, %v2463
        %v2546 = vadd.f32 %v2267, %v2465
        %v2547 = vadd.f32 %v2341, %v2539
        %s2548 = scalar_lea.vmem %s3, 32
        %v2549 = vld [vmem:[%s2548] sm:$0xff]
        %v2550 = vld [vmem:[%s2548 + $0x8] sm:$0xff]
        %2552 = vset.pattern.permute.xlu0 0
        %2553 = vperm.xlu0 %2552, %v2549
        %v2554 = vpop.permute.xlu0 %2553
        %2557 = vset.pattern.permute.xlu0 0
        %2558 = vperm.xlu0 %2557, %v2550
        %v2559 = vpop.permute.xlu0 %2558
        %v2561 = vadd.f32 %v2542, %v2554
        %v2562 = vadd.f32 %v2543, %v2554
        %v2563 = vadd.f32 %v2544, %v2554
        %v2564 = vadd.f32 %v2545, %v2559
        %v2565 = vadd.f32 %v2546, %v2559
        %v2566 = vadd.f32 %v2547, %v2559
        %v2567 = vmax.f32 %v2561, 0.0
        %v2568 = vmax.f32 %v2562, 0.0
        %v2569 = vmax.f32 %v2563, 0.0
        %v2570 = vmax.f32 %v2564, 0.0
        %v2571 = vmax.f32 %v2565, 0.0
        %v2572 = vmax.f32 %v2566, 0.0
        %s2573 = scalar_lea.vmem %s4, 32
        %v2574 = vld [vmem:[%s2573] sm:$0xff]
        %v2575 = vld [vmem:[%s2573 + $0x8] sm:$0xff]
        %s2576 = scalar_lea.vmem %s5, 32
        %v2577 = vld [vmem:[%s2576] sm:$0xff]
        %v2578 = vld [vmem:[%s2576 + $0x8] sm:$0xff]
        %2580 = vset.pattern.permute.xlu0 0
        %2581 = vperm.xlu0 %2580, %v2577
        %v2582 = vpop.permute.xlu0 %2581
        %2585 = vset.pattern.permute.xlu0 0
        %2586 = vperm.xlu0 %2585, %v2578
        %v2587 = vpop.permute.xlu0 %2586
        %v2590 = vsel %vm385, %v2574, 0
        %v2593 = vsel %vm385, %v2575, 0
        %2595 = vmatprep.subr.mxu0 %v2568
        %2596 = vmatpush1.msra.mxu0 %v2567
        %2597 = vmatprep.subr.mxu0 %v2571
        %2598 = vmatpush1.msra.mxu0 %v2570
        %2599 = vmatprep.subr.mxu0 0.0
        %2600 = vmatpush1.msra.mxu0 0.0
        %2601 = vmatprep.subr.mxu0 0.0
        %2602 = vmatpush1.msra.mxu0 0.0
        %2603 = vmatprep.subr.mxu0 0.0
        %2604 = vmatpush1.msra.mxu0 0.0
        %2605 = vmatprep.subr.mxu0 0.0
        %2606 = vmatpush1.msra.mxu0 0.0
        %2607 = vmatprep.subr.mxu0 0.0
        %2608 = vmatpush1.msra.mxu0 0.0
        %2609 = vmatprep.subr.mxu0 0.0
        %2610 = vmatpush1.msra.mxu0 0.0
        %2611 = vmatprep.subr.mxu0 0.0
        %2612 = vmatpush1.msra.mxu0 0.0
        %2613 = vmatprep.subr.mxu0 0.0
        %2614 = vmatpush1.msra.mxu0 0.0
        %2615 = vmatprep.subr.mxu0 0.0
        %2616 = vmatpush1.msra.mxu0 0.0
        %2617 = vmatprep.subr.mxu0 0.0
        %2618 = vmatpush1.msra.mxu0 0.0
        %2619 = vmatprep.subr.mxu0 0.0
        %2620 = vmatpush1.msra.mxu0 0.0
        %2621 = vmatprep.subr.mxu0 0.0
        %2622 = vmatpush1.msra.mxu0 0.0
        %2623 = vmatprep.subr.mxu0 0.0
        %2624 = vmatpush1.msra.mxu0 0.0
        %2625 = vmatprep.subr.mxu0 0.0
        %2626 = vmatpush1.msra.mxu0 0.0
        %2627 = vmatprep.subr.mxu0 0.0
        %2628 = vmatpush1.msra.mxu0 0.0
        %2629 = vmatprep.subr.mxu0 0.0
        %2630 = vmatpush1.msra.mxu0 0.0
        %2631 = vmatprep.subr.mxu0 0.0
        %2632 = vmatpush1.msra.mxu0 0.0
        %2633 = vmatprep.subr.mxu0 0.0
        %2634 = vmatpush1.msra.mxu0 0.0
        %2635 = vmatprep.subr.mxu0 0.0
        %2636 = vmatpush1.msra.mxu0 0.0
        %2637 = vmatprep.subr.mxu0 0.0
        %2638 = vmatpush1.msra.mxu0 0.0
        %2639 = vmatprep.subr.mxu0 0.0
        %2640 = vmatpush1.msra.mxu0 0.0
        %2641 = vmatprep.subr.mxu0 0.0
        %2642 = vmatpush1.msra.mxu0 0.0
        %2643 = vmatprep.subr.mxu0 0.0
        %2644 = vmatpush1.msra.mxu0 0.0
        %2645 = vmatprep.subr.mxu0 0.0
        %2646 = vmatpush1.msra.mxu0 0.0
        %2647 = vmatprep.subr.mxu0 0.0
        %2648 = vmatpush1.msra.mxu0 0.0
        %2649 = vmatprep.subr.mxu0 0.0
        %2650 = vmatpush1.msra.mxu0 0.0
        %2651 = vmatprep.subr.mxu0 0.0
        %2652 = vmatpush1.msra.mxu0 0.0
        %2653 = vmatprep.subr.mxu0 0.0
        %2654 = vmatpush1.msra.mxu0 0.0
        %2655 = vmatprep.subr.mxu0 0.0
        %2656 = vmatpush1.msra.mxu0 0.0
        %2657 = vmatprep.subr.mxu0 0.0
        %2658 = vmatpush1.msra.mxu0 0.0
        %2659 = vmatprep.mubr.f32.mxu0 0.0
        %2660 = vmatmul.mubr.f32.gmra.mrb[0].mxu0 %v2590
        %v2661 = vpop.f32.mrb[0].mxu0
        %v2662 = vadd.f32 %v2582, %v2661
        %v2663 = vpop.f32.mrb[0].mxu0
        %v2664 = vadd.f32 %v2582, %v2663
        %2665 = vmatprep.mubr.f32.mxu0 0.0
        %2666 = vmatmul.mubr.f32.gmra.mrb[0].mxu0 %v2593
        %v2667 = vpop.f32.mrb[0].mxu0
        %v2668 = vadd.f32 %v2587, %v2667
        %v2669 = vpop.f32.mrb[0].mxu0
        %v2670 = vadd.f32 %v2587, %v2669
        %2671 = vdwg.mxu0
        %2672 = vmatprep.subr.mxu0 0.0
        %2673 = vmatpush1.msra.mxu0 %v2569
        %2674 = vmatprep.subr.mxu0 0.0
        %2675 = vmatpush1.msra.mxu0 %v2572
        %2676 = vmatprep.subr.mxu0 0.0
        %2677 = vmatpush1.msra.mxu0 0.0
        %2678 = vmatprep.subr.mxu0 0.0
        %2679 = vmatpush1.msra.mxu0 0.0
        %2680 = vmatprep.subr.mxu0 0.0
        %2681 = vmatpush1.msra.mxu0 0.0
        %2682 = vmatprep.subr.mxu0 0.0
        %2683 = vmatpush1.msra.mxu0 0.0
        %2684 = vmatprep.subr.mxu0 0.0
        %2685 = vmatpush1.msra.mxu0 0.0
        %2686 = vmatprep.subr.mxu0 0.0
        %2687 = vmatpush1.msra.mxu0 0.0
        %2688 = vmatprep.subr.mxu0 0.0
        %2689 = vmatpush1.msra.mxu0 0.0
        %2690 = vmatprep.subr.mxu0 0.0
        %2691 = vmatpush1.msra.mxu0 0.0
        %2692 = vmatprep.subr.mxu0 0.0
        %2693 = vmatpush1.msra.mxu0 0.0
        %2694 = vmatprep.subr.mxu0 0.0
        %2695 = vmatpush1.msra.mxu0 0.0
        %2696 = vmatprep.subr.mxu0 0.0
        %2697 = vmatpush1.msra.mxu0 0.0
        %2698 = vmatprep.subr.mxu0 0.0
        %2699 = vmatpush1.msra.mxu0 0.0
        %2700 = vmatprep.subr.mxu0 0.0
        %2701 = vmatpush1.msra.mxu0 0.0
        %2702 = vmatprep.subr.mxu0 0.0
        %2703 = vmatpush1.msra.mxu0 0.0
        %2704 = vmatprep.subr.mxu0 0.0
        %2705 = vmatpush1.msra.mxu0 0.0
        %2706 = vmatprep.subr.mxu0 0.0
        %2707 = vmatpush1.msra.mxu0 0.0
        %2708 = vmatprep.subr.mxu0 0.0
        %2709 = vmatpush1.msra.mxu0 0.0
        %2710 = vmatprep.subr.mxu0 0.0
        %2711 = vmatpush1.msra.mxu0 0.0
        %2712 = vmatprep.subr.mxu0 0.0
        %2713 = vmatpush1.msra.mxu0 0.0
        %2714 = vmatprep.subr.mxu0 0.0
        %2715 = vmatpush1.msra.mxu0 0.0
        %2716 = vmatprep.subr.mxu0 0.0
        %2717 = vmatpush1.msra.mxu0 0.0
        %2718 = vmatprep.subr.mxu0 0.0
        %2719 = vmatpush1.msra.mxu0 0.0
        %2720 = vmatprep.subr.mxu0 0.0
        %2721 = vmatpush1.msra.mxu0 0.0
        %2722 = vmatprep.subr.mxu0 0.0
        %2723 = vmatpush1.msra.mxu0 0.0
        %2724 = vmatprep.subr.mxu0 0.0
        %2725 = vmatpush1.msra.mxu0 0.0
        %2726 = vmatprep.subr.mxu0 0.0
        %2727 = vmatpush1.msra.mxu0 0.0
        %2728 = vmatprep.subr.mxu0 0.0
        %2729 = vmatpush1.msra.mxu0 0.0
        %2730 = vmatprep.subr.mxu0 0.0
        %2731 = vmatpush1.msra.mxu0 0.0
        %2732 = vmatprep.subr.mxu0 0.0
        %2733 = vmatpush1.msra.mxu0 0.0
        %2734 = vmatprep.subr.mxu0 0.0
        %2735 = vmatpush1.msra.mxu0 0.0
        %2736 = vmatprep.mubr.f32.mxu0 0.0
        %2737 = vmatmul.mubr.f32.gmra.mrb[0].mxu0 %v2590
        %v2738 = vpop.f32.mrb[0].mxu0
        %v2739 = vadd.f32 %v2582, %v2738
        %v2740 = vpop.f32.mrb[0].mxu0
        %2741 = vmatprep.mubr.f32.mxu0 0.0
        %2742 = vmatmul.mubr.f32.gmra.mrb[0].mxu0 %v2593
        %v2743 = vpop.f32.mrb[0].mxu0
        %v2744 = vadd.f32 %v2587, %v2743
        %v2745 = vpop.f32.mrb[0].mxu0
        %2746 = vdwg.mxu0
        %v2747 = vadd.f32 %v1969, %v2662
        %v2748 = vadd.f32 %v1970, %v2664
        %v2749 = vadd.f32 %v1971, %v2739
        %v2750 = vadd.f32 %v1972, %v2668
        %v2751 = vadd.f32 %v1973, %v2670
        %v2752 = vadd.f32 %v1974, %v2744
        %v2753 = vmul.f32 %v2747, %v1149
        %v2754 = vmul.f32 %v2748, %v1153
        %v2755 = vmul.f32 %v2749, %v1157
        %v2756 = vmul.f32 %v2750, %v1149
        %v2757 = vmul.f32 %v2751, %v1153
        %v2758 = vmul.f32 %v2752, %v1157
        %2759 = vst [vmem:[#allocation2 + $0x8] sm:$0xff] %v2753
        %2760 = vst [vmem:[#allocation2 + $0x10] sm:$0xff] %v2754
        %2761 = vst [vmem:[#allocation2 + $0x18] sm:$0xff] %v2755
        %2762 = vst [vmem:[#allocation2 + $0x30] sm:$0xff] %v2756
        %2763 = vst [vmem:[#allocation2 + $0x38] sm:$0xff] %v2757
        %2764 = vst [vmem:[#allocation2 + $0x40] sm:$0xff] %v2758
        %v2765 = vld [vmem:[#allocation2 + $0x10] sm:$0xff]
        %v2766 = vld [vmem:[#allocation2 + $0x38] sm:$0xff]
        %v2767 = vld [vmem:[#allocation3 + $0x1] sm:$0x1]
        %v2768 = vld [vmem:[%s6] sm:$0xff]
        %v2769 = vld [vmem:[%s6 + $0x8] sm:$0x3]
        %v2770 = vld [vmem:[%s7] sm:$0xff]
        %v2771 = vld [vmem:[%s7 + $0x8] sm:$0x3]
        %2773 = vset.pattern.permute.xlu0 0
        %2774 = vperm.xlu0 %2773, %v2770
        %v2775 = vpop.permute.xlu0 %2774
        %2778 = vset.pattern.permute.xlu0 0
        %2779 = vperm.xlu0 %2778, %v2771
        %v2780 = vpop.permute.xlu0 %2779
        %v2783 = vsel %vm385, %v2768, 0
        %v2786 = vsel %vm385, %v2769, 0
        %2788 = vmatprep.subr.mxu0 0.0
        %2789 = vmatpush1.msra.mxu0 %v2765
        %2790 = vmatprep.subr.mxu0 0.0
        %2791 = vmatpush1.msra.mxu0 %v2766
        %2792 = vmatprep.subr.mxu0 0.0
        %2793 = vmatpush1.msra.mxu0 0.0
        %2794 = vmatprep.subr.mxu0 0.0
        %2795 = vmatpush1.msra.mxu0 0.0
        %2796 = vmatprep.subr.mxu0 0.0
        %2797 = vmatpush1.msra.mxu0 0.0
        %2798 = vmatprep.subr.mxu0 0.0
        %2799 = vmatpush1.msra.mxu0 0.0
        %2800 = vmatprep.subr.mxu0 0.0
        %2801 = vmatpush1.msra.mxu0 0.0
        %2802 = vmatprep.subr.mxu0 0.0
        %2803 = vmatpush1.msra.mxu0 0.0
        %2804 = vmatprep.subr.mxu0 0.0
        %2805 = vmatpush1.msra.mxu0 0.0
        %2806 = vmatprep.subr.mxu0 0.0
        %2807 = vmatpush1.msra.mxu0 0.0
        %2808 = vmatprep.subr.mxu0 0.0
        %2809 = vmatpush1.msra.mxu0 0.0
        %2810 = vmatprep.subr.mxu0 0.0
        %2811 = vmatpush1.msra.mxu0 0.0
        %2812 = vmatprep.subr.mxu0 0.0
        %2813 = vmatpush1.msra.mxu0 0.0
        %2814 = vmatprep.subr.mxu0 0.0
        %2815 = vmatpush1.msra.mxu0 0.0
        %2816 = vmatprep.subr.mxu0 0.0
        %2817 = vmatpush1.msra.mxu0 0.0
        %2818 = vmatprep.subr.mxu0 0.0
        %2819 = vmatpush1.msra.mxu0 0.0
        %2820 = vmatprep.subr.mxu0 0.0
        %2821 = vmatpush1.msra.mxu0 0.0
        %2822 = vmatprep.subr.mxu0 0.0
        %2823 = vmatpush1.msra.mxu0 0.0
        %2824 = vmatprep.subr.mxu0 0.0
        %2825 = vmatpush1.msra.mxu0 0.0
        %2826 = vmatprep.subr.mxu0 0.0
        %2827 = vmatpush1.msra.mxu0 0.0
        %2828 = vmatprep.subr.mxu0 0.0
        %2829 = vmatpush1.msra.mxu0 0.0
        %2830 = vmatprep.subr.mxu0 0.0
        %2831 = vmatpush1.msra.mxu0 0.0
        %2832 = vmatprep.subr.mxu0 0.0
        %2833 = vmatpush1.msra.mxu0 0.0
        %2834 = vmatprep.subr.mxu0 0.0
        %2835 = vmatpush1.msra.mxu0 0.0
        %2836 = vmatprep.subr.mxu0 0.0
        %2837 = vmatpush1.msra.mxu0 0.0
        %2838 = vmatprep.subr.mxu0 0.0
        %2839 = vmatpush1.msra.mxu0 0.0
        %2840 = vmatprep.subr.mxu0 0.0
        %2841 = vmatpush1.msra.mxu0 0.0
        %2842 = vmatprep.subr.mxu0 0.0
        %2843 = vmatpush1.msra.mxu0 0.0
        %2844 = vmatprep.subr.mxu0 0.0
        %2845 = vmatpush1.msra.mxu0 0.0
        %2846 = vmatprep.subr.mxu0 0.0
        %2847 = vmatpush1.msra.mxu0 0.0
        %2848 = vmatprep.subr.mxu0 0.0
        %2849 = vmatpush1.msra.mxu0 0.0
        %2850 = vmatprep.subr.mxu0 0.0
        %2851 = vmatpush1.msra.mxu0 0.0
        %2852 = vmatprep.mubr.f32.mxu0 0.0
        %2853 = vmatmul.mubr.f32.gmra.mrb[0].mxu0 %v2783
        %v2854 = vpop.f32.mrb[0].mxu0
        %v2855 = vadd.f32 %v2775, %v2854
        %v2856 = vpop.f32.mrb[0].mxu0
        %2857 = vmatprep.mubr.f32.mxu0 0.0
        %2858 = vmatmul.mubr.f32.gmra.mrb[0].mxu0 %v2786
        %v2859 = vpop.f32.mrb[0].mxu0
        %v2860 = vadd.f32 %v2780, %v2859
        %v2861 = vpop.f32.mrb[0].mxu0
        %2862 = vdwg.mxu0
        %v2864 = vlaneseq
        %v2865 = vshrl.u32 %v2864, 7
        %v2866 = vsub.s32 0, %v2865
        %v2867 = vrot.slane %v2767, %v2866
        %v2869 = vmul.f32 %v2855, %v2867
        %v2870 = vmul.f32 %v2860, %v2867
        %2871 = vst [vmem:[%s241] sm:$0xff] %v2869
        %2872 = vst [vmem:[%s241 + $0x8] sm:$0x3] %v2870
        %s2873 = sand.u32 %s167, 1
        %s2874 = sand.u32 %s167, 1
        %s2875 = smul.addr %s2874, 16
        %s2876 = scalar_lea.vmem [#allocation5], %s2875
        // Predicated region
        $region109: #{_lambda_.3} parent=43 // pred_check
          %p2877 = pneg %p177
        $region110: #{_lambda_.3} parent=43 // pred_check_branch
          %2879 = sbr.rel (%p2877) target = $region112
        $region111: #{_lambda_.3} parent=43 // pred_region
          %s2880 = smul.addr %s23, 4
          %s2881 = sadd.s32 %s24, %s2880
          %s2882 = smul.addr %s2881, 8
          %s2883 = scalar_lea.vmem %s8, %s2882
          // Predicated region
          $region113: #{_lambda_.3} parent=111 // pred_check
            _
          $region114: #{_lambda_.3} parent=111 // pred_check_branch
            %2885 = sbr.rel (0) target = $region116
          $region115: #{_lambda_.3} parent=111 // pred_region
            // Predicated region
            $region117: #{_lambda_.3} parent=115 // pred_check
              _
            $region118: #{_lambda_.3} parent=115 // pred_check_branch
              %2887 = sbr.rel (0) target = $region120
            $region119: #{_lambda_.3} parent=115 // pred_region
              // Predicated region
              $region132: #{_lambda_.3} parent=119 // pred_check
                _
              $region133: #{_lambda_.3} parent=119 // pred_check_branch
                %2904 = sbr.rel (0) target = $region135
              $region134: #{_lambda_.3} parent=119 // pred_region
                loop: start=0, step=1, limit=1
                $region136: #{_lambda_.3} parent=134 // loop_pre_header
                  _
                $region137: #{_lambda_.3} parent=134 // loop_header
                  %s2906 = sphi 0, %s2910
                  %p2907 = scmp.ge.s32.totalorder %s2906, 1
                  %s2911 = sphi %s2876, %s2876
                  %s2912 = sphi %s2883, %s2883
                $region138: #{_lambda_.3} parent=134 // loop_header_branch
                  %2909 = sbr.rel (%p2907) target = $region142
                $region139: #{_lambda_.3} parent=134 // loop_body
                  %v2913 = vld [vmem:[%s2911] sm:$0xff]
                  %2914 = vst [vmem:[%s2912] sm:$0xff] %v2913
                  %v2915 = vld [vmem:[%s2911 + $0x8] sm:$0xff]
                  %2916 = vst [vmem:[%s2912 + $0x10] sm:$0xff] %v2915
                $region140: #{_lambda_.3} parent=134 // loop_footer
                  %s2910 = sadd.s32 1, %s2906
                $region141: #{_lambda_.3} parent=134 // loop_footer_branch
                  %2905 = sbr.rel target = $region137
                $region142: #{_lambda_.3} parent=134 // loop_exit
                  _
              $region135: #{_lambda_.3} parent=119 // pred_fallthru
                _
              // Predicated region
              $region143: #{_lambda_.3} parent=119 // pred_check
                _
              $region144: #{_lambda_.3} parent=119 // pred_check_branch
                %2918 = sbr.rel target = $region146
              $region145: #{_lambda_.3} parent=119 // pred_region
                _
              $region146: #{_lambda_.3} parent=119 // pred_fallthru
                _
            $region120: #{_lambda_.3} parent=115 // pred_fallthru
              _
            // Predicated region
            $region121: #{_lambda_.3} parent=115 // pred_check
              _
            $region122: #{_lambda_.3} parent=115 // pred_check_branch
              %2889 = sbr.rel target = $region124
            $region123: #{_lambda_.3} parent=115 // pred_region
              loop: start=0, step=1, limit=1
              $region125: #{_lambda_.3} parent=123 // loop_pre_header
                _
              $region126: #{_lambda_.3} parent=123 // loop_header
                %s2892 = sphi 0, %s2896
                %p2893 = scmp.ge.s32.totalorder %s2892, 1
                %s2897 = sphi %s2876, %s2876
                %s2898 = sphi %s2883, %s2883
              $region127: #{_lambda_.3} parent=123 // loop_header_branch
                %2895 = sbr.rel (%p2893) target = $region131
              $region128: #{_lambda_.3} parent=123 // loop_body
                %v2899 = vld [vmem:[%s2897] sm:$0xff]
                %2900 = vst [vmem:[%s2898] sm:$0xff] %v2899
                %v2901 = vld [vmem:[%s2897 + $0x8] sm:$0xff]
                %2902 = vst [vmem:[%s2898 + $0x10] sm:$0xff] %v2901
              $region129: #{_lambda_.3} parent=123 // loop_footer
                %s2896 = sadd.s32 1, %s2892
              $region130: #{_lambda_.3} parent=123 // loop_footer_branch
                %2891 = sbr.rel target = $region126
              $region131: #{_lambda_.3} parent=123 // loop_exit
                _
            $region124: #{_lambda_.3} parent=115 // pred_fallthru
              _
          $region116: #{_lambda_.3} parent=111 // pred_fallthru
            _
          %2919 = vnop
        $region112: #{_lambda_.3} parent=43 // pred_fallthru
          _
      $region44: #{_lambda_.3} parent=5 // pred_fallthru
        _
      %p2920 = scmp.le.s32.totalorder 2, %s14
      // Predicated region
      $region147: #{_lambda_.3} parent=5 // pred_check
        %p2921 = pneg %p2920
      $region148: #{_lambda_.3} parent=5 // pred_check_branch
        %2923 = sbr.rel (%p2921) target = $region150
      $region149: #{_lambda_.3} parent=5 // pred_region
        %s2924 = ssub.s32 %s14, 2
        // Predicated region
        $region151: #{_lambda_.3} parent=149 // pred_check
          %p2925 = pneg %p183
        $region152: #{_lambda_.3} parent=149 // pred_check_branch
          %2927 = sbr.rel (%p2925) target = $region154
        $region153: #{_lambda_.3} parent=149 // pred_region
          %s2928 = sand.u32 %s168, 1
          %s2929 = sand.u32 %s168, 1
          %s2930 = smul.addr %s2929, 16
          %s2931 = scalar_lea.vmem [#allocation5], %s2930
        $region154: #{_lambda_.3} parent=149 // pred_fallthru
          _
      $region150: #{_lambda_.3} parent=5 // pred_fallthru
        _
    $region6: #{_lambda_.3} parent=1 // loop_footer
      %s18 = sadd.s32 1, %s14
    $region7: #{_lambda_.3} parent=1 // loop_footer_branch
      %13 = sbr.rel target = $region3
    $region8: #{_lambda_.3} parent=1 // loop_exit
      _
  %2932 = vsyncmov [#allocation4]
  %s2933 = vpop.sfrf %2932
  %p2934 = scmp.eq.s32.totalorder %s2933, 0
  %p2935 = pneg %p2934
  %2937 = shalt.err (%p2935)
  %s2938 = scalar_lea.sflag [#allocation4], 1
  %2939 = vsyncmov %s2938
  %s2940 = vpop.sfrf %2939
  %p2941 = scmp.eq.s32.totalorder %s2940, 0
  %p2942 = pneg %p2941
  %2944 = shalt.err (%p2942)

</llo_original>
